<compile_context>
chip_gen: v6e
topology: v6e:2x2x1
jax: 0.10.0
libtpu: 0.0.40
codegen_flags: <defaults>
</compile_context>

<pallas_src>
import functools
import math

import jax
import jax.numpy as jnp
from jax.experimental import pallas as pl
from jax.experimental.pallas import tpu as pltpu


_WEIGHT_ORDER = (
    "sa_wq_t", "sa_wk_t", "sa_wv_t", "sa_bq", "sa_bk", "sa_bv", "sa_wo_t", "sa_bo",
    "ca_wq_t", "ca_wk_t", "ca_wv_t", "ca_bq", "ca_bk", "ca_bv", "ca_wo_t", "ca_bo",
    "w1_t", "b1", "w2_t", "b2",
    "ln1_w", "ln1_b", "ln2_w", "ln2_b", "ln3_w", "ln3_b",
)


# ----------------------------------------------------------------------------
# Pallas kernel: one CausalTransformerDecoderLayer applied to ALL windows of
# one batch row.
#   tgt_ref : [ctx_len + T, C]   un-unfolded target row (context + new tokens)
#   mem_ref : [ctx_len + T, C]   un-unfolded memory row
#   pe_ref  : [S, C]             per-window positional encoding (S = ctx+chunk)
#   out_ref : [T, C]             updated new tokens (all windows' outputs)
# ----------------------------------------------------------------------------
def _decoder_layer_kernel(
    tgt_ref, mem_ref, pe_ref,
    sa_wq_ref, sa_wk_ref, sa_wv_ref, sa_bq_ref, sa_bk_ref, sa_bv_ref, sa_wo_ref, sa_bo_ref,
    ca_wq_ref, ca_wk_ref, ca_wv_ref, ca_bq_ref, ca_bk_ref, ca_bv_ref, ca_wo_ref, ca_bo_ref,
    w1_ref, b1_ref, w2_ref, b2_ref,
    ln1_w_ref, ln1_b_ref, ln2_w_ref, ln2_b_ref, ln3_w_ref, ln3_b_ref,
    out_ref, *, nhead, chunk, ctx_len, add_pe_tgt, add_pe_mem, eps=1e-5):

    f32 = jnp.float32
    bf16 = jnp.bfloat16

    Tfull, C = tgt_ref.shape
    T = Tfull - ctx_len
    L = T // chunk                       # number of sliding windows
    S = ctx_len + chunk                  # window length
    hd = C // nhead
    scale = 1.0 / math.sqrt(hd)

    x_tgt = tgt_ref[...].astype(f32)     # [ctx_len+T, C]
    x_mem = mem_ref[...].astype(f32)     # [ctx_len+T, C]
    pe = pe_ref[...].astype(f32)         # [S, C]

    def mm(x, w_ref):
        # bf16 operands, f32 accumulation on the MXU.
        return jnp.dot(x.astype(bf16), w_ref[...].astype(bf16),
                       preferred_element_type=f32)

    def layer_norm(x, w_ref, b_ref):
        mu = jnp.mean(x, axis=-1, keepdims=True)
        var = jnp.mean(jnp.square(x - mu), axis=-1, keepdims=True)
        return (x - mu) * jax.lax.rsqrt(var + eps) * w_ref[...] + b_ref[...]

    def windowize(x2d):
        # [ctx_len+T, D] -> [L, S, D]  (overlapping windows, stride = chunk)
        return jnp.stack([x2d[w * chunk: w * chunk + S, :] for w in range(L)], axis=0)

    def kv_windows(x_full, w_ref, b_ref, add_pe):
        # Project once on the de-duplicated sequence, then window the result.
        # pe is folded in via linearity: (x + pe) @ W + b = x@W + (pe@W + b).
        kv = windowize(mm(x_full, w_ref))                  # [L, S, C]
        if add_pe:
            return kv + (mm(pe, w_ref) + b_ref[...])       # + [S, C]
        return kv + b_ref[...]                             # + [1, C]

    def attend(q, k, v):
        # q: [T, C] (= L windows x chunk queries); k, v: [L, S, C] -> [T, C]
        # No attn_mask (matches the reference layer: attn_mask=None).
        q3 = q.reshape(L, chunk, C)
        heads = []
        for h in range(nhead):            # short static loop; scores/PV have
            sl = slice(h * hd, (h + 1) * hd)   # an inherently tiny K = head_dim
            s = jnp.einsum('wqd,wkd->wqk', q3[:, :, sl] * scale, k[:, :, sl],
                           preferred_element_type=f32)     # [L, chunk, S]
            s = s - jnp.max(s, axis=-1, keepdims=True)
            p = jnp.exp(s)
            p = p * pl.reciprocal(jnp.sum(p, axis=-1, keepdims=True), approx=True)
            heads.append(jnp.einsum('wqk,wkd->wqd', p, v[:, :, sl],
                                    preferred_element_type=f32))
        return jnp.concatenate(heads, axis=-1).reshape(T, C)

    # --- self attention (queries = new tokens of every window) ---
    x_new = x_tgt[ctx_len:, :]                             # [T, C]
    if add_pe_tgt:
        # pe rows ctx_len..S-1 are what the query/residual tokens see per window
        q_in = (x_new.reshape(L, chunk, C) + pe[ctx_len:, :][None, :, :]).reshape(T, C)
    else:
        q_in = x_new
    q_sa = mm(q_in, sa_wq_ref) + sa_bq_ref[...]            # [T, C]
    k_sa = kv_windows(x_tgt, sa_wk_ref, sa_bk_ref, add_pe_tgt)
    v_sa = kv_windows(x_tgt, sa_wv_ref, sa_bv_ref, add_pe_tgt)
    sa = mm(attend(q_sa, k_sa, v_sa), sa_wo_ref) + sa_bo_ref[...]
    x = layer_norm(q_in + sa, ln1_w_ref, ln1_b_ref)

    # --- cross attention over memory windows ---
    q_ca = mm(x, ca_wq_ref) + ca_bq_ref[...]
    k_ca = kv_windows(x_mem, ca_wk_ref, ca_bk_ref, add_pe_mem)
    v_ca = kv_windows(x_mem, ca_wv_ref, ca_bv_ref, add_pe_mem)
    ca = mm(attend(q_ca, k_ca, v_ca), ca_wo_ref) + ca_bo_ref[...]
    x = layer_norm(x + ca, ln2_w_ref, ln2_b_ref)

    # --- feed forward (relu) + residual + norm3 ---
    h1 = jnp.maximum(mm(x, w1_ref) + b1_ref[...], 0.0)
    ff = mm(h1, w2_ref) + b2_ref[...]
    x = layer_norm(x + ff, ln3_w_ref, ln3_b_ref)

    out_ref[...] = x.astype(out_ref.dtype)


def decoder_layer_pallas(tgt_full, mem_full, pe_s, layer_params, *,
                         nhead, chunk, ctx_len, add_pe_tgt, add_pe_mem):
    """tgt_full, mem_full: [B, ctx_len+T, C]; pe_s: [S, C] -> [B, T, C]."""
    B, Tfull, C = tgt_full.shape
    T = Tfull - ctx_len
    weights = [layer_params[k] for k in _WEIGHT_ORDER]
    kernel = functools.partial(
        _decoder_layer_kernel, nhead=nhead, chunk=chunk, ctx_len=ctx_len,
        add_pe_tgt=add_pe_tgt, add_pe_mem=add_pe_mem)

    seq_spec = pl.BlockSpec((None, Tfull, C), lambda b: (b, 0, 0))
    pe_spec = pl.BlockSpec(pe_s.shape, lambda b: (0, 0))
    w_specs = [pl.BlockSpec(w.shape, lambda b: (0, 0)) for w in weights]

    return pl.pallas_call(
        kernel,
        out_shape=jax.ShapeDtypeStruct((B, T, C), jnp.float32),
        grid=(B,),
        in_specs=[seq_spec, seq_spec, pe_spec] + w_specs,
        out_specs=pl.BlockSpec((None, T, C), lambda b: (b, 0, 0)),
        compiler_params=pltpu.CompilerParams(
            dimension_semantics=("parallel",),        # batch rows -> both TCs on v7x
            vmem_limit_bytes=32 * 1024 * 1024),
    )(tgt_full, mem_full, pe_s, *weights)


# ----------------------------------------------------------------------------
# Plain-JAX glue reproducing CausalTransformerDecoder.forward
# ----------------------------------------------------------------------------
def mod_pad(x, chunk_size):
    mod = 0
    if x.shape[-1] % chunk_size != 0:
        mod = chunk_size - x.shape[-1] % chunk_size
    x = jnp.pad(x, ((0, 0), (0, 0), (0, mod)))
    return x, mod


def make_pos_enc(d_model, max_len=200):
    # TODO(synk): PositionalEncoding class body not given in source; assumed the
    # standard sinusoidal encoding returning pe[:, :x.shape[1], :].
    position = jnp.arange(max_len, dtype=jnp.float32)[:, None]
    div_term = jnp.exp(jnp.arange(0, d_model, 2, dtype=jnp.float32)
                       * (-math.log(10000.0) / d_model))
    pe = jnp.zeros((max_len, d_model), jnp.float32)
    pe = pe.at[:, 0::2].set(jnp.sin(position * div_term))
    pe = pe.at[:, 1::2].set(jnp.cos(position * div_term))
    return pe                                               # [max_len, C]


def init_layer_params(key, model_dim, ff_dim):
    C, F = model_dim, ff_dim
    ks = jax.random.split(key, 10)

    def rnd(k, shape, scale=0.05):
        return jax.random.normal(k, shape, jnp.float32) * scale

    sa_in_w, sa_in_b = rnd(ks[0], (3 * C, C)), rnd(ks[1], (3 * C,))
    sa_out_w, sa_out_b = rnd(ks[2], (C, C)), jnp.zeros((C,), jnp.float32)
    ca_in_w, ca_in_b = rnd(ks[3], (3 * C, C)), rnd(ks[4], (3 * C,))
    ca_out_w, ca_out_b = rnd(ks[5], (C, C)), jnp.zeros((C,), jnp.float32)
    w1, b1 = rnd(ks[6], (F, C)), rnd(ks[7], (F,))
    w2, b2 = rnd(ks[8], (C, F)), rnd(ks[9], (C,))

    bf = jnp.bfloat16
    f32 = jnp.float32

    def split_qkv(w, b):
        # PyTorch in_proj layout: rows [0:C]=Wq, [C:2C]=Wk, [2C:3C]=Wv.
        return (w[:C].T.astype(bf), w[C:2 * C].T.astype(bf), w[2 * C:].T.astype(bf),
                b[:C][None].astype(f32), b[C:2 * C][None].astype(f32),
                b[2 * C:][None].astype(f32))

    sa_wq, sa_wk, sa_wv, sa_bq, sa_bk, sa_bv = split_qkv(sa_in_w, sa_in_b)
    ca_wq, ca_wk, ca_wv, ca_bq, ca_bk, ca_bv = split_qkv(ca_in_w, ca_in_b)

    ones = jnp.ones((1, C), f32)
    zeros = jnp.zeros((1, C), f32)
    return {
        "sa_wq_t": sa_wq, "sa_wk_t": sa_wk, "sa_wv_t": sa_wv,
        "sa_bq": sa_bq, "sa_bk": sa_bk, "sa_bv": sa_bv,
        "sa_wo_t": sa_out_w.T.astype(bf), "sa_bo": sa_out_b[None].astype(f32),
        "ca_wq_t": ca_wq, "ca_wk_t": ca_wk, "ca_wv_t": ca_wv,
        "ca_bq": ca_bq, "ca_bk": ca_bk, "ca_bv": ca_bv,
        "ca_wo_t": ca_out_w.T.astype(bf), "ca_bo": ca_out_b[None].astype(f32),
        "w1_t": w1.T.astype(bf), "b1": b1[None].astype(f32),
        "w2_t": w2.T.astype(bf), "b2": b2[None].astype(f32),
        "ln1_w": ones, "ln1_b": zeros,
        "ln2_w": ones, "ln2_b": zeros,
        "ln3_w": ones, "ln3_b": zeros,
    }


def causal_transformer_decoder_forward(tgt, mem, ctx_buf, params, cfg):
    """tgt, mem: [B, model_dim, T]; ctx_buf: [B, num_layers+1, ctx_len, model_dim]."""
    chunk = cfg["chunk_size"]
    ctx_len = cfg["ctx_len"]
    num_layers = cfg["num_layers"]
    nhead = cfg["nhead"]

    mem, _ = mod_pad(mem, chunk)
    tgt, mod = mod_pad(tgt, chunk)
    B, C, T = tgt.shape

    tgt = jnp.transpose(tgt, (0, 2, 1))                     # [B, T, C]
    mem = jnp.transpose(mem, (0, 2, 1))                     # [B, T, C]

    # memory context (shared by all layers, kept un-unfolded)
    mem_full = jnp.concatenate([ctx_buf[:, 0], mem], axis=1)   # [B, ctx_len+T, C]
    ctx_buf = ctx_buf.at[:, 0].set(mem_full[:, -ctx_len:])

    S = ctx_len + chunk
    if cfg["use_pos_enc"]:
        pe_s = make_pos_enc(C)[:S, :]
    else:
        pe_s = jnp.zeros((S, C), jnp.float32)

    for i in range(num_layers):
        tgt_full = jnp.concatenate([ctx_buf[:, i + 1], tgt], axis=1)  # [B, ctx_len+T, C]
        ctx_buf = ctx_buf.at[:, i + 1].set(tgt_full[:, -ctx_len:])
        # Pallas kernel: one decoder layer over all windows of every batch row
        # (dropout == identity in eval).
        tgt = decoder_layer_pallas(
            tgt_full, mem_full, pe_s, params[i],
            nhead=nhead, chunk=chunk, ctx_len=ctx_len,
            add_pe_tgt=cfg["use_pos_enc"] and (i == 0),
            add_pe_mem=cfg["use_pos_enc"])                  # [B, T, C]

    tgt = jnp.transpose(tgt, (0, 2, 1))                     # [B, C, T]
    if mod != 0:
        tgt = tgt[..., :-mod]
    return tgt, ctx_buf


if __name__ == "__main__":
    cfg = dict(model_dim=32, ctx_len=8, chunk_size=4, num_layers=2, nhead=4,
               use_pos_enc=True, ff_dim=64, dropout=0.0)
    B, T = 2, 8

    key = jax.random.PRNGKey(0)
    k_tgt, k_mem, k_p = jax.random.split(key, 3)
    tgt = jax.random.normal(k_tgt, (B, cfg["model_dim"], T), jnp.float32)
    mem = jax.random.normal(k_mem, (B, cfg["model_dim"], T), jnp.float32)
    ctx_buf = jnp.zeros((B, cfg["num_layers"] + 1, cfg["ctx_len"], cfg["model_dim"]),
                        jnp.float32)

    layer_keys = jax.random.split(k_p, cfg["num_layers"])
    params = [init_layer_params(k, cfg["model_dim"], cfg["ff_dim"]) for k in layer_keys]

    out, new_ctx_buf = causal_transformer_decoder_forward(tgt, mem, ctx_buf, params, cfg)
    out, new_ctx_buf = jax.block_until_ready((out, new_ctx_buf))

    assert out.shape == (B, cfg["model_dim"], T), out.shape
    assert new_ctx_buf.shape == ctx_buf.shape, new_ctx_buf.shape
    assert bool(jnp.all(jnp.isfinite(out)))
    print("KERNEL_OK")
</pallas_src>

<mosaic_0001>
module attributes {stable_mosaic.version = 11 : i64} {
  func.func @_decoder_layer_kernel(%arg0: i32, %arg1: memref<1x16x32xf32, #tpu.memory_space<vmem>>, %arg2: memref<1x16x32xf32, #tpu.memory_space<vmem>>, %arg3: memref<12x32xf32, #tpu.memory_space<vmem>>, %arg4: memref<32x32xbf16, #tpu.memory_space<vmem>>, %arg5: memref<32x32xbf16, #tpu.memory_space<vmem>>, %arg6: memref<32x32xbf16, #tpu.memory_space<vmem>>, %arg7: memref<1x32xf32, #tpu.memory_space<vmem>>, %arg8: memref<1x32xf32, #tpu.memory_space<vmem>>, %arg9: memref<1x32xf32, #tpu.memory_space<vmem>>, %arg10: memref<32x32xbf16, #tpu.memory_space<vmem>>, %arg11: memref<1x32xf32, #tpu.memory_space<vmem>>, %arg12: memref<32x32xbf16, #tpu.memory_space<vmem>>, %arg13: memref<32x32xbf16, #tpu.memory_space<vmem>>, %arg14: memref<32x32xbf16, #tpu.memory_space<vmem>>, %arg15: memref<1x32xf32, #tpu.memory_space<vmem>>, %arg16: memref<1x32xf32, #tpu.memory_space<vmem>>, %arg17: memref<1x32xf32, #tpu.memory_space<vmem>>, %arg18: memref<32x32xbf16, #tpu.memory_space<vmem>>, %arg19: memref<1x32xf32, #tpu.memory_space<vmem>>, %arg20: memref<32x64xbf16, #tpu.memory_space<vmem>>, %arg21: memref<1x64xf32, #tpu.memory_space<vmem>>, %arg22: memref<64x32xbf16, #tpu.memory_space<vmem>>, %arg23: memref<1x32xf32, #tpu.memory_space<vmem>>, %arg24: memref<1x32xf32, #tpu.memory_space<vmem>>, %arg25: memref<1x32xf32, #tpu.memory_space<vmem>>, %arg26: memref<1x32xf32, #tpu.memory_space<vmem>>, %arg27: memref<1x32xf32, #tpu.memory_space<vmem>>, %arg28: memref<1x32xf32, #tpu.memory_space<vmem>>, %arg29: memref<1x32xf32, #tpu.memory_space<vmem>>, %arg30: memref<1x8x32xf32, #tpu.memory_space<vmem>>) attributes {dimension_semantics = [#tpu.dimension_semantics<parallel>], iteration_bounds = array<i64: 2>, scalar_prefetch = 0 : i64, scratch_operands = 0 : i64, tpu.core_type = #tpu.core_type<tc>, window_params = [{transform_indices = @transform_0, window_bounds = array<i64: 1, 16, 32>}, {transform_indices = @transform_1, window_bounds = array<i64: 1, 16, 32>}, {pipeline_mode = #tpu.pipeline_mode<synchronous>, transform_indices = @transform_2, window_bounds = array<i64: 12, 32>}, {pipeline_mode = #tpu.pipeline_mode<synchronous>, transform_indices = @transform_3, window_bounds = array<i64: 32, 32>}, {pipeline_mode = #tpu.pipeline_mode<synchronous>, transform_indices = @transform_4, window_bounds = array<i64: 32, 32>}, {pipeline_mode = #tpu.pipeline_mode<synchronous>, transform_indices = @transform_5, window_bounds = array<i64: 32, 32>}, {pipeline_mode = #tpu.pipeline_mode<synchronous>, transform_indices = @transform_6, window_bounds = array<i64: 1, 32>}, {pipeline_mode = #tpu.pipeline_mode<synchronous>, transform_indices = @transform_7, window_bounds = array<i64: 1, 32>}, {pipeline_mode = #tpu.pipeline_mode<synchronous>, transform_indices = @transform_8, window_bounds = array<i64: 1, 32>}, {pipeline_mode = #tpu.pipeline_mode<synchronous>, transform_indices = @transform_9, window_bounds = array<i64: 32, 32>}, {pipeline_mode = #tpu.pipeline_mode<synchronous>, transform_indices = @transform_10, window_bounds = array<i64: 1, 32>}, {pipeline_mode = #tpu.pipeline_mode<synchronous>, transform_indices = @transform_11, window_bounds = array<i64: 32, 32>}, {pipeline_mode = #tpu.pipeline_mode<synchronous>, transform_indices = @transform_12, window_bounds = array<i64: 32, 32>}, {pipeline_mode = #tpu.pipeline_mode<synchronous>, transform_indices = @transform_13, window_bounds = array<i64: 32, 32>}, {pipeline_mode = #tpu.pipeline_mode<synchronous>, transform_indices = @transform_14, window_bounds = array<i64: 1, 32>}, {pipeline_mode = #tpu.pipeline_mode<synchronous>, transform_indices = @transform_15, window_bounds = array<i64: 1, 32>}, {pipeline_mode = #tpu.pipeline_mode<synchronous>, transform_indices = @transform_16, window_bounds = array<i64: 1, 32>}, {pipeline_mode = #tpu.pipeline_mode<synchronous>, transform_indices = @transform_17, window_bounds = array<i64: 32, 32>}, {pipeline_mode = #tpu.pipeline_mode<synchronous>, transform_indices = @transform_18, window_bounds = array<i64: 1, 32>}, {pipeline_mode = #tpu.pipeline_mode<synchronous>, transform_indices = @transform_19, window_bounds = array<i64: 32, 64>}, {pipeline_mode = #tpu.pipeline_mode<synchronous>, transform_indices = @transform_20, window_bounds = array<i64: 1, 64>}, {pipeline_mode = #tpu.pipeline_mode<synchronous>, transform_indices = @transform_21, window_bounds = array<i64: 64, 32>}, {pipeline_mode = #tpu.pipeline_mode<synchronous>, transform_indices = @transform_22, window_bounds = array<i64: 1, 32>}, {pipeline_mode = #tpu.pipeline_mode<synchronous>, transform_indices = @transform_23, window_bounds = array<i64: 1, 32>}, {pipeline_mode = #tpu.pipeline_mode<synchronous>, transform_indices = @transform_24, window_bounds = array<i64: 1, 32>}, {pipeline_mode = #tpu.pipeline_mode<synchronous>, transform_indices = @transform_25, window_bounds = array<i64: 1, 32>}, {pipeline_mode = #tpu.pipeline_mode<synchronous>, transform_indices = @transform_26, window_bounds = array<i64: 1, 32>}, {pipeline_mode = #tpu.pipeline_mode<synchronous>, transform_indices = @transform_27, window_bounds = array<i64: 1, 32>}, {pipeline_mode = #tpu.pipeline_mode<synchronous>, transform_indices = @transform_28, window_bounds = array<i64: 1, 32>}, {transform_indices = @transform_29, window_bounds = array<i64: 1, 8, 32>}]} {
    %c0 = arith.constant 0 : index
    %c0_0 = arith.constant 0 : index
    %c0_1 = arith.constant 0 : index
    %0 = vector.load %arg1[%c0, %c0_0, %c0_1] : memref<1x16x32xf32, #tpu.memory_space<vmem>>, vector<1x16x32xf32>
    %1 = vector.shape_cast %0 : vector<1x16x32xf32> to vector<16x32xf32>
    %c0_2 = arith.constant 0 : index
    %c0_3 = arith.constant 0 : index
    %c0_4 = arith.constant 0 : index
    %2 = vector.load %arg2[%c0_2, %c0_3, %c0_4] : memref<1x16x32xf32, #tpu.memory_space<vmem>>, vector<1x16x32xf32>
    %3 = vector.shape_cast %2 : vector<1x16x32xf32> to vector<16x32xf32>
    %c0_5 = arith.constant 0 : index
    %c0_6 = arith.constant 0 : index
    %4 = vector.load %arg3[%c0_5, %c0_6] : memref<12x32xf32, #tpu.memory_space<vmem>>, vector<12x32xf32>
    %5 = vector.extract_strided_slice %1 {offsets = [8, 0], sizes = [8, 32], strides = [1, 1]} : vector<16x32xf32> to vector<8x32xf32>
    %6 = vector.shape_cast %5 : vector<8x32xf32> to vector<2x4x32xf32>
    %7 = vector.extract_strided_slice %4 {offsets = [8, 0], sizes = [4, 32], strides = [1, 1]} : vector<12x32xf32> to vector<4x32xf32>
    %8 = vector.shape_cast %7 : vector<4x32xf32> to vector<1x4x32xf32>
    %9 = vector.broadcast %8 : vector<1x4x32xf32> to vector<2x4x32xf32>
    %10 = arith.addf %6, %9 : vector<2x4x32xf32>
    %11 = vector.shape_cast %10 : vector<2x4x32xf32> to vector<8x32xf32>
    %12 = arith.truncf %11 : vector<8x32xf32> to vector<8x32xbf16>
    %c0_7 = arith.constant 0 : index
    %c0_8 = arith.constant 0 : index
    %13 = vector.load %arg4[%c0_7, %c0_8] : memref<32x32xbf16, #tpu.memory_space<vmem>>, vector<32x32xbf16>
    %cst = arith.constant dense<0.000000e+00> : vector<8x32xf32>
    %14 = tpu.matmul %12, %13, %cst {dimension_numbers = #tpu.dot_dimension_numbers<[1], [0], [0], [1], [0, 0, 1, 1], [], []>} : vector<8x32xbf16>, vector<32x32xbf16>, vector<8x32xf32> -> vector<8x32xf32>
    %c0_9 = arith.constant 0 : index
    %c0_10 = arith.constant 0 : index
    %15 = vector.load %arg7[%c0_9, %c0_10] : memref<1x32xf32, #tpu.memory_space<vmem>>, vector<1x32xf32>
    %16 = vector.broadcast %15 : vector<1x32xf32> to vector<8x32xf32>
    %17 = arith.addf %14, %16 : vector<8x32xf32>
    %18 = arith.truncf %1 : vector<16x32xf32> to vector<16x32xbf16>
    %c0_11 = arith.constant 0 : index
    %c0_12 = arith.constant 0 : index
    %19 = vector.load %arg5[%c0_11, %c0_12] : memref<32x32xbf16, #tpu.memory_space<vmem>>, vector<32x32xbf16>
    %cst_13 = arith.constant dense<0.000000e+00> : vector<16x32xf32>
    %20 = tpu.matmul %18, %19, %cst_13 {dimension_numbers = #tpu.dot_dimension_numbers<[1], [0], [0], [1], [0, 0, 1, 1], [], []>} : vector<16x32xbf16>, vector<32x32xbf16>, vector<16x32xf32> -> vector<16x32xf32>
    %21 = vector.extract_strided_slice %20 {offsets = [0, 0], sizes = [12, 32], strides = [1, 1]} : vector<16x32xf32> to vector<12x32xf32>
    %22 = vector.extract_strided_slice %20 {offsets = [4, 0], sizes = [12, 32], strides = [1, 1]} : vector<16x32xf32> to vector<12x32xf32>
    %23 = vector.shape_cast %21 : vector<12x32xf32> to vector<1x12x32xf32>
    %24 = vector.shape_cast %22 : vector<12x32xf32> to vector<1x12x32xf32>
    %25 = tpu.concatenate %23, %24 in 0 : vector<1x12x32xf32>, vector<1x12x32xf32> -> vector<2x12x32xf32>
    %26 = arith.truncf %4 : vector<12x32xf32> to vector<12x32xbf16>
    %c0_14 = arith.constant 0 : index
    %c0_15 = arith.constant 0 : index
    %27 = vector.load %arg5[%c0_14, %c0_15] : memref<32x32xbf16, #tpu.memory_space<vmem>>, vector<32x32xbf16>
    %cst_16 = arith.constant dense<0.000000e+00> : vector<12x32xf32>
    %28 = tpu.matmul %26, %27, %cst_16 {dimension_numbers = #tpu.dot_dimension_numbers<[1], [0], [0], [1], [0, 0, 1, 1], [], []>} : vector<12x32xbf16>, vector<32x32xbf16>, vector<12x32xf32> -> vector<12x32xf32>
    %c0_17 = arith.constant 0 : index
    %c0_18 = arith.constant 0 : index
    %29 = vector.load %arg8[%c0_17, %c0_18] : memref<1x32xf32, #tpu.memory_space<vmem>>, vector<1x32xf32>
    %30 = vector.broadcast %29 : vector<1x32xf32> to vector<12x32xf32>
    %31 = arith.addf %28, %30 : vector<12x32xf32>
    %32 = vector.shape_cast %31 : vector<12x32xf32> to vector<1x12x32xf32>
    %33 = vector.broadcast %32 : vector<1x12x32xf32> to vector<2x12x32xf32>
    %34 = arith.addf %25, %33 : vector<2x12x32xf32>
    %35 = arith.truncf %1 : vector<16x32xf32> to vector<16x32xbf16>
    %c0_19 = arith.constant 0 : index
    %c0_20 = arith.constant 0 : index
    %36 = vector.load %arg6[%c0_19, %c0_20] : memref<32x32xbf16, #tpu.memory_space<vmem>>, vector<32x32xbf16>
    %cst_21 = arith.constant dense<0.000000e+00> : vector<16x32xf32>
    %37 = tpu.matmul %35, %36, %cst_21 {dimension_numbers = #tpu.dot_dimension_numbers<[1], [0], [0], [1], [0, 0, 1, 1], [], []>} : vector<16x32xbf16>, vector<32x32xbf16>, vector<16x32xf32> -> vector<16x32xf32>
    %38 = vector.extract_strided_slice %37 {offsets = [0, 0], sizes = [12, 32], strides = [1, 1]} : vector<16x32xf32> to vector<12x32xf32>
    %39 = vector.extract_strided_slice %37 {offsets = [4, 0], sizes = [12, 32], strides = [1, 1]} : vector<16x32xf32> to vector<12x32xf32>
    %40 = vector.shape_cast %38 : vector<12x32xf32> to vector<1x12x32xf32>
    %41 = vector.shape_cast %39 : vector<12x32xf32> to vector<1x12x32xf32>
    %42 = tpu.concatenate %40, %41 in 0 : vector<1x12x32xf32>, vector<1x12x32xf32> -> vector<2x12x32xf32>
    %43 = arith.truncf %4 : vector<12x32xf32> to vector<12x32xbf16>
    %c0_22 = arith.constant 0 : index
    %c0_23 = arith.constant 0 : index
    %44 = vector.load %arg6[%c0_22, %c0_23] : memref<32x32xbf16, #tpu.memory_space<vmem>>, vector<32x32xbf16>
    %cst_24 = arith.constant dense<0.000000e+00> : vector<12x32xf32>
    %45 = tpu.matmul %43, %44, %cst_24 {dimension_numbers = #tpu.dot_dimension_numbers<[1], [0], [0], [1], [0, 0, 1, 1], [], []>} : vector<12x32xbf16>, vector<32x32xbf16>, vector<12x32xf32> -> vector<12x32xf32>
    %c0_25 = arith.constant 0 : index
    %c0_26 = arith.constant 0 : index
    %46 = vector.load %arg9[%c0_25, %c0_26] : memref<1x32xf32, #tpu.memory_space<vmem>>, vector<1x32xf32>
    %47 = vector.broadcast %46 : vector<1x32xf32> to vector<12x32xf32>
    %48 = arith.addf %45, %47 : vector<12x32xf32>
    %49 = vector.shape_cast %48 : vector<12x32xf32> to vector<1x12x32xf32>
    %50 = vector.broadcast %49 : vector<1x12x32xf32> to vector<2x12x32xf32>
    %51 = arith.addf %42, %50 : vector<2x12x32xf32>
    %52 = vector.shape_cast %17 : vector<8x32xf32> to vector<2x4x32xf32>
    %53 = vector.extract_strided_slice %52 {offsets = [0, 0, 0], sizes = [2, 4, 8], strides = [1, 1, 1]} : vector<2x4x32xf32> to vector<2x4x8xf32>
    %cst_27 = arith.constant 0.353553385 : f32
    %54 = vector.broadcast %cst_27 : f32 to vector<2x4x8xf32>
    %55 = arith.mulf %53, %54 : vector<2x4x8xf32>
    %56 = vector.extract_strided_slice %34 {offsets = [0, 0, 0], sizes = [2, 12, 8], strides = [1, 1, 1]} : vector<2x12x32xf32> to vector<2x12x8xf32>
    "tpu.trace_start"() <{level = 10 : i32, message = "wqd,wkd->wqk"}> : () -> ()
    %cst_28 = arith.constant dense<0.000000e+00> : vector<2x4x12xf32>
    %57 = tpu.matmul %55, %56, %cst_28 {dimension_numbers = #tpu.dot_dimension_numbers<[2], [2], [1], [1], [0, 0, 0, 1, 1, 1], [0], [0]>} : vector<2x4x8xf32>, vector<2x12x8xf32>, vector<2x4x12xf32> -> vector<2x4x12xf32>
    "tpu.trace_stop"() : () -> ()
    %cst_29 = arith.constant dense<0xFF800000> : vector<2x4xf32>
    %58 = vector.multi_reduction <maximumf>, %57, %cst_29 [2] : vector<2x4x12xf32> to vector<2x4xf32>
    %59 = vector.shape_cast %58 : vector<2x4xf32> to vector<2x4x1xf32>
    %60 = vector.broadcast %59 : vector<2x4x1xf32> to vector<2x4x12xf32>
    %61 = arith.subf %57, %60 : vector<2x4x12xf32>
    %62 = math.exp %61 : vector<2x4x12xf32>
    %cst_30 = arith.constant dense<0.000000e+00> : vector<2x4xf32>
    %63 = vector.multi_reduction <add>, %62, %cst_30 [2] : vector<2x4x12xf32> to vector<2x4xf32>
    %64 = vector.shape_cast %63 : vector<2x4xf32> to vector<2x4x1xf32>
    %65 = tpu.reciprocal %64 {approx = true} : vector<2x4x1xf32> -> vector<2x4x1xf32>
    %66 = vector.broadcast %65 : vector<2x4x1xf32> to vector<2x4x12xf32>
    %67 = arith.mulf %62, %66 : vector<2x4x12xf32>
    %68 = vector.extract_strided_slice %51 {offsets = [0, 0, 0], sizes = [2, 12, 8], strides = [1, 1, 1]} : vector<2x12x32xf32> to vector<2x12x8xf32>
    "tpu.trace_start"() <{level = 10 : i32, message = "wqk,wkd->wqd"}> : () -> ()
    %cst_31 = arith.constant dense<0.000000e+00> : vector<2x4x8xf32>
    %69 = tpu.matmul %67, %68, %cst_31 {dimension_numbers = #tpu.dot_dimension_numbers<[2], [1], [1], [2], [0, 0, 0, 1, 1, 2], [0], [0]>} : vector<2x4x12xf32>, vector<2x12x8xf32>, vector<2x4x8xf32> -> vector<2x4x8xf32>
    "tpu.trace_stop"() : () -> ()
    %70 = vector.extract_strided_slice %52 {offsets = [0, 0, 8], sizes = [2, 4, 8], strides = [1, 1, 1]} : vector<2x4x32xf32> to vector<2x4x8xf32>
    %cst_32 = arith.constant 0.353553385 : f32
    %71 = vector.broadcast %cst_32 : f32 to vector<2x4x8xf32>
    %72 = arith.mulf %70, %71 : vector<2x4x8xf32>
    %73 = vector.extract_strided_slice %34 {offsets = [0, 0, 8], sizes = [2, 12, 8], strides = [1, 1, 1]} : vector<2x12x32xf32> to vector<2x12x8xf32>
    "tpu.trace_start"() <{level = 10 : i32, message = "wqd,wkd->wqk"}> : () -> ()
    %cst_33 = arith.constant dense<0.000000e+00> : vector<2x4x12xf32>
    %74 = tpu.matmul %72, %73, %cst_33 {dimension_numbers = #tpu.dot_dimension_numbers<[2], [2], [1], [1], [0, 0, 0, 1, 1, 1], [0], [0]>} : vector<2x4x8xf32>, vector<2x12x8xf32>, vector<2x4x12xf32> -> vector<2x4x12xf32>
    "tpu.trace_stop"() : () -> ()
    %cst_34 = arith.constant dense<0xFF800000> : vector<2x4xf32>
    %75 = vector.multi_reduction <maximumf>, %74, %cst_34 [2] : vector<2x4x12xf32> to vector<2x4xf32>
    %76 = vector.shape_cast %75 : vector<2x4xf32> to vector<2x4x1xf32>
    %77 = vector.broadcast %76 : vector<2x4x1xf32> to vector<2x4x12xf32>
    %78 = arith.subf %74, %77 : vector<2x4x12xf32>
    %79 = math.exp %78 : vector<2x4x12xf32>
    %cst_35 = arith.constant dense<0.000000e+00> : vector<2x4xf32>
    %80 = vector.multi_reduction <add>, %79, %cst_35 [2] : vector<2x4x12xf32> to vector<2x4xf32>
    %81 = vector.shape_cast %80 : vector<2x4xf32> to vector<2x4x1xf32>
    %82 = tpu.reciprocal %81 {approx = true} : vector<2x4x1xf32> -> vector<2x4x1xf32>
    %83 = vector.broadcast %82 : vector<2x4x1xf32> to vector<2x4x12xf32>
    %84 = arith.mulf %79, %83 : vector<2x4x12xf32>
    %85 = vector.extract_strided_slice %51 {offsets = [0, 0, 8], sizes = [2, 12, 8], strides = [1, 1, 1]} : vector<2x12x32xf32> to vector<2x12x8xf32>
    "tpu.trace_start"() <{level = 10 : i32, message = "wqk,wkd->wqd"}> : () -> ()
    %cst_36 = arith.constant dense<0.000000e+00> : vector<2x4x8xf32>
    %86 = tpu.matmul %84, %85, %cst_36 {dimension_numbers = #tpu.dot_dimension_numbers<[2], [1], [1], [2], [0, 0, 0, 1, 1, 2], [0], [0]>} : vector<2x4x12xf32>, vector<2x12x8xf32>, vector<2x4x8xf32> -> vector<2x4x8xf32>
    "tpu.trace_stop"() : () -> ()
    %87 = vector.extract_strided_slice %52 {offsets = [0, 0, 16], sizes = [2, 4, 8], strides = [1, 1, 1]} : vector<2x4x32xf32> to vector<2x4x8xf32>
    %cst_37 = arith.constant 0.353553385 : f32
    %88 = vector.broadcast %cst_37 : f32 to vector<2x4x8xf32>
    %89 = arith.mulf %87, %88 : vector<2x4x8xf32>
    %90 = vector.extract_strided_slice %34 {offsets = [0, 0, 16], sizes = [2, 12, 8], strides = [1, 1, 1]} : vector<2x12x32xf32> to vector<2x12x8xf32>
    "tpu.trace_start"() <{level = 10 : i32, message = "wqd,wkd->wqk"}> : () -> ()
    %cst_38 = arith.constant dense<0.000000e+00> : vector<2x4x12xf32>
    %91 = tpu.matmul %89, %90, %cst_38 {dimension_numbers = #tpu.dot_dimension_numbers<[2], [2], [1], [1], [0, 0, 0, 1, 1, 1], [0], [0]>} : vector<2x4x8xf32>, vector<2x12x8xf32>, vector<2x4x12xf32> -> vector<2x4x12xf32>
    "tpu.trace_stop"() : () -> ()
    %cst_39 = arith.constant dense<0xFF800000> : vector<2x4xf32>
    %92 = vector.multi_reduction <maximumf>, %91, %cst_39 [2] : vector<2x4x12xf32> to vector<2x4xf32>
    %93 = vector.shape_cast %92 : vector<2x4xf32> to vector<2x4x1xf32>
    %94 = vector.broadcast %93 : vector<2x4x1xf32> to vector<2x4x12xf32>
    %95 = arith.subf %91, %94 : vector<2x4x12xf32>
    %96 = math.exp %95 : vector<2x4x12xf32>
    %cst_40 = arith.constant dense<0.000000e+00> : vector<2x4xf32>
    %97 = vector.multi_reduction <add>, %96, %cst_40 [2] : vector<2x4x12xf32> to vector<2x4xf32>
    %98 = vector.shape_cast %97 : vector<2x4xf32> to vector<2x4x1xf32>
    %99 = tpu.reciprocal %98 {approx = true} : vector<2x4x1xf32> -> vector<2x4x1xf32>
    %100 = vector.broadcast %99 : vector<2x4x1xf32> to vector<2x4x12xf32>
    %101 = arith.mulf %96, %100 : vector<2x4x12xf32>
    %102 = vector.extract_strided_slice %51 {offsets = [0, 0, 16], sizes = [2, 12, 8], strides = [1, 1, 1]} : vector<2x12x32xf32> to vector<2x12x8xf32>
    "tpu.trace_start"() <{level = 10 : i32, message = "wqk,wkd->wqd"}> : () -> ()
    %cst_41 = arith.constant dense<0.000000e+00> : vector<2x4x8xf32>
    %103 = tpu.matmul %101, %102, %cst_41 {dimension_numbers = #tpu.dot_dimension_numbers<[2], [1], [1], [2], [0, 0, 0, 1, 1, 2], [0], [0]>} : vector<2x4x12xf32>, vector<2x12x8xf32>, vector<2x4x8xf32> -> vector<2x4x8xf32>
    "tpu.trace_stop"() : () -> ()
    %104 = vector.extract_strided_slice %52 {offsets = [0, 0, 24], sizes = [2, 4, 8], strides = [1, 1, 1]} : vector<2x4x32xf32> to vector<2x4x8xf32>
    %cst_42 = arith.constant 0.353553385 : f32
    %105 = vector.broadcast %cst_42 : f32 to vector<2x4x8xf32>
    %106 = arith.mulf %104, %105 : vector<2x4x8xf32>
    %107 = vector.extract_strided_slice %34 {offsets = [0, 0, 24], sizes = [2, 12, 8], strides = [1, 1, 1]} : vector<2x12x32xf32> to vector<2x12x8xf32>
    "tpu.trace_start"() <{level = 10 : i32, message = "wqd,wkd->wqk"}> : () -> ()
    %cst_43 = arith.constant dense<0.000000e+00> : vector<2x4x12xf32>
    %108 = tpu.matmul %106, %107, %cst_43 {dimension_numbers = #tpu.dot_dimension_numbers<[2], [2], [1], [1], [0, 0, 0, 1, 1, 1], [0], [0]>} : vector<2x4x8xf32>, vector<2x12x8xf32>, vector<2x4x12xf32> -> vector<2x4x12xf32>
    "tpu.trace_stop"() : () -> ()
    %cst_44 = arith.constant dense<0xFF800000> : vector<2x4xf32>
    %109 = vector.multi_reduction <maximumf>, %108, %cst_44 [2] : vector<2x4x12xf32> to vector<2x4xf32>
    %110 = vector.shape_cast %109 : vector<2x4xf32> to vector<2x4x1xf32>
    %111 = vector.broadcast %110 : vector<2x4x1xf32> to vector<2x4x12xf32>
    %112 = arith.subf %108, %111 : vector<2x4x12xf32>
    %113 = math.exp %112 : vector<2x4x12xf32>
    %cst_45 = arith.constant dense<0.000000e+00> : vector<2x4xf32>
    %114 = vector.multi_reduction <add>, %113, %cst_45 [2] : vector<2x4x12xf32> to vector<2x4xf32>
    %115 = vector.shape_cast %114 : vector<2x4xf32> to vector<2x4x1xf32>
    %116 = tpu.reciprocal %115 {approx = true} : vector<2x4x1xf32> -> vector<2x4x1xf32>
    %117 = vector.broadcast %116 : vector<2x4x1xf32> to vector<2x4x12xf32>
    %118 = arith.mulf %113, %117 : vector<2x4x12xf32>
    %119 = vector.extract_strided_slice %51 {offsets = [0, 0, 24], sizes = [2, 12, 8], strides = [1, 1, 1]} : vector<2x12x32xf32> to vector<2x12x8xf32>
    "tpu.trace_start"() <{level = 10 : i32, message = "wqk,wkd->wqd"}> : () -> ()
    %cst_46 = arith.constant dense<0.000000e+00> : vector<2x4x8xf32>
    %120 = tpu.matmul %118, %119, %cst_46 {dimension_numbers = #tpu.dot_dimension_numbers<[2], [1], [1], [2], [0, 0, 0, 1, 1, 2], [0], [0]>} : vector<2x4x12xf32>, vector<2x12x8xf32>, vector<2x4x8xf32> -> vector<2x4x8xf32>
    "tpu.trace_stop"() : () -> ()
    %121 = tpu.concatenate %69, %86, %103, %120 in 2 : vector<2x4x8xf32>, vector<2x4x8xf32>, vector<2x4x8xf32>, vector<2x4x8xf32> -> vector<2x4x32xf32>
    %122 = vector.shape_cast %121 : vector<2x4x32xf32> to vector<8x32xf32>
    %123 = arith.truncf %122 : vector<8x32xf32> to vector<8x32xbf16>
    %c0_47 = arith.constant 0 : index
    %c0_48 = arith.constant 0 : index
    %124 = vector.load %arg10[%c0_47, %c0_48] : memref<32x32xbf16, #tpu.memory_space<vmem>>, vector<32x32xbf16>
    %cst_49 = arith.constant dense<0.000000e+00> : vector<8x32xf32>
    %125 = tpu.matmul %123, %124, %cst_49 {dimension_numbers = #tpu.dot_dimension_numbers<[1], [0], [0], [1], [0, 0, 1, 1], [], []>} : vector<8x32xbf16>, vector<32x32xbf16>, vector<8x32xf32> -> vector<8x32xf32>
    %c0_50 = arith.constant 0 : index
    %c0_51 = arith.constant 0 : index
    %126 = vector.load %arg11[%c0_50, %c0_51] : memref<1x32xf32, #tpu.memory_space<vmem>>, vector<1x32xf32>
    %127 = vector.broadcast %126 : vector<1x32xf32> to vector<8x32xf32>
    %128 = arith.addf %125, %127 : vector<8x32xf32>
    %129 = arith.addf %11, %128 : vector<8x32xf32>
    %cst_52 = arith.constant dense<0.000000e+00> : vector<8xf32>
    %130 = vector.multi_reduction <add>, %129, %cst_52 [1] : vector<8x32xf32> to vector<8xf32>
    %131 = vector.shape_cast %130 : vector<8xf32> to vector<8x1xf32>
    %cst_53 = arith.constant 3.200000e+01 : f32
    %132 = vector.broadcast %cst_53 : f32 to vector<8x1xf32>
    %133 = arith.divf %131, %132 : vector<8x1xf32>
    %134 = vector.broadcast %133 : vector<8x1xf32> to vector<8x32xf32>
    %135 = arith.subf %129, %134 : vector<8x32xf32>
    %136 = arith.mulf %135, %135 : vector<8x32xf32>
    %cst_54 = arith.constant dense<0.000000e+00> : vector<8xf32>
    %137 = vector.multi_reduction <add>, %136, %cst_54 [1] : vector<8x32xf32> to vector<8xf32>
    %138 = vector.shape_cast %137 : vector<8xf32> to vector<8x1xf32>
    %cst_55 = arith.constant 3.200000e+01 : f32
    %139 = vector.broadcast %cst_55 : f32 to vector<8x1xf32>
    %140 = arith.divf %138, %139 : vector<8x1xf32>
    %141 = vector.broadcast %133 : vector<8x1xf32> to vector<8x32xf32>
    %142 = arith.subf %129, %141 : vector<8x32xf32>
    %cst_56 = arith.constant 9.99999974E-6 : f32
    %143 = vector.broadcast %cst_56 : f32 to vector<8x1xf32>
    %144 = arith.addf %140, %143 : vector<8x1xf32>
    %145 = math.rsqrt %144 : vector<8x1xf32>
    %146 = vector.broadcast %145 : vector<8x1xf32> to vector<8x32xf32>
    %147 = arith.mulf %142, %146 : vector<8x32xf32>
    %c0_57 = arith.constant 0 : index
    %c0_58 = arith.constant 0 : index
    %148 = vector.load %arg24[%c0_57, %c0_58] : memref<1x32xf32, #tpu.memory_space<vmem>>, vector<1x32xf32>
    %149 = vector.broadcast %148 : vector<1x32xf32> to vector<8x32xf32>
    %150 = arith.mulf %147, %149 : vector<8x32xf32>
    %c0_59 = arith.constant 0 : index
    %c0_60 = arith.constant 0 : index
    %151 = vector.load %arg25[%c0_59, %c0_60] : memref<1x32xf32, #tpu.memory_space<vmem>>, vector<1x32xf32>
    %152 = vector.broadcast %151 : vector<1x32xf32> to vector<8x32xf32>
    %153 = arith.addf %150, %152 : vector<8x32xf32>
    %154 = arith.truncf %153 : vector<8x32xf32> to vector<8x32xbf16>
    %c0_61 = arith.constant 0 : index
    %c0_62 = arith.constant 0 : index
    %155 = vector.load %arg12[%c0_61, %c0_62] : memref<32x32xbf16, #tpu.memory_space<vmem>>, vector<32x32xbf16>
    %cst_63 = arith.constant dense<0.000000e+00> : vector<8x32xf32>
    %156 = tpu.matmul %154, %155, %cst_63 {dimension_numbers = #tpu.dot_dimension_numbers<[1], [0], [0], [1], [0, 0, 1, 1], [], []>} : vector<8x32xbf16>, vector<32x32xbf16>, vector<8x32xf32> -> vector<8x32xf32>
    %c0_64 = arith.constant 0 : index
    %c0_65 = arith.constant 0 : index
    %157 = vector.load %arg15[%c0_64, %c0_65] : memref<1x32xf32, #tpu.memory_space<vmem>>, vector<1x32xf32>
    %158 = vector.broadcast %157 : vector<1x32xf32> to vector<8x32xf32>
    %159 = arith.addf %156, %158 : vector<8x32xf32>
    %160 = arith.truncf %3 : vector<16x32xf32> to vector<16x32xbf16>
    %c0_66 = arith.constant 0 : index
    %c0_67 = arith.constant 0 : index
    %161 = vector.load %arg13[%c0_66, %c0_67] : memref<32x32xbf16, #tpu.memory_space<vmem>>, vector<32x32xbf16>
    %cst_68 = arith.constant dense<0.000000e+00> : vector<16x32xf32>
    %162 = tpu.matmul %160, %161, %cst_68 {dimension_numbers = #tpu.dot_dimension_numbers<[1], [0], [0], [1], [0, 0, 1, 1], [], []>} : vector<16x32xbf16>, vector<32x32xbf16>, vector<16x32xf32> -> vector<16x32xf32>
    %163 = vector.extract_strided_slice %162 {offsets = [0, 0], sizes = [12, 32], strides = [1, 1]} : vector<16x32xf32> to vector<12x32xf32>
    %164 = vector.extract_strided_slice %162 {offsets = [4, 0], sizes = [12, 32], strides = [1, 1]} : vector<16x32xf32> to vector<12x32xf32>
    %165 = vector.shape_cast %163 : vector<12x32xf32> to vector<1x12x32xf32>
    %166 = vector.shape_cast %164 : vector<12x32xf32> to vector<1x12x32xf32>
    %167 = tpu.concatenate %165, %166 in 0 : vector<1x12x32xf32>, vector<1x12x32xf32> -> vector<2x12x32xf32>
    %168 = arith.truncf %4 : vector<12x32xf32> to vector<12x32xbf16>
    %c0_69 = arith.constant 0 : index
    %c0_70 = arith.constant 0 : index
    %169 = vector.load %arg13[%c0_69, %c0_70] : memref<32x32xbf16, #tpu.memory_space<vmem>>, vector<32x32xbf16>
    %cst_71 = arith.constant dense<0.000000e+00> : vector<12x32xf32>
    %170 = tpu.matmul %168, %169, %cst_71 {dimension_numbers = #tpu.dot_dimension_numbers<[1], [0], [0], [1], [0, 0, 1, 1], [], []>} : vector<12x32xbf16>, vector<32x32xbf16>, vector<12x32xf32> -> vector<12x32xf32>
    %c0_72 = arith.constant 0 : index
    %c0_73 = arith.constant 0 : index
    %171 = vector.load %arg16[%c0_72, %c0_73] : memref<1x32xf32, #tpu.memory_space<vmem>>, vector<1x32xf32>
    %172 = vector.broadcast %171 : vector<1x32xf32> to vector<12x32xf32>
    %173 = arith.addf %170, %172 : vector<12x32xf32>
    %174 = vector.shape_cast %173 : vector<12x32xf32> to vector<1x12x32xf32>
    %175 = vector.broadcast %174 : vector<1x12x32xf32> to vector<2x12x32xf32>
    %176 = arith.addf %167, %175 : vector<2x12x32xf32>
    %177 = arith.truncf %3 : vector<16x32xf32> to vector<16x32xbf16>
    %c0_74 = arith.constant 0 : index
    %c0_75 = arith.constant 0 : index
    %178 = vector.load %arg14[%c0_74, %c0_75] : memref<32x32xbf16, #tpu.memory_space<vmem>>, vector<32x32xbf16>
    %cst_76 = arith.constant dense<0.000000e+00> : vector<16x32xf32>
    %179 = tpu.matmul %177, %178, %cst_76 {dimension_numbers = #tpu.dot_dimension_numbers<[1], [0], [0], [1], [0, 0, 1, 1], [], []>} : vector<16x32xbf16>, vector<32x32xbf16>, vector<16x32xf32> -> vector<16x32xf32>
    %180 = vector.extract_strided_slice %179 {offsets = [0, 0], sizes = [12, 32], strides = [1, 1]} : vector<16x32xf32> to vector<12x32xf32>
    %181 = vector.extract_strided_slice %179 {offsets = [4, 0], sizes = [12, 32], strides = [1, 1]} : vector<16x32xf32> to vector<12x32xf32>
    %182 = vector.shape_cast %180 : vector<12x32xf32> to vector<1x12x32xf32>
    %183 = vector.shape_cast %181 : vector<12x32xf32> to vector<1x12x32xf32>
    %184 = tpu.concatenate %182, %183 in 0 : vector<1x12x32xf32>, vector<1x12x32xf32> -> vector<2x12x32xf32>
    %185 = arith.truncf %4 : vector<12x32xf32> to vector<12x32xbf16>
    %c0_77 = arith.constant 0 : index
    %c0_78 = arith.constant 0 : index
    %186 = vector.load %arg14[%c0_77, %c0_78] : memref<32x32xbf16, #tpu.memory_space<vmem>>, vector<32x32xbf16>
    %cst_79 = arith.constant dense<0.000000e+00> : vector<12x32xf32>
    %187 = tpu.matmul %185, %186, %cst_79 {dimension_numbers = #tpu.dot_dimension_numbers<[1], [0], [0], [1], [0, 0, 1, 1], [], []>} : vector<12x32xbf16>, vector<32x32xbf16>, vector<12x32xf32> -> vector<12x32xf32>
    %c0_80 = arith.constant 0 : index
    %c0_81 = arith.constant 0 : index
    %188 = vector.load %arg17[%c0_80, %c0_81] : memref<1x32xf32, #tpu.memory_space<vmem>>, vector<1x32xf32>
    %189 = vector.broadcast %188 : vector<1x32xf32> to vector<12x32xf32>
    %190 = arith.addf %187, %189 : vector<12x32xf32>
    %191 = vector.shape_cast %190 : vector<12x32xf32> to vector<1x12x32xf32>
    %192 = vector.broadcast %191 : vector<1x12x32xf32> to vector<2x12x32xf32>
    %193 = arith.addf %184, %192 : vector<2x12x32xf32>
    %194 = vector.shape_cast %159 : vector<8x32xf32> to vector<2x4x32xf32>
    %195 = vector.extract_strided_slice %194 {offsets = [0, 0, 0], sizes = [2, 4, 8], strides = [1, 1, 1]} : vector<2x4x32xf32> to vector<2x4x8xf32>
    %cst_82 = arith.constant 0.353553385 : f32
    %196 = vector.broadcast %cst_82 : f32 to vector<2x4x8xf32>
    %197 = arith.mulf %195, %196 : vector<2x4x8xf32>
    %198 = vector.extract_strided_slice %176 {offsets = [0, 0, 0], sizes = [2, 12, 8], strides = [1, 1, 1]} : vector<2x12x32xf32> to vector<2x12x8xf32>
    "tpu.trace_start"() <{level = 10 : i32, message = "wqd,wkd->wqk"}> : () -> ()
    %cst_83 = arith.constant dense<0.000000e+00> : vector<2x4x12xf32>
    %199 = tpu.matmul %197, %198, %cst_83 {dimension_numbers = #tpu.dot_dimension_numbers<[2], [2], [1], [1], [0, 0, 0, 1, 1, 1], [0], [0]>} : vector<2x4x8xf32>, vector<2x12x8xf32>, vector<2x4x12xf32> -> vector<2x4x12xf32>
    "tpu.trace_stop"() : () -> ()
    %cst_84 = arith.constant dense<0xFF800000> : vector<2x4xf32>
    %200 = vector.multi_reduction <maximumf>, %199, %cst_84 [2] : vector<2x4x12xf32> to vector<2x4xf32>
    %201 = vector.shape_cast %200 : vector<2x4xf32> to vector<2x4x1xf32>
    %202 = vector.broadcast %201 : vector<2x4x1xf32> to vector<2x4x12xf32>
    %203 = arith.subf %199, %202 : vector<2x4x12xf32>
    %204 = math.exp %203 : vector<2x4x12xf32>
    %cst_85 = arith.constant dense<0.000000e+00> : vector<2x4xf32>
    %205 = vector.multi_reduction <add>, %204, %cst_85 [2] : vector<2x4x12xf32> to vector<2x4xf32>
    %206 = vector.shape_cast %205 : vector<2x4xf32> to vector<2x4x1xf32>
    %207 = tpu.reciprocal %206 {approx = true} : vector<2x4x1xf32> -> vector<2x4x1xf32>
    %208 = vector.broadcast %207 : vector<2x4x1xf32> to vector<2x4x12xf32>
    %209 = arith.mulf %204, %208 : vector<2x4x12xf32>
    %210 = vector.extract_strided_slice %193 {offsets = [0, 0, 0], sizes = [2, 12, 8], strides = [1, 1, 1]} : vector<2x12x32xf32> to vector<2x12x8xf32>
    "tpu.trace_start"() <{level = 10 : i32, message = "wqk,wkd->wqd"}> : () -> ()
    %cst_86 = arith.constant dense<0.000000e+00> : vector<2x4x8xf32>
    %211 = tpu.matmul %209, %210, %cst_86 {dimension_numbers = #tpu.dot_dimension_numbers<[2], [1], [1], [2], [0, 0, 0, 1, 1, 2], [0], [0]>} : vector<2x4x12xf32>, vector<2x12x8xf32>, vector<2x4x8xf32> -> vector<2x4x8xf32>
    "tpu.trace_stop"() : () -> ()
    %212 = vector.extract_strided_slice %194 {offsets = [0, 0, 8], sizes = [2, 4, 8], strides = [1, 1, 1]} : vector<2x4x32xf32> to vector<2x4x8xf32>
    %cst_87 = arith.constant 0.353553385 : f32
    %213 = vector.broadcast %cst_87 : f32 to vector<2x4x8xf32>
    %214 = arith.mulf %212, %213 : vector<2x4x8xf32>
    %215 = vector.extract_strided_slice %176 {offsets = [0, 0, 8], sizes = [2, 12, 8], strides = [1, 1, 1]} : vector<2x12x32xf32> to vector<2x12x8xf32>
    "tpu.trace_start"() <{level = 10 : i32, message = "wqd,wkd->wqk"}> : () -> ()
    %cst_88 = arith.constant dense<0.000000e+00> : vector<2x4x12xf32>
    %216 = tpu.matmul %214, %215, %cst_88 {dimension_numbers = #tpu.dot_dimension_numbers<[2], [2], [1], [1], [0, 0, 0, 1, 1, 1], [0], [0]>} : vector<2x4x8xf32>, vector<2x12x8xf32>, vector<2x4x12xf32> -> vector<2x4x12xf32>
    "tpu.trace_stop"() : () -> ()
    %cst_89 = arith.constant dense<0xFF800000> : vector<2x4xf32>
    %217 = vector.multi_reduction <maximumf>, %216, %cst_89 [2] : vector<2x4x12xf32> to vector<2x4xf32>
    %218 = vector.shape_cast %217 : vector<2x4xf32> to vector<2x4x1xf32>
    %219 = vector.broadcast %218 : vector<2x4x1xf32> to vector<2x4x12xf32>
    %220 = arith.subf %216, %219 : vector<2x4x12xf32>
    %221 = math.exp %220 : vector<2x4x12xf32>
    %cst_90 = arith.constant dense<0.000000e+00> : vector<2x4xf32>
    %222 = vector.multi_reduction <add>, %221, %cst_90 [2] : vector<2x4x12xf32> to vector<2x4xf32>
    %223 = vector.shape_cast %222 : vector<2x4xf32> to vector<2x4x1xf32>
    %224 = tpu.reciprocal %223 {approx = true} : vector<2x4x1xf32> -> vector<2x4x1xf32>
    %225 = vector.broadcast %224 : vector<2x4x1xf32> to vector<2x4x12xf32>
    %226 = arith.mulf %221, %225 : vector<2x4x12xf32>
    %227 = vector.extract_strided_slice %193 {offsets = [0, 0, 8], sizes = [2, 12, 8], strides = [1, 1, 1]} : vector<2x12x32xf32> to vector<2x12x8xf32>
    "tpu.trace_start"() <{level = 10 : i32, message = "wqk,wkd->wqd"}> : () -> ()
    %cst_91 = arith.constant dense<0.000000e+00> : vector<2x4x8xf32>
    %228 = tpu.matmul %226, %227, %cst_91 {dimension_numbers = #tpu.dot_dimension_numbers<[2], [1], [1], [2], [0, 0, 0, 1, 1, 2], [0], [0]>} : vector<2x4x12xf32>, vector<2x12x8xf32>, vector<2x4x8xf32> -> vector<2x4x8xf32>
    "tpu.trace_stop"() : () -> ()
    %229 = vector.extract_strided_slice %194 {offsets = [0, 0, 16], sizes = [2, 4, 8], strides = [1, 1, 1]} : vector<2x4x32xf32> to vector<2x4x8xf32>
    %cst_92 = arith.constant 0.353553385 : f32
    %230 = vector.broadcast %cst_92 : f32 to vector<2x4x8xf32>
    %231 = arith.mulf %229, %230 : vector<2x4x8xf32>
    %232 = vector.extract_strided_slice %176 {offsets = [0, 0, 16], sizes = [2, 12, 8], strides = [1, 1, 1]} : vector<2x12x32xf32> to vector<2x12x8xf32>
    "tpu.trace_start"() <{level = 10 : i32, message = "wqd,wkd->wqk"}> : () -> ()
    %cst_93 = arith.constant dense<0.000000e+00> : vector<2x4x12xf32>
    %233 = tpu.matmul %231, %232, %cst_93 {dimension_numbers = #tpu.dot_dimension_numbers<[2], [2], [1], [1], [0, 0, 0, 1, 1, 1], [0], [0]>} : vector<2x4x8xf32>, vector<2x12x8xf32>, vector<2x4x12xf32> -> vector<2x4x12xf32>
    "tpu.trace_stop"() : () -> ()
    %cst_94 = arith.constant dense<0xFF800000> : vector<2x4xf32>
    %234 = vector.multi_reduction <maximumf>, %233, %cst_94 [2] : vector<2x4x12xf32> to vector<2x4xf32>
    %235 = vector.shape_cast %234 : vector<2x4xf32> to vector<2x4x1xf32>
    %236 = vector.broadcast %235 : vector<2x4x1xf32> to vector<2x4x12xf32>
    %237 = arith.subf %233, %236 : vector<2x4x12xf32>
    %238 = math.exp %237 : vector<2x4x12xf32>
    %cst_95 = arith.constant dense<0.000000e+00> : vector<2x4xf32>
    %239 = vector.multi_reduction <add>, %238, %cst_95 [2] : vector<2x4x12xf32> to vector<2x4xf32>
    %240 = vector.shape_cast %239 : vector<2x4xf32> to vector<2x4x1xf32>
    %241 = tpu.reciprocal %240 {approx = true} : vector<2x4x1xf32> -> vector<2x4x1xf32>
    %242 = vector.broadcast %241 : vector<2x4x1xf32> to vector<2x4x12xf32>
    %243 = arith.mulf %238, %242 : vector<2x4x12xf32>
    %244 = vector.extract_strided_slice %193 {offsets = [0, 0, 16], sizes = [2, 12, 8], strides = [1, 1, 1]} : vector<2x12x32xf32> to vector<2x12x8xf32>
    "tpu.trace_start"() <{level = 10 : i32, message = "wqk,wkd->wqd"}> : () -> ()
    %cst_96 = arith.constant dense<0.000000e+00> : vector<2x4x8xf32>
    %245 = tpu.matmul %243, %244, %cst_96 {dimension_numbers = #tpu.dot_dimension_numbers<[2], [1], [1], [2], [0, 0, 0, 1, 1, 2], [0], [0]>} : vector<2x4x12xf32>, vector<2x12x8xf32>, vector<2x4x8xf32> -> vector<2x4x8xf32>
    "tpu.trace_stop"() : () -> ()
    %246 = vector.extract_strided_slice %194 {offsets = [0, 0, 24], sizes = [2, 4, 8], strides = [1, 1, 1]} : vector<2x4x32xf32> to vector<2x4x8xf32>
    %cst_97 = arith.constant 0.353553385 : f32
    %247 = vector.broadcast %cst_97 : f32 to vector<2x4x8xf32>
    %248 = arith.mulf %246, %247 : vector<2x4x8xf32>
    %249 = vector.extract_strided_slice %176 {offsets = [0, 0, 24], sizes = [2, 12, 8], strides = [1, 1, 1]} : vector<2x12x32xf32> to vector<2x12x8xf32>
    "tpu.trace_start"() <{level = 10 : i32, message = "wqd,wkd->wqk"}> : () -> ()
    %cst_98 = arith.constant dense<0.000000e+00> : vector<2x4x12xf32>
    %250 = tpu.matmul %248, %249, %cst_98 {dimension_numbers = #tpu.dot_dimension_numbers<[2], [2], [1], [1], [0, 0, 0, 1, 1, 1], [0], [0]>} : vector<2x4x8xf32>, vector<2x12x8xf32>, vector<2x4x12xf32> -> vector<2x4x12xf32>
    "tpu.trace_stop"() : () -> ()
    %cst_99 = arith.constant dense<0xFF800000> : vector<2x4xf32>
    %251 = vector.multi_reduction <maximumf>, %250, %cst_99 [2] : vector<2x4x12xf32> to vector<2x4xf32>
    %252 = vector.shape_cast %251 : vector<2x4xf32> to vector<2x4x1xf32>
    %253 = vector.broadcast %252 : vector<2x4x1xf32> to vector<2x4x12xf32>
    %254 = arith.subf %250, %253 : vector<2x4x12xf32>
    %255 = math.exp %254 : vector<2x4x12xf32>
    %cst_100 = arith.constant dense<0.000000e+00> : vector<2x4xf32>
    %256 = vector.multi_reduction <add>, %255, %cst_100 [2] : vector<2x4x12xf32> to vector<2x4xf32>
    %257 = vector.shape_cast %256 : vector<2x4xf32> to vector<2x4x1xf32>
    %258 = tpu.reciprocal %257 {approx = true} : vector<2x4x1xf32> -> vector<2x4x1xf32>
    %259 = vector.broadcast %258 : vector<2x4x1xf32> to vector<2x4x12xf32>
    %260 = arith.mulf %255, %259 : vector<2x4x12xf32>
    %261 = vector.extract_strided_slice %193 {offsets = [0, 0, 24], sizes = [2, 12, 8], strides = [1, 1, 1]} : vector<2x12x32xf32> to vector<2x12x8xf32>
    "tpu.trace_start"() <{level = 10 : i32, message = "wqk,wkd->wqd"}> : () -> ()
    %cst_101 = arith.constant dense<0.000000e+00> : vector<2x4x8xf32>
    %262 = tpu.matmul %260, %261, %cst_101 {dimension_numbers = #tpu.dot_dimension_numbers<[2], [1], [1], [2], [0, 0, 0, 1, 1, 2], [0], [0]>} : vector<2x4x12xf32>, vector<2x12x8xf32>, vector<2x4x8xf32> -> vector<2x4x8xf32>
    "tpu.trace_stop"() : () -> ()
    %263 = tpu.concatenate %211, %228, %245, %262 in 2 : vector<2x4x8xf32>, vector<2x4x8xf32>, vector<2x4x8xf32>, vector<2x4x8xf32> -> vector<2x4x32xf32>
    %264 = vector.shape_cast %263 : vector<2x4x32xf32> to vector<8x32xf32>
    %265 = arith.truncf %264 : vector<8x32xf32> to vector<8x32xbf16>
    %c0_102 = arith.constant 0 : index
    %c0_103 = arith.constant 0 : index
    %266 = vector.load %arg18[%c0_102, %c0_103] : memref<32x32xbf16, #tpu.memory_space<vmem>>, vector<32x32xbf16>
    %cst_104 = arith.constant dense<0.000000e+00> : vector<8x32xf32>
    %267 = tpu.matmul %265, %266, %cst_104 {dimension_numbers = #tpu.dot_dimension_numbers<[1], [0], [0], [1], [0, 0, 1, 1], [], []>} : vector<8x32xbf16>, vector<32x32xbf16>, vector<8x32xf32> -> vector<8x32xf32>
    %c0_105 = arith.constant 0 : index
    %c0_106 = arith.constant 0 : index
    %268 = vector.load %arg19[%c0_105, %c0_106] : memref<1x32xf32, #tpu.memory_space<vmem>>, vector<1x32xf32>
    %269 = vector.broadcast %268 : vector<1x32xf32> to vector<8x32xf32>
    %270 = arith.addf %267, %269 : vector<8x32xf32>
    %271 = arith.addf %153, %270 : vector<8x32xf32>
    %cst_107 = arith.constant dense<0.000000e+00> : vector<8xf32>
    %272 = vector.multi_reduction <add>, %271, %cst_107 [1] : vector<8x32xf32> to vector<8xf32>
    %273 = vector.shape_cast %272 : vector<8xf32> to vector<8x1xf32>
    %cst_108 = arith.constant 3.200000e+01 : f32
    %274 = vector.broadcast %cst_108 : f32 to vector<8x1xf32>
    %275 = arith.divf %273, %274 : vector<8x1xf32>
    %276 = vector.broadcast %275 : vector<8x1xf32> to vector<8x32xf32>
    %277 = arith.subf %271, %276 : vector<8x32xf32>
    %278 = arith.mulf %277, %277 : vector<8x32xf32>
    %cst_109 = arith.constant dense<0.000000e+00> : vector<8xf32>
    %279 = vector.multi_reduction <add>, %278, %cst_109 [1] : vector<8x32xf32> to vector<8xf32>
    %280 = vector.shape_cast %279 : vector<8xf32> to vector<8x1xf32>
    %cst_110 = arith.constant 3.200000e+01 : f32
    %281 = vector.broadcast %cst_110 : f32 to vector<8x1xf32>
    %282 = arith.divf %280, %281 : vector<8x1xf32>
    %283 = vector.broadcast %275 : vector<8x1xf32> to vector<8x32xf32>
    %284 = arith.subf %271, %283 : vector<8x32xf32>
    %cst_111 = arith.constant 9.99999974E-6 : f32
    %285 = vector.broadcast %cst_111 : f32 to vector<8x1xf32>
    %286 = arith.addf %282, %285 : vector<8x1xf32>
    %287 = math.rsqrt %286 : vector<8x1xf32>
    %288 = vector.broadcast %287 : vector<8x1xf32> to vector<8x32xf32>
    %289 = arith.mulf %284, %288 : vector<8x32xf32>
    %c0_112 = arith.constant 0 : index
    %c0_113 = arith.constant 0 : index
    %290 = vector.load %arg26[%c0_112, %c0_113] : memref<1x32xf32, #tpu.memory_space<vmem>>, vector<1x32xf32>
    %291 = vector.broadcast %290 : vector<1x32xf32> to vector<8x32xf32>
    %292 = arith.mulf %289, %291 : vector<8x32xf32>
    %c0_114 = arith.constant 0 : index
    %c0_115 = arith.constant 0 : index
    %293 = vector.load %arg27[%c0_114, %c0_115] : memref<1x32xf32, #tpu.memory_space<vmem>>, vector<1x32xf32>
    %294 = vector.broadcast %293 : vector<1x32xf32> to vector<8x32xf32>
    %295 = arith.addf %292, %294 : vector<8x32xf32>
    %296 = arith.truncf %295 : vector<8x32xf32> to vector<8x32xbf16>
    %c0_116 = arith.constant 0 : index
    %c0_117 = arith.constant 0 : index
    %297 = vector.load %arg20[%c0_116, %c0_117] : memref<32x64xbf16, #tpu.memory_space<vmem>>, vector<32x64xbf16>
    %cst_118 = arith.constant dense<0.000000e+00> : vector<8x64xf32>
    %298 = tpu.matmul %296, %297, %cst_118 {dimension_numbers = #tpu.dot_dimension_numbers<[1], [0], [0], [1], [0, 0, 1, 1], [], []>} : vector<8x32xbf16>, vector<32x64xbf16>, vector<8x64xf32> -> vector<8x64xf32>
    %c0_119 = arith.constant 0 : index
    %c0_120 = arith.constant 0 : index
    %299 = vector.load %arg21[%c0_119, %c0_120] : memref<1x64xf32, #tpu.memory_space<vmem>>, vector<1x64xf32>
    %300 = vector.broadcast %299 : vector<1x64xf32> to vector<8x64xf32>
    %301 = arith.addf %298, %300 : vector<8x64xf32>
    %cst_121 = arith.constant 0.000000e+00 : f32
    %302 = vector.broadcast %cst_121 : f32 to vector<8x64xf32>
    %303 = arith.maximumf %301, %302 : vector<8x64xf32>
    %304 = arith.truncf %303 : vector<8x64xf32> to vector<8x64xbf16>
    %c0_122 = arith.constant 0 : index
    %c0_123 = arith.constant 0 : index
    %305 = vector.load %arg22[%c0_122, %c0_123] : memref<64x32xbf16, #tpu.memory_space<vmem>>, vector<64x32xbf16>
    %cst_124 = arith.constant dense<0.000000e+00> : vector<8x32xf32>
    %306 = tpu.matmul %304, %305, %cst_124 {dimension_numbers = #tpu.dot_dimension_numbers<[1], [0], [0], [1], [0, 0, 1, 1], [], []>} : vector<8x64xbf16>, vector<64x32xbf16>, vector<8x32xf32> -> vector<8x32xf32>
    %c0_125 = arith.constant 0 : index
    %c0_126 = arith.constant 0 : index
    %307 = vector.load %arg23[%c0_125, %c0_126] : memref<1x32xf32, #tpu.memory_space<vmem>>, vector<1x32xf32>
    %308 = vector.broadcast %307 : vector<1x32xf32> to vector<8x32xf32>
    %309 = arith.addf %306, %308 : vector<8x32xf32>
    %310 = arith.addf %295, %309 : vector<8x32xf32>
    %cst_127 = arith.constant dense<0.000000e+00> : vector<8xf32>
    %311 = vector.multi_reduction <add>, %310, %cst_127 [1] : vector<8x32xf32> to vector<8xf32>
    %312 = vector.shape_cast %311 : vector<8xf32> to vector<8x1xf32>
    %cst_128 = arith.constant 3.200000e+01 : f32
    %313 = vector.broadcast %cst_128 : f32 to vector<8x1xf32>
    %314 = arith.divf %312, %313 : vector<8x1xf32>
    %315 = vector.broadcast %314 : vector<8x1xf32> to vector<8x32xf32>
    %316 = arith.subf %310, %315 : vector<8x32xf32>
    %317 = arith.mulf %316, %316 : vector<8x32xf32>
    %cst_129 = arith.constant dense<0.000000e+00> : vector<8xf32>
    %318 = vector.multi_reduction <add>, %317, %cst_129 [1] : vector<8x32xf32> to vector<8xf32>
    %319 = vector.shape_cast %318 : vector<8xf32> to vector<8x1xf32>
    %cst_130 = arith.constant 3.200000e+01 : f32
    %320 = vector.broadcast %cst_130 : f32 to vector<8x1xf32>
    %321 = arith.divf %319, %320 : vector<8x1xf32>
    %322 = vector.broadcast %314 : vector<8x1xf32> to vector<8x32xf32>
    %323 = arith.subf %310, %322 : vector<8x32xf32>
    %cst_131 = arith.constant 9.99999974E-6 : f32
    %324 = vector.broadcast %cst_131 : f32 to vector<8x1xf32>
    %325 = arith.addf %321, %324 : vector<8x1xf32>
    %326 = math.rsqrt %325 : vector<8x1xf32>
    %327 = vector.broadcast %326 : vector<8x1xf32> to vector<8x32xf32>
    %328 = arith.mulf %323, %327 : vector<8x32xf32>
    %c0_132 = arith.constant 0 : index
    %c0_133 = arith.constant 0 : index
    %329 = vector.load %arg28[%c0_132, %c0_133] : memref<1x32xf32, #tpu.memory_space<vmem>>, vector<1x32xf32>
    %330 = vector.broadcast %329 : vector<1x32xf32> to vector<8x32xf32>
    %331 = arith.mulf %328, %330 : vector<8x32xf32>
    %c0_134 = arith.constant 0 : index
    %c0_135 = arith.constant 0 : index
    %332 = vector.load %arg29[%c0_134, %c0_135] : memref<1x32xf32, #tpu.memory_space<vmem>>, vector<1x32xf32>
    %333 = vector.broadcast %332 : vector<1x32xf32> to vector<8x32xf32>
    %334 = arith.addf %331, %333 : vector<8x32xf32>
    %c0_136 = arith.constant 0 : index
    %c0_137 = arith.constant 0 : index
    %c0_138 = arith.constant 0 : index
    %335 = vector.load %arg30[%c0_136, %c0_137, %c0_138] : memref<1x8x32xf32, #tpu.memory_space<vmem>>, vector<1x8x32xf32>
    %336 = vector.shape_cast %335 : vector<1x8x32xf32> to vector<8x32xf32>
    %337 = vector.shape_cast %334 : vector<8x32xf32> to vector<1x8x32xf32>
    tpu.vector_store %arg30[%c0_136, %c0_137, %c0_138], %337 {strides = array<i32>} : memref<1x8x32xf32, #tpu.memory_space<vmem>>, vector<1x8x32xf32>,
    return
  }
  func.func @transform_0(%arg0: i32) -> (i32, i32, i32) {
    %c0_i32 = arith.constant 0 : i32
    %c0_i32_0 = arith.constant 0 : i32
    %c0_i32_1 = arith.constant 0 : i32
    return %arg0, %c0_i32, %c0_i32_0 : i32, i32, i32
  }
  func.func @transform_1(%arg0: i32) -> (i32, i32, i32) {
    %c0_i32 = arith.constant 0 : i32
    %c0_i32_0 = arith.constant 0 : i32
    %c0_i32_1 = arith.constant 0 : i32
    return %arg0, %c0_i32, %c0_i32_0 : i32, i32, i32
  }
  func.func @transform_2(%arg0: i32) -> (i32, i32) {
    %c0_i32 = arith.constant 0 : i32
    %c0_i32_0 = arith.constant 0 : i32
    %c0_i32_1 = arith.constant 0 : i32
    return %c0_i32, %c0_i32_0 : i32, i32
  }
  func.func @transform_3(%arg0: i32) -> (i32, i32) {
    %c0_i32 = arith.constant 0 : i32
    %c0_i32_0 = arith.constant 0 : i32
    %c0_i32_1 = arith.constant 0 : i32
    return %c0_i32, %c0_i32_0 : i32, i32
  }
  func.func @transform_4(%arg0: i32) -> (i32, i32) {
    %c0_i32 = arith.constant 0 : i32
    %c0_i32_0 = arith.constant 0 : i32
    %c0_i32_1 = arith.constant 0 : i32
    return %c0_i32, %c0_i32_0 : i32, i32
  }
  func.func @transform_5(%arg0: i32) -> (i32, i32) {
    %c0_i32 = arith.constant 0 : i32
    %c0_i32_0 = arith.constant 0 : i32
    %c0_i32_1 = arith.constant 0 : i32
    return %c0_i32, %c0_i32_0 : i32, i32
  }
  func.func @transform_6(%arg0: i32) -> (i32, i32) {
    %c0_i32 = arith.constant 0 : i32
    %c0_i32_0 = arith.constant 0 : i32
    %c0_i32_1 = arith.constant 0 : i32
    return %c0_i32, %c0_i32_0 : i32, i32
  }
  func.func @transform_7(%arg0: i32) -> (i32, i32) {
    %c0_i32 = arith.constant 0 : i32
    %c0_i32_0 = arith.constant 0 : i32
    %c0_i32_1 = arith.constant 0 : i32
    return %c0_i32, %c0_i32_0 : i32, i32
  }
  func.func @transform_8(%arg0: i32) -> (i32, i32) {
    %c0_i32 = arith.constant 0 : i32
    %c0_i32_0 = arith.constant 0 : i32
    %c0_i32_1 = arith.constant 0 : i32
    return %c0_i32, %c0_i32_0 : i32, i32
  }
  func.func @transform_9(%arg0: i32) -> (i32, i32) {
    %c0_i32 = arith.constant 0 : i32
    %c0_i32_0 = arith.constant 0 : i32
    %c0_i32_1 = arith.constant 0 : i32
    return %c0_i32, %c0_i32_0 : i32, i32
  }
  func.func @transform_10(%arg0: i32) -> (i32, i32) {
    %c0_i32 = arith.constant 0 : i32
    %c0_i32_0 = arith.constant 0 : i32
    %c0_i32_1 = arith.constant 0 : i32
    return %c0_i32, %c0_i32_0 : i32, i32
  }
  func.func @transform_11(%arg0: i32) -> (i32, i32) {
    %c0_i32 = arith.constant 0 : i32
    %c0_i32_0 = arith.constant 0 : i32
    %c0_i32_1 = arith.constant 0 : i32
    return %c0_i32, %c0_i32_0 : i32, i32
  }
  func.func @transform_12(%arg0: i32) -> (i32, i32) {
    %c0_i32 = arith.constant 0 : i32
    %c0_i32_0 = arith.constant 0 : i32
    %c0_i32_1 = arith.constant 0 : i32
    return %c0_i32, %c0_i32_0 : i32, i32
  }
  func.func @transform_13(%arg0: i32) -> (i32, i32) {
    %c0_i32 = arith.constant 0 : i32
    %c0_i32_0 = arith.constant 0 : i32
    %c0_i32_1 = arith.constant 0 : i32
    return %c0_i32, %c0_i32_0 : i32, i32
  }
  func.func @transform_14(%arg0: i32) -> (i32, i32) {
    %c0_i32 = arith.constant 0 : i32
    %c0_i32_0 = arith.constant 0 : i32
    %c0_i32_1 = arith.constant 0 : i32
    return %c0_i32, %c0_i32_0 : i32, i32
  }
  func.func @transform_15(%arg0: i32) -> (i32, i32) {
    %c0_i32 = arith.constant 0 : i32
    %c0_i32_0 = arith.constant 0 : i32
    %c0_i32_1 = arith.constant 0 : i32
    return %c0_i32, %c0_i32_0 : i32, i32
  }
  func.func @transform_16(%arg0: i32) -> (i32, i32) {
    %c0_i32 = arith.constant 0 : i32
    %c0_i32_0 = arith.constant 0 : i32
    %c0_i32_1 = arith.constant 0 : i32
    return %c0_i32, %c0_i32_0 : i32, i32
  }
  func.func @transform_17(%arg0: i32) -> (i32, i32) {
    %c0_i32 = arith.constant 0 : i32
    %c0_i32_0 = arith.constant 0 : i32
    %c0_i32_1 = arith.constant 0 : i32
    return %c0_i32, %c0_i32_0 : i32, i32
  }
  func.func @transform_18(%arg0: i32) -> (i32, i32) {
    %c0_i32 = arith.constant 0 : i32
    %c0_i32_0 = arith.constant 0 : i32
    %c0_i32_1 = arith.constant 0 : i32
    return %c0_i32, %c0_i32_0 : i32, i32
  }
  func.func @transform_19(%arg0: i32) -> (i32, i32) {
    %c0_i32 = arith.constant 0 : i32
    %c0_i32_0 = arith.constant 0 : i32
    %c0_i32_1 = arith.constant 0 : i32
    return %c0_i32, %c0_i32_0 : i32, i32
  }
  func.func @transform_20(%arg0: i32) -> (i32, i32) {
    %c0_i32 = arith.constant 0 : i32
    %c0_i32_0 = arith.constant 0 : i32
    %c0_i32_1 = arith.constant 0 : i32
    return %c0_i32, %c0_i32_0 : i32, i32
  }
  func.func @transform_21(%arg0: i32) -> (i32, i32) {
    %c0_i32 = arith.constant 0 : i32
    %c0_i32_0 = arith.constant 0 : i32
    %c0_i32_1 = arith.constant 0 : i32
    return %c0_i32, %c0_i32_0 : i32, i32
  }
  func.func @transform_22(%arg0: i32) -> (i32, i32) {
    %c0_i32 = arith.constant 0 : i32
    %c0_i32_0 = arith.constant 0 : i32
    %c0_i32_1 = arith.constant 0 : i32
    return %c0_i32, %c0_i32_0 : i32, i32
  }
  func.func @transform_23(%arg0: i32) -> (i32, i32) {
    %c0_i32 = arith.constant 0 : i32
    %c0_i32_0 = arith.constant 0 : i32
    %c0_i32_1 = arith.constant 0 : i32
    return %c0_i32, %c0_i32_0 : i32, i32
  }
  func.func @transform_24(%arg0: i32) -> (i32, i32) {
    %c0_i32 = arith.constant 0 : i32
    %c0_i32_0 = arith.constant 0 : i32
    %c0_i32_1 = arith.constant 0 : i32
    return %c0_i32, %c0_i32_0 : i32, i32
  }
  func.func @transform_25(%arg0: i32) -> (i32, i32) {
    %c0_i32 = arith.constant 0 : i32
    %c0_i32_0 = arith.constant 0 : i32
    %c0_i32_1 = arith.constant 0 : i32
    return %c0_i32, %c0_i32_0 : i32, i32
  }
  func.func @transform_26(%arg0: i32) -> (i32, i32) {
    %c0_i32 = arith.constant 0 : i32
    %c0_i32_0 = arith.constant 0 : i32
    %c0_i32_1 = arith.constant 0 : i32
    return %c0_i32, %c0_i32_0 : i32, i32
  }
  func.func @transform_27(%arg0: i32) -> (i32, i32) {
    %c0_i32 = arith.constant 0 : i32
    %c0_i32_0 = arith.constant 0 : i32
    %c0_i32_1 = arith.constant 0 : i32
    return %c0_i32, %c0_i32_0 : i32, i32
  }
  func.func @transform_28(%arg0: i32) -> (i32, i32) {
    %c0_i32 = arith.constant 0 : i32
    %c0_i32_0 = arith.constant 0 : i32
    %c0_i32_1 = arith.constant 0 : i32
    return %c0_i32, %c0_i32_0 : i32, i32
  }
  func.func @transform_29(%arg0: i32) -> (i32, i32, i32) {
    %c0_i32 = arith.constant 0 : i32
    %c0_i32_0 = arith.constant 0 : i32
    %c0_i32_1 = arith.constant 0 : i32
    return %arg0, %c0_i32, %c0_i32_0 : i32, i32, i32
  }
}

</mosaic_0001>

<llo_original>
// kernel: tpu_custom_call.1
$region0: #{tpu_custom_call.1}
  #allocation0 [shape = 'u32[]', space=smem, size = 0x4, offset = 0x4, fixed_abs, tag = 'smem constant byte address 0x4 - core index']
  #allocation1 [shape = 'u32[144,128]{1,0:T(1,128)}', space=vmem, size = 0x12000, scoped, tag = 'internal scratch']
  %s0 = inlined_call_operand.smem [shape: u32[30], index: -1, kind: input, shape index: {}]
  %s1 = sld [smem:[%s0]]
  %s2 = scalar_lea.smem %s0, 1
  %s3 = sld [smem:[%s2]]
  %s4 = scalar_lea.smem %s0, 2
  %s5 = sld [smem:[%s4]]
  %s6 = scalar_lea.smem %s0, 3
  %s7 = sld [smem:[%s6]]
  %s8 = scalar_lea.smem %s0, 4
  %s9 = sld [smem:[%s8]]
  %s10 = scalar_lea.smem %s0, 5
  %s11 = sld [smem:[%s10]]
  %s12 = scalar_lea.smem %s0, 6
  %s13 = sld [smem:[%s12]]
  %s14 = scalar_lea.smem %s0, 7
  %s15 = sld [smem:[%s14]]
  %s16 = scalar_lea.smem %s0, 8
  %s17 = sld [smem:[%s16]]
  %s18 = scalar_lea.smem %s0, 9
  %s19 = sld [smem:[%s18]]
  %s20 = scalar_lea.smem %s0, 10
  %s21 = sld [smem:[%s20]]
  %s22 = scalar_lea.smem %s0, 11
  %s23 = sld [smem:[%s22]]
  %s24 = scalar_lea.smem %s0, 12
  %s25 = sld [smem:[%s24]]
  %s26 = scalar_lea.smem %s0, 13
  %s27 = sld [smem:[%s26]]
  %s28 = scalar_lea.smem %s0, 14
  %s29 = sld [smem:[%s28]]
  %s30 = scalar_lea.smem %s0, 15
  %s31 = sld [smem:[%s30]]
  %s32 = scalar_lea.smem %s0, 16
  %s33 = sld [smem:[%s32]]
  %s34 = scalar_lea.smem %s0, 17
  %s35 = sld [smem:[%s34]]
  %s36 = scalar_lea.smem %s0, 18
  %s37 = sld [smem:[%s36]]
  %s38 = scalar_lea.smem %s0, 19
  %s39 = sld [smem:[%s38]]
  %s40 = scalar_lea.smem %s0, 20
  %s41 = sld [smem:[%s40]]
  %s42 = scalar_lea.smem %s0, 21
  %s43 = sld [smem:[%s42]]
  %s44 = scalar_lea.smem %s0, 22
  %s45 = sld [smem:[%s44]]
  %s46 = scalar_lea.smem %s0, 23
  %s47 = sld [smem:[%s46]]
  %s48 = scalar_lea.smem %s0, 24
  %s49 = sld [smem:[%s48]]
  %s50 = scalar_lea.smem %s0, 25
  %s51 = sld [smem:[%s50]]
  %s52 = scalar_lea.smem %s0, 26
  %s53 = sld [smem:[%s52]]
  %s54 = scalar_lea.smem %s0, 27
  %s55 = sld [smem:[%s54]]
  %s56 = scalar_lea.smem %s0, 28
  %s57 = sld [smem:[%s56]]
  %s58 = scalar_lea.smem %s0, 29
  %s59 = sld [smem:[%s58]]
  %s60 = sld [smem:[#allocation0]]
  $region217: #{tpu_custom_call.1} parent=0
    _
  %s62 = ssub.s32 1, %s60
  %s63 = scalar_select 0, %s62, %s60
  $region1: #{tpu_custom_call.1} parent=0
    #allocation2 [shape = 'u8[16384]{0}', space=vmem, size = 0x4000, scoped, tag = 'input window, operand 1']
    #allocation3 [shape = 's32[2]{0}', space=sflag, size = 0x8, scoped, tag = 'scoped memory for tpu_custom_call.1']
    #allocation4 [shape = 's32[2]{0}', space=sflag, size = 0x8, scoped, tag = 'scoped memory for tpu_custom_call.1']
    #allocation5 [shape = 'u8[8192]{0}', space=vmem, size = 0x2000, scoped, tag = 'input window, operand 3, single buffered']
    #allocation6 [shape = 's32[1]{0}', space=sflag, size = 0x4, scoped, tag = 'scoped memory for tpu_custom_call.1']
    #allocation7 [shape = 'u8[8192]{0}', space=vmem, size = 0x2000, scoped, tag = 'input window, operand 4, single buffered']
    #allocation8 [shape = 'u8[8192]{0}', space=vmem, size = 0x2000, scoped, tag = 'input window, operand 5, single buffered']
    #allocation9 [shape = 's32[1]{0}', space=sflag, size = 0x4, scoped, tag = 'scoped memory for tpu_custom_call.1']
    #allocation10 [shape = 'u8[512]{0}', space=vmem, size = 0x400, scoped, tag = 'input window, operand 6, single buffered']
    #allocation11 [shape = 'u8[512]{0}', space=vmem, size = 0x400, scoped, tag = 'input window, operand 7, single buffered']
    #allocation12 [shape = 's32[1]{0}', space=sflag, size = 0x4, scoped, tag = 'scoped memory for tpu_custom_call.1']
    #allocation13 [shape = 'u8[512]{0}', space=vmem, size = 0x400, scoped, tag = 'input window, operand 8, single buffered']
    #allocation14 [shape = 'u8[512]{0}', space=vmem, size = 0x400, scoped, tag = 'input window, operand 10, single buffered']
    #allocation15 [shape = 's32[1]{0}', space=sflag, size = 0x4, scoped, tag = 'scoped memory for tpu_custom_call.1']
    #allocation16 [shape = 'u8[8192]{0}', space=vmem, size = 0x2000, scoped, tag = 'input window, operand 11, single buffered']
    #allocation17 [shape = 'u8[8192]{0}', space=vmem, size = 0x2000, scoped, tag = 'input window, operand 12, single buffered']
    #allocation18 [shape = 's32[1]{0}', space=sflag, size = 0x4, scoped, tag = 'scoped memory for tpu_custom_call.1']
    #allocation19 [shape = 'u8[8192]{0}', space=vmem, size = 0x2000, scoped, tag = 'input window, operand 13, single buffered']
    #allocation20 [shape = 'u8[512]{0}', space=vmem, size = 0x400, scoped, tag = 'input window, operand 14, single buffered']
    #allocation21 [shape = 's32[1]{0}', space=sflag, size = 0x4, scoped, tag = 'scoped memory for tpu_custom_call.1']
    #allocation22 [shape = 'u8[512]{0}', space=vmem, size = 0x400, scoped, tag = 'input window, operand 15, single buffered']
    #allocation23 [shape = 'u8[512]{0}', space=vmem, size = 0x400, scoped, tag = 'input window, operand 16, single buffered']
    #allocation24 [shape = 's32[1]{0}', space=sflag, size = 0x4, scoped, tag = 'scoped memory for tpu_custom_call.1']
    #allocation25 [shape = 'u8[8192]{0}', space=vmem, size = 0x2000, scoped, tag = 'input window, operand 17, single buffered']
    #allocation26 [shape = 'u8[512]{0}', space=vmem, size = 0x400, scoped, tag = 'input window, operand 18, single buffered']
    #allocation27 [shape = 's32[1]{0}', space=sflag, size = 0x4, scoped, tag = 'scoped memory for tpu_custom_call.1']
    #allocation28 [shape = 'u8[8192]{0}', space=vmem, size = 0x2000, scoped, tag = 'input window, operand 19, single buffered']
    #allocation29 [shape = 'u8[8192]{0}', space=vmem, size = 0x2000, scoped, tag = 'output window, operand 0']
    %64 = vsyncpa [#allocation3], 0
    %s65 = scalar_lea.sflag [#allocation3], 1
    %66 = vsyncpa %s65, 0
    %67 = vsyncpa [#allocation6], 0
    %68 = vsyncpa [#allocation9], 0
    %69 = vsyncpa [#allocation12], 0
    %70 = vsyncpa [#allocation15], 0
    %71 = vsyncpa [#allocation18], 0
    %72 = vsyncpa [#allocation21], 0
    %73 = vsyncpa [#allocation24], 0
    %74 = vsyncpa [#allocation27], 0
    %75 = vsyncpa [#allocation4], 0
    %s76 = scalar_lea.sflag [#allocation4], 1
    %77 = vsyncpa %s76, 0
    loop: start=0, step=1, limit=4
    $region2: #{tpu_custom_call.1} parent=1 // loop_pre_header
      _
    $region3: #{tpu_custom_call.1} parent=1 // loop_header
      %s79 = sphi 0, %s83
      %p80 = scmp.ge.s32.totalorder %s79, 4
      %s89 = sphi 0, %s91
      %s92 = sphi 0, %s89
      %s93 = sphi 0, %s92
      %s109 = sphi 0, %s93
      %s115 = sphi 0, %s117
      %s118 = sphi 0, %s115
      %s119 = sphi 0, %s118
      %s135 = sphi 0, %s119
      %s139 = sphi 0, %s139
      %s141 = sphi 0, %s139
      %s142 = sphi 0, %s141
      %s156 = sphi 0, %s142
      %s160 = sphi 0, %s160
      %s162 = sphi 0, %s160
      %s163 = sphi 0, %s162
      %s177 = sphi 0, %s163
      %s181 = sphi 0, %s181
      %s183 = sphi 0, %s181
      %s184 = sphi 0, %s183
      %s198 = sphi 0, %s184
      %s202 = sphi 0, %s202
      %s204 = sphi 0, %s202
      %s205 = sphi 0, %s204
      %s219 = sphi 0, %s205
      %s223 = sphi 0, %s223
      %s225 = sphi 0, %s223
      %s226 = sphi 0, %s225
      %s240 = sphi 0, %s226
      %s244 = sphi 0, %s244
      %s246 = sphi 0, %s244
      %s247 = sphi 0, %s246
      %s261 = sphi 0, %s247
      %s265 = sphi 0, %s265
      %s267 = sphi 0, %s265
      %s268 = sphi 0, %s267
      %s282 = sphi 0, %s268
      %s286 = sphi 0, %s286
      %s288 = sphi 0, %s286
      %s289 = sphi 0, %s288
      %s303 = sphi 0, %s289
      %s307 = sphi 0, %s307
      %s309 = sphi 0, %s307
      %s310 = sphi 0, %s309
      %s324 = sphi 0, %s310
      %s328 = sphi 0, %s328
      %s330 = sphi 0, %s328
      %s331 = sphi 0, %s330
      %s345 = sphi 0, %s331
      %s349 = sphi 0, %s349
      %s351 = sphi 0, %s349
      %s352 = sphi 0, %s351
      %s366 = sphi 0, %s352
      %s370 = sphi 0, %s370
      %s372 = sphi 0, %s370
      %s373 = sphi 0, %s372
      %s387 = sphi 0, %s373
      %s391 = sphi 0, %s391
      %s393 = sphi 0, %s391
      %s394 = sphi 0, %s393
      %s408 = sphi 0, %s394
      %s412 = sphi 0, %s412
      %s414 = sphi 0, %s412
      %s415 = sphi 0, %s414
      %s429 = sphi 0, %s415
      %s433 = sphi 0, %s433
      %s435 = sphi 0, %s433
      %s436 = sphi 0, %s435
      %s450 = sphi 0, %s436
      %s454 = sphi 0, %s454
      %s456 = sphi 0, %s454
      %s457 = sphi 0, %s456
      %s471 = sphi 0, %s457
      %s475 = sphi 0, %s475
      %s477 = sphi 0, %s475
      %s478 = sphi 0, %s477
      %s492 = sphi 0, %s478
      %s496 = sphi 0, %s496
      %s498 = sphi 0, %s496
      %s499 = sphi 0, %s498
      %s513 = sphi 0, %s499
      %s517 = sphi 0, %s517
      %s519 = sphi 0, %s517
      %s520 = sphi 0, %s519
      %s534 = sphi 0, %s520
      %s538 = sphi 0, %s538
      %s540 = sphi 0, %s538
      %s541 = sphi 0, %s540
      %s555 = sphi 0, %s541
      %s559 = sphi 0, %s559
      %s561 = sphi 0, %s559
      %s562 = sphi 0, %s561
      %s576 = sphi 0, %s562
      %s580 = sphi 0, %s580
      %s582 = sphi 0, %s580
      %s583 = sphi 0, %s582
      %s597 = sphi 0, %s583
      %s601 = sphi 0, %s601
      %s603 = sphi 0, %s601
      %s604 = sphi 0, %s603
      %s618 = sphi 0, %s604
      %s622 = sphi 0, %s622
      %s624 = sphi 0, %s622
      %s625 = sphi 0, %s624
      %s639 = sphi 0, %s625
      %s643 = sphi 0, %s643
      %s645 = sphi 0, %s643
      %s646 = sphi 0, %s645
      %s660 = sphi 0, %s646
      %s664 = sphi 0, %s664
      %s666 = sphi 0, %s664
      %s667 = sphi 0, %s666
      %s681 = sphi 0, %s667
      %s685 = sphi 0, %s685
      %s687 = sphi 0, %s685
      %s688 = sphi 0, %s687
      %s702 = sphi 0, %s688
      %s708 = sphi 0, %s710
      %s711 = sphi 0, %s708
      %s712 = sphi 0, %s711
      %s728 = sphi 0, %s712
    $region4: #{tpu_custom_call.1} parent=1 // loop_header_branch
      %82 = sbr.rel (%p80) target = $region8
    $region5: #{tpu_custom_call.1} parent=1 // loop_body
      %s84 = ssub.s32 %s79, 1
      %s85 = ssub.s32 %s79, 2
      %s86 = sadd.s32 %s79, 1
      %s87 = ssub.s32 %s79, %s86
      %p88 = scmp.eq.s32.totalorder %s87, 0
      %s90 = sadd.s32 %s89, 1
      %s91 = scalar_select %p88, %s89, %s90
      %p94 = pneg %p88
      %p95 = scmp.eq.s32.totalorder %s79, 1
      %p96 = por %p94, %p95
      %p97 = scmp.ne.s32.totalorder %s89, %s92
      %p98 = scmp.eq.s32.totalorder %s79, 0
      %p99 = por %p97, %p98
      %p100 = scmp.ne.s32.totalorder %s89, %s92
      %p101 = scmp.eq.s32.totalorder %s84, 1
      %p102 = por %p100, %p101
      %p103 = scmp.ne.s32.totalorder %s92, %s93
      %p104 = scmp.eq.s32.totalorder %s84, 0
      %p105 = por %p103, %p104
      %p106 = scmp.ne.s32.totalorder %s92, %s93
      %p107 = scmp.eq.s32.totalorder %s85, 1
      %p108 = por %p106, %p107
      %p110 = scmp.ne.s32.totalorder %s93, %s109
      %p111 = scmp.eq.s32.totalorder %s85, 0
      %p112 = por %p110, %p111
      %s113 = ssub.s32 %s79, %s86
      %p114 = scmp.eq.s32.totalorder %s113, 0
      %s116 = sadd.s32 %s115, 1
      %s117 = scalar_select %p114, %s115, %s116
      %p120 = pneg %p114
      %p121 = scmp.eq.s32.totalorder %s79, 1
      %p122 = por %p120, %p121
      %p123 = scmp.ne.s32.totalorder %s115, %s118
      %p124 = scmp.eq.s32.totalorder %s79, 0
      %p125 = por %p123, %p124
      %p126 = scmp.ne.s32.totalorder %s115, %s118
      %p127 = scmp.eq.s32.totalorder %s84, 1
      %p128 = por %p126, %p127
      %p129 = scmp.ne.s32.totalorder %s118, %s119
      %p130 = scmp.eq.s32.totalorder %s84, 0
      %p131 = por %p129, %p130
      %p132 = scmp.ne.s32.totalorder %s118, %s119
      %p133 = scmp.eq.s32.totalorder %s85, 1
      %p134 = por %p132, %p133
      %p136 = scmp.ne.s32.totalorder %s119, %s135
      %p137 = scmp.eq.s32.totalorder %s85, 0
      %p138 = por %p136, %p137
      %s140 = sadd.s32 %s139, 1
      %p143 = scmp.eq.s32.totalorder %s79, 1
      %p144 = scmp.ne.s32.totalorder %s139, %s141
      %p145 = scmp.eq.s32.totalorder %s79, 0
      %p146 = por %p144, %p145
      %p147 = scmp.ne.s32.totalorder %s139, %s141
      %p148 = scmp.eq.s32.totalorder %s84, 1
      %p149 = por %p147, %p148
      %p150 = scmp.ne.s32.totalorder %s141, %s142
      %p151 = scmp.eq.s32.totalorder %s84, 0
      %p152 = por %p150, %p151
      %p153 = scmp.ne.s32.totalorder %s141, %s142
      %p154 = scmp.eq.s32.totalorder %s85, 1
      %p155 = por %p153, %p154
      %p157 = scmp.ne.s32.totalorder %s142, %s156
      %p158 = scmp.eq.s32.totalorder %s85, 0
      %p159 = por %p157, %p158
      %s161 = sadd.s32 %s160, 1
      %p164 = scmp.eq.s32.totalorder %s79, 1
      %p165 = scmp.ne.s32.totalorder %s160, %s162
      %p166 = scmp.eq.s32.totalorder %s79, 0
      %p167 = por %p165, %p166
      %p168 = scmp.ne.s32.totalorder %s160, %s162
      %p169 = scmp.eq.s32.totalorder %s84, 1
      %p170 = por %p168, %p169
      %p171 = scmp.ne.s32.totalorder %s162, %s163
      %p172 = scmp.eq.s32.totalorder %s84, 0
      %p173 = por %p171, %p172
      %p174 = scmp.ne.s32.totalorder %s162, %s163
      %p175 = scmp.eq.s32.totalorder %s85, 1
      %p176 = por %p174, %p175
      %p178 = scmp.ne.s32.totalorder %s163, %s177
      %p179 = scmp.eq.s32.totalorder %s85, 0
      %p180 = por %p178, %p179
      %s182 = sadd.s32 %s181, 1
      %p185 = scmp.eq.s32.totalorder %s79, 1
      %p186 = scmp.ne.s32.totalorder %s181, %s183
      %p187 = scmp.eq.s32.totalorder %s79, 0
      %p188 = por %p186, %p187
      %p189 = scmp.ne.s32.totalorder %s181, %s183
      %p190 = scmp.eq.s32.totalorder %s84, 1
      %p191 = por %p189, %p190
      %p192 = scmp.ne.s32.totalorder %s183, %s184
      %p193 = scmp.eq.s32.totalorder %s84, 0
      %p194 = por %p192, %p193
      %p195 = scmp.ne.s32.totalorder %s183, %s184
      %p196 = scmp.eq.s32.totalorder %s85, 1
      %p197 = por %p195, %p196
      %p199 = scmp.ne.s32.totalorder %s184, %s198
      %p200 = scmp.eq.s32.totalorder %s85, 0
      %p201 = por %p199, %p200
      %s203 = sadd.s32 %s202, 1
      %p206 = scmp.eq.s32.totalorder %s79, 1
      %p207 = scmp.ne.s32.totalorder %s202, %s204
      %p208 = scmp.eq.s32.totalorder %s79, 0
      %p209 = por %p207, %p208
      %p210 = scmp.ne.s32.totalorder %s202, %s204
      %p211 = scmp.eq.s32.totalorder %s84, 1
      %p212 = por %p210, %p211
      %p213 = scmp.ne.s32.totalorder %s204, %s205
      %p214 = scmp.eq.s32.totalorder %s84, 0
      %p215 = por %p213, %p214
      %p216 = scmp.ne.s32.totalorder %s204, %s205
      %p217 = scmp.eq.s32.totalorder %s85, 1
      %p218 = por %p216, %p217
      %p220 = scmp.ne.s32.totalorder %s205, %s219
      %p221 = scmp.eq.s32.totalorder %s85, 0
      %p222 = por %p220, %p221
      %s224 = sadd.s32 %s223, 1
      %p227 = scmp.eq.s32.totalorder %s79, 1
      %p228 = scmp.ne.s32.totalorder %s223, %s225
      %p229 = scmp.eq.s32.totalorder %s79, 0
      %p230 = por %p228, %p229
      %p231 = scmp.ne.s32.totalorder %s223, %s225
      %p232 = scmp.eq.s32.totalorder %s84, 1
      %p233 = por %p231, %p232
      %p234 = scmp.ne.s32.totalorder %s225, %s226
      %p235 = scmp.eq.s32.totalorder %s84, 0
      %p236 = por %p234, %p235
      %p237 = scmp.ne.s32.totalorder %s225, %s226
      %p238 = scmp.eq.s32.totalorder %s85, 1
      %p239 = por %p237, %p238
      %p241 = scmp.ne.s32.totalorder %s226, %s240
      %p242 = scmp.eq.s32.totalorder %s85, 0
      %p243 = por %p241, %p242
      %s245 = sadd.s32 %s244, 1
      %p248 = scmp.eq.s32.totalorder %s79, 1
      %p249 = scmp.ne.s32.totalorder %s244, %s246
      %p250 = scmp.eq.s32.totalorder %s79, 0
      %p251 = por %p249, %p250
      %p252 = scmp.ne.s32.totalorder %s244, %s246
      %p253 = scmp.eq.s32.totalorder %s84, 1
      %p254 = por %p252, %p253
      %p255 = scmp.ne.s32.totalorder %s246, %s247
      %p256 = scmp.eq.s32.totalorder %s84, 0
      %p257 = por %p255, %p256
      %p258 = scmp.ne.s32.totalorder %s246, %s247
      %p259 = scmp.eq.s32.totalorder %s85, 1
      %p260 = por %p258, %p259
      %p262 = scmp.ne.s32.totalorder %s247, %s261
      %p263 = scmp.eq.s32.totalorder %s85, 0
      %p264 = por %p262, %p263
      %s266 = sadd.s32 %s265, 1
      %p269 = scmp.eq.s32.totalorder %s79, 1
      %p270 = scmp.ne.s32.totalorder %s265, %s267
      %p271 = scmp.eq.s32.totalorder %s79, 0
      %p272 = por %p270, %p271
      %p273 = scmp.ne.s32.totalorder %s265, %s267
      %p274 = scmp.eq.s32.totalorder %s84, 1
      %p275 = por %p273, %p274
      %p276 = scmp.ne.s32.totalorder %s267, %s268
      %p277 = scmp.eq.s32.totalorder %s84, 0
      %p278 = por %p276, %p277
      %p279 = scmp.ne.s32.totalorder %s267, %s268
      %p280 = scmp.eq.s32.totalorder %s85, 1
      %p281 = por %p279, %p280
      %p283 = scmp.ne.s32.totalorder %s268, %s282
      %p284 = scmp.eq.s32.totalorder %s85, 0
      %p285 = por %p283, %p284
      %s287 = sadd.s32 %s286, 1
      %p290 = scmp.eq.s32.totalorder %s79, 1
      %p291 = scmp.ne.s32.totalorder %s286, %s288
      %p292 = scmp.eq.s32.totalorder %s79, 0
      %p293 = por %p291, %p292
      %p294 = scmp.ne.s32.totalorder %s286, %s288
      %p295 = scmp.eq.s32.totalorder %s84, 1
      %p296 = por %p294, %p295
      %p297 = scmp.ne.s32.totalorder %s288, %s289
      %p298 = scmp.eq.s32.totalorder %s84, 0
      %p299 = por %p297, %p298
      %p300 = scmp.ne.s32.totalorder %s288, %s289
      %p301 = scmp.eq.s32.totalorder %s85, 1
      %p302 = por %p300, %p301
      %p304 = scmp.ne.s32.totalorder %s289, %s303
      %p305 = scmp.eq.s32.totalorder %s85, 0
      %p306 = por %p304, %p305
      %s308 = sadd.s32 %s307, 1
      %p311 = scmp.eq.s32.totalorder %s79, 1
      %p312 = scmp.ne.s32.totalorder %s307, %s309
      %p313 = scmp.eq.s32.totalorder %s79, 0
      %p314 = por %p312, %p313
      %p315 = scmp.ne.s32.totalorder %s307, %s309
      %p316 = scmp.eq.s32.totalorder %s84, 1
      %p317 = por %p315, %p316
      %p318 = scmp.ne.s32.totalorder %s309, %s310
      %p319 = scmp.eq.s32.totalorder %s84, 0
      %p320 = por %p318, %p319
      %p321 = scmp.ne.s32.totalorder %s309, %s310
      %p322 = scmp.eq.s32.totalorder %s85, 1
      %p323 = por %p321, %p322
      %p325 = scmp.ne.s32.totalorder %s310, %s324
      %p326 = scmp.eq.s32.totalorder %s85, 0
      %p327 = por %p325, %p326
      %s329 = sadd.s32 %s328, 1
      %p332 = scmp.eq.s32.totalorder %s79, 1
      %p333 = scmp.ne.s32.totalorder %s328, %s330
      %p334 = scmp.eq.s32.totalorder %s79, 0
      %p335 = por %p333, %p334
      %p336 = scmp.ne.s32.totalorder %s328, %s330
      %p337 = scmp.eq.s32.totalorder %s84, 1
      %p338 = por %p336, %p337
      %p339 = scmp.ne.s32.totalorder %s330, %s331
      %p340 = scmp.eq.s32.totalorder %s84, 0
      %p341 = por %p339, %p340
      %p342 = scmp.ne.s32.totalorder %s330, %s331
      %p343 = scmp.eq.s32.totalorder %s85, 1
      %p344 = por %p342, %p343
      %p346 = scmp.ne.s32.totalorder %s331, %s345
      %p347 = scmp.eq.s32.totalorder %s85, 0
      %p348 = por %p346, %p347
      %s350 = sadd.s32 %s349, 1
      %p353 = scmp.eq.s32.totalorder %s79, 1
      %p354 = scmp.ne.s32.totalorder %s349, %s351
      %p355 = scmp.eq.s32.totalorder %s79, 0
      %p356 = por %p354, %p355
      %p357 = scmp.ne.s32.totalorder %s349, %s351
      %p358 = scmp.eq.s32.totalorder %s84, 1
      %p359 = por %p357, %p358
      %p360 = scmp.ne.s32.totalorder %s351, %s352
      %p361 = scmp.eq.s32.totalorder %s84, 0
      %p362 = por %p360, %p361
      %p363 = scmp.ne.s32.totalorder %s351, %s352
      %p364 = scmp.eq.s32.totalorder %s85, 1
      %p365 = por %p363, %p364
      %p367 = scmp.ne.s32.totalorder %s352, %s366
      %p368 = scmp.eq.s32.totalorder %s85, 0
      %p369 = por %p367, %p368
      %s371 = sadd.s32 %s370, 1
      %p374 = scmp.eq.s32.totalorder %s79, 1
      %p375 = scmp.ne.s32.totalorder %s370, %s372
      %p376 = scmp.eq.s32.totalorder %s79, 0
      %p377 = por %p375, %p376
      %p378 = scmp.ne.s32.totalorder %s370, %s372
      %p379 = scmp.eq.s32.totalorder %s84, 1
      %p380 = por %p378, %p379
      %p381 = scmp.ne.s32.totalorder %s372, %s373
      %p382 = scmp.eq.s32.totalorder %s84, 0
      %p383 = por %p381, %p382
      %p384 = scmp.ne.s32.totalorder %s372, %s373
      %p385 = scmp.eq.s32.totalorder %s85, 1
      %p386 = por %p384, %p385
      %p388 = scmp.ne.s32.totalorder %s373, %s387
      %p389 = scmp.eq.s32.totalorder %s85, 0
      %p390 = por %p388, %p389
      %s392 = sadd.s32 %s391, 1
      %p395 = scmp.eq.s32.totalorder %s79, 1
      %p396 = scmp.ne.s32.totalorder %s391, %s393
      %p397 = scmp.eq.s32.totalorder %s79, 0
      %p398 = por %p396, %p397
      %p399 = scmp.ne.s32.totalorder %s391, %s393
      %p400 = scmp.eq.s32.totalorder %s84, 1
      %p401 = por %p399, %p400
      %p402 = scmp.ne.s32.totalorder %s393, %s394
      %p403 = scmp.eq.s32.totalorder %s84, 0
      %p404 = por %p402, %p403
      %p405 = scmp.ne.s32.totalorder %s393, %s394
      %p406 = scmp.eq.s32.totalorder %s85, 1
      %p407 = por %p405, %p406
      %p409 = scmp.ne.s32.totalorder %s394, %s408
      %p410 = scmp.eq.s32.totalorder %s85, 0
      %p411 = por %p409, %p410
      %s413 = sadd.s32 %s412, 1
      %p416 = scmp.eq.s32.totalorder %s79, 1
      %p417 = scmp.ne.s32.totalorder %s412, %s414
      %p418 = scmp.eq.s32.totalorder %s79, 0
      %p419 = por %p417, %p418
      %p420 = scmp.ne.s32.totalorder %s412, %s414
      %p421 = scmp.eq.s32.totalorder %s84, 1
      %p422 = por %p420, %p421
      %p423 = scmp.ne.s32.totalorder %s414, %s415
      %p424 = scmp.eq.s32.totalorder %s84, 0
      %p425 = por %p423, %p424
      %p426 = scmp.ne.s32.totalorder %s414, %s415
      %p427 = scmp.eq.s32.totalorder %s85, 1
      %p428 = por %p426, %p427
      %p430 = scmp.ne.s32.totalorder %s415, %s429
      %p431 = scmp.eq.s32.totalorder %s85, 0
      %p432 = por %p430, %p431
      %s434 = sadd.s32 %s433, 1
      %p437 = scmp.eq.s32.totalorder %s79, 1
      %p438 = scmp.ne.s32.totalorder %s433, %s435
      %p439 = scmp.eq.s32.totalorder %s79, 0
      %p440 = por %p438, %p439
      %p441 = scmp.ne.s32.totalorder %s433, %s435
      %p442 = scmp.eq.s32.totalorder %s84, 1
      %p443 = por %p441, %p442
      %p444 = scmp.ne.s32.totalorder %s435, %s436
      %p445 = scmp.eq.s32.totalorder %s84, 0
      %p446 = por %p444, %p445
      %p447 = scmp.ne.s32.totalorder %s435, %s436
      %p448 = scmp.eq.s32.totalorder %s85, 1
      %p449 = por %p447, %p448
      %p451 = scmp.ne.s32.totalorder %s436, %s450
      %p452 = scmp.eq.s32.totalorder %s85, 0
      %p453 = por %p451, %p452
      %s455 = sadd.s32 %s454, 1
      %p458 = scmp.eq.s32.totalorder %s79, 1
      %p459 = scmp.ne.s32.totalorder %s454, %s456
      %p460 = scmp.eq.s32.totalorder %s79, 0
      %p461 = por %p459, %p460
      %p462 = scmp.ne.s32.totalorder %s454, %s456
      %p463 = scmp.eq.s32.totalorder %s84, 1
      %p464 = por %p462, %p463
      %p465 = scmp.ne.s32.totalorder %s456, %s457
      %p466 = scmp.eq.s32.totalorder %s84, 0
      %p467 = por %p465, %p466
      %p468 = scmp.ne.s32.totalorder %s456, %s457
      %p469 = scmp.eq.s32.totalorder %s85, 1
      %p470 = por %p468, %p469
      %p472 = scmp.ne.s32.totalorder %s457, %s471
      %p473 = scmp.eq.s32.totalorder %s85, 0
      %p474 = por %p472, %p473
      %s476 = sadd.s32 %s475, 1
      %p479 = scmp.eq.s32.totalorder %s79, 1
      %p480 = scmp.ne.s32.totalorder %s475, %s477
      %p481 = scmp.eq.s32.totalorder %s79, 0
      %p482 = por %p480, %p481
      %p483 = scmp.ne.s32.totalorder %s475, %s477
      %p484 = scmp.eq.s32.totalorder %s84, 1
      %p485 = por %p483, %p484
      %p486 = scmp.ne.s32.totalorder %s477, %s478
      %p487 = scmp.eq.s32.totalorder %s84, 0
      %p488 = por %p486, %p487
      %p489 = scmp.ne.s32.totalorder %s477, %s478
      %p490 = scmp.eq.s32.totalorder %s85, 1
      %p491 = por %p489, %p490
      %p493 = scmp.ne.s32.totalorder %s478, %s492
      %p494 = scmp.eq.s32.totalorder %s85, 0
      %p495 = por %p493, %p494
      %s497 = sadd.s32 %s496, 1
      %p500 = scmp.eq.s32.totalorder %s79, 1
      %p501 = scmp.ne.s32.totalorder %s496, %s498
      %p502 = scmp.eq.s32.totalorder %s79, 0
      %p503 = por %p501, %p502
      %p504 = scmp.ne.s32.totalorder %s496, %s498
      %p505 = scmp.eq.s32.totalorder %s84, 1
      %p506 = por %p504, %p505
      %p507 = scmp.ne.s32.totalorder %s498, %s499
      %p508 = scmp.eq.s32.totalorder %s84, 0
      %p509 = por %p507, %p508
      %p510 = scmp.ne.s32.totalorder %s498, %s499
      %p511 = scmp.eq.s32.totalorder %s85, 1
      %p512 = por %p510, %p511
      %p514 = scmp.ne.s32.totalorder %s499, %s513
      %p515 = scmp.eq.s32.totalorder %s85, 0
      %p516 = por %p514, %p515
      %s518 = sadd.s32 %s517, 1
      %p521 = scmp.eq.s32.totalorder %s79, 1
      %p522 = scmp.ne.s32.totalorder %s517, %s519
      %p523 = scmp.eq.s32.totalorder %s79, 0
      %p524 = por %p522, %p523
      %p525 = scmp.ne.s32.totalorder %s517, %s519
      %p526 = scmp.eq.s32.totalorder %s84, 1
      %p527 = por %p525, %p526
      %p528 = scmp.ne.s32.totalorder %s519, %s520
      %p529 = scmp.eq.s32.totalorder %s84, 0
      %p530 = por %p528, %p529
      %p531 = scmp.ne.s32.totalorder %s519, %s520
      %p532 = scmp.eq.s32.totalorder %s85, 1
      %p533 = por %p531, %p532
      %p535 = scmp.ne.s32.totalorder %s520, %s534
      %p536 = scmp.eq.s32.totalorder %s85, 0
      %p537 = por %p535, %p536
      %s539 = sadd.s32 %s538, 1
      %p542 = scmp.eq.s32.totalorder %s79, 1
      %p543 = scmp.ne.s32.totalorder %s538, %s540
      %p544 = scmp.eq.s32.totalorder %s79, 0
      %p545 = por %p543, %p544
      %p546 = scmp.ne.s32.totalorder %s538, %s540
      %p547 = scmp.eq.s32.totalorder %s84, 1
      %p548 = por %p546, %p547
      %p549 = scmp.ne.s32.totalorder %s540, %s541
      %p550 = scmp.eq.s32.totalorder %s84, 0
      %p551 = por %p549, %p550
      %p552 = scmp.ne.s32.totalorder %s540, %s541
      %p553 = scmp.eq.s32.totalorder %s85, 1
      %p554 = por %p552, %p553
      %p556 = scmp.ne.s32.totalorder %s541, %s555
      %p557 = scmp.eq.s32.totalorder %s85, 0
      %p558 = por %p556, %p557
      %s560 = sadd.s32 %s559, 1
      %p563 = scmp.eq.s32.totalorder %s79, 1
      %p564 = scmp.ne.s32.totalorder %s559, %s561
      %p565 = scmp.eq.s32.totalorder %s79, 0
      %p566 = por %p564, %p565
      %p567 = scmp.ne.s32.totalorder %s559, %s561
      %p568 = scmp.eq.s32.totalorder %s84, 1
      %p569 = por %p567, %p568
      %p570 = scmp.ne.s32.totalorder %s561, %s562
      %p571 = scmp.eq.s32.totalorder %s84, 0
      %p572 = por %p570, %p571
      %p573 = scmp.ne.s32.totalorder %s561, %s562
      %p574 = scmp.eq.s32.totalorder %s85, 1
      %p575 = por %p573, %p574
      %p577 = scmp.ne.s32.totalorder %s562, %s576
      %p578 = scmp.eq.s32.totalorder %s85, 0
      %p579 = por %p577, %p578
      %s581 = sadd.s32 %s580, 1
      %p584 = scmp.eq.s32.totalorder %s79, 1
      %p585 = scmp.ne.s32.totalorder %s580, %s582
      %p586 = scmp.eq.s32.totalorder %s79, 0
      %p587 = por %p585, %p586
      %p588 = scmp.ne.s32.totalorder %s580, %s582
      %p589 = scmp.eq.s32.totalorder %s84, 1
      %p590 = por %p588, %p589
      %p591 = scmp.ne.s32.totalorder %s582, %s583
      %p592 = scmp.eq.s32.totalorder %s84, 0
      %p593 = por %p591, %p592
      %p594 = scmp.ne.s32.totalorder %s582, %s583
      %p595 = scmp.eq.s32.totalorder %s85, 1
      %p596 = por %p594, %p595
      %p598 = scmp.ne.s32.totalorder %s583, %s597
      %p599 = scmp.eq.s32.totalorder %s85, 0
      %p600 = por %p598, %p599
      %s602 = sadd.s32 %s601, 1
      %p605 = scmp.eq.s32.totalorder %s79, 1
      %p606 = scmp.ne.s32.totalorder %s601, %s603
      %p607 = scmp.eq.s32.totalorder %s79, 0
      %p608 = por %p606, %p607
      %p609 = scmp.ne.s32.totalorder %s601, %s603
      %p610 = scmp.eq.s32.totalorder %s84, 1
      %p611 = por %p609, %p610
      %p612 = scmp.ne.s32.totalorder %s603, %s604
      %p613 = scmp.eq.s32.totalorder %s84, 0
      %p614 = por %p612, %p613
      %p615 = scmp.ne.s32.totalorder %s603, %s604
      %p616 = scmp.eq.s32.totalorder %s85, 1
      %p617 = por %p615, %p616
      %p619 = scmp.ne.s32.totalorder %s604, %s618
      %p620 = scmp.eq.s32.totalorder %s85, 0
      %p621 = por %p619, %p620
      %s623 = sadd.s32 %s622, 1
      %p626 = scmp.eq.s32.totalorder %s79, 1
      %p627 = scmp.ne.s32.totalorder %s622, %s624
      %p628 = scmp.eq.s32.totalorder %s79, 0
      %p629 = por %p627, %p628
      %p630 = scmp.ne.s32.totalorder %s622, %s624
      %p631 = scmp.eq.s32.totalorder %s84, 1
      %p632 = por %p630, %p631
      %p633 = scmp.ne.s32.totalorder %s624, %s625
      %p634 = scmp.eq.s32.totalorder %s84, 0
      %p635 = por %p633, %p634
      %p636 = scmp.ne.s32.totalorder %s624, %s625
      %p637 = scmp.eq.s32.totalorder %s85, 1
      %p638 = por %p636, %p637
      %p640 = scmp.ne.s32.totalorder %s625, %s639
      %p641 = scmp.eq.s32.totalorder %s85, 0
      %p642 = por %p640, %p641
      %s644 = sadd.s32 %s643, 1
      %p647 = scmp.eq.s32.totalorder %s79, 1
      %p648 = scmp.ne.s32.totalorder %s643, %s645
      %p649 = scmp.eq.s32.totalorder %s79, 0
      %p650 = por %p648, %p649
      %p651 = scmp.ne.s32.totalorder %s643, %s645
      %p652 = scmp.eq.s32.totalorder %s84, 1
      %p653 = por %p651, %p652
      %p654 = scmp.ne.s32.totalorder %s645, %s646
      %p655 = scmp.eq.s32.totalorder %s84, 0
      %p656 = por %p654, %p655
      %p657 = scmp.ne.s32.totalorder %s645, %s646
      %p658 = scmp.eq.s32.totalorder %s85, 1
      %p659 = por %p657, %p658
      %p661 = scmp.ne.s32.totalorder %s646, %s660
      %p662 = scmp.eq.s32.totalorder %s85, 0
      %p663 = por %p661, %p662
      %s665 = sadd.s32 %s664, 1
      %p668 = scmp.eq.s32.totalorder %s79, 1
      %p669 = scmp.ne.s32.totalorder %s664, %s666
      %p670 = scmp.eq.s32.totalorder %s79, 0
      %p671 = por %p669, %p670
      %p672 = scmp.ne.s32.totalorder %s664, %s666
      %p673 = scmp.eq.s32.totalorder %s84, 1
      %p674 = por %p672, %p673
      %p675 = scmp.ne.s32.totalorder %s666, %s667
      %p676 = scmp.eq.s32.totalorder %s84, 0
      %p677 = por %p675, %p676
      %p678 = scmp.ne.s32.totalorder %s666, %s667
      %p679 = scmp.eq.s32.totalorder %s85, 1
      %p680 = por %p678, %p679
      %p682 = scmp.ne.s32.totalorder %s667, %s681
      %p683 = scmp.eq.s32.totalorder %s85, 0
      %p684 = por %p682, %p683
      %s686 = sadd.s32 %s685, 1
      %p689 = scmp.eq.s32.totalorder %s79, 1
      %p690 = scmp.ne.s32.totalorder %s685, %s687
      %p691 = scmp.eq.s32.totalorder %s79, 0
      %p692 = por %p690, %p691
      %p693 = scmp.ne.s32.totalorder %s685, %s687
      %p694 = scmp.eq.s32.totalorder %s84, 1
      %p695 = por %p693, %p694
      %p696 = scmp.ne.s32.totalorder %s687, %s688
      %p697 = scmp.eq.s32.totalorder %s84, 0
      %p698 = por %p696, %p697
      %p699 = scmp.ne.s32.totalorder %s687, %s688
      %p700 = scmp.eq.s32.totalorder %s85, 1
      %p701 = por %p699, %p700
      %p703 = scmp.ne.s32.totalorder %s688, %s702
      %p704 = scmp.eq.s32.totalorder %s85, 0
      %p705 = por %p703, %p704
      %s706 = ssub.s32 %s79, %s86
      %p707 = scmp.eq.s32.totalorder %s706, 0
      %s709 = sadd.s32 %s708, 1
      %s710 = scalar_select %p707, %s708, %s709
      %p713 = pneg %p707
      %p714 = scmp.eq.s32.totalorder %s79, 1
      %p715 = por %p713, %p714
      %p716 = scmp.ne.s32.totalorder %s708, %s711
      %p717 = scmp.eq.s32.totalorder %s79, 0
      %p718 = por %p716, %p717
      %p719 = scmp.ne.s32.totalorder %s708, %s711
      %p720 = scmp.eq.s32.totalorder %s84, 1
      %p721 = por %p719, %p720
      %p722 = scmp.ne.s32.totalorder %s711, %s712
      %p723 = scmp.eq.s32.totalorder %s84, 0
      %p724 = por %p722, %p723
      %p725 = scmp.ne.s32.totalorder %s711, %s712
      %p726 = scmp.eq.s32.totalorder %s85, 1
      %p727 = por %p725, %p726
      %p729 = scmp.ne.s32.totalorder %s712, %s728
      %p730 = scmp.eq.s32.totalorder %s85, 0
      %p731 = por %p729, %p730
      %p732 = scmp.le.s32.totalorder 1, %s79
      %p733 = scmp.lt.s32.totalorder %s79, 3
      %p734 = pnand %p732, %p733
      %p735 = pneg %p734
      // Predicated region
      $region9: #{tpu_custom_call.1} parent=5 // pred_check
        _
      $region10: #{tpu_custom_call.1} parent=5 // pred_check_branch
        %737 = sbr.rel (%p734) target = $region12
      $region11: #{tpu_custom_call.1} parent=5 // pred_region
        %s738 = ssub.s32 %s79, 1
        // Predicated region
        $region13: #{tpu_custom_call.1} parent=11 // pred_check
          %p739 = pneg %p152
        $region14: #{tpu_custom_call.1} parent=11 // pred_check_branch
          %741 = sbr.rel (%p739) target = $region16
        $region15: #{tpu_custom_call.1} parent=11 // pred_region
          _
        $region16: #{tpu_custom_call.1} parent=11 // pred_fallthru
          _
        // Predicated region
        $region17: #{tpu_custom_call.1} parent=11 // pred_check
          %p742 = pneg %p173
        $region18: #{tpu_custom_call.1} parent=11 // pred_check_branch
          %744 = sbr.rel (%p742) target = $region20
        $region19: #{tpu_custom_call.1} parent=11 // pred_region
          %s746 = ssub.s32 256, 256
          %747 = vsyncadd [#allocation6], %s746
          %s748 = sshll.u32 [#allocation5], 4
          %s749 = int_to_ptr.vmem [resolvable:$true] %s748
          %754 = dma.hbm_to_vmem [thread:$0]  %s7, 256, %s749, [#allocation6], 64, 64, 4
        $region20: #{tpu_custom_call.1} parent=11 // pred_fallthru
          _
        // Predicated region
        $region21: #{tpu_custom_call.1} parent=11 // pred_check
          %p755 = pneg %p194
        $region22: #{tpu_custom_call.1} parent=11 // pred_check_branch
          %757 = sbr.rel (%p755) target = $region24
        $region23: #{tpu_custom_call.1} parent=11 // pred_region
          %s759 = ssub.s32 256, 256
          %760 = vsyncadd [#allocation6], %s759
          %s761 = sshll.u32 [#allocation7], 4
          %s762 = int_to_ptr.vmem [resolvable:$true] %s761
          %767 = dma.hbm_to_vmem [thread:$0]  %s9, 256, %s762, [#allocation6], 64, 64, 4
        $region24: #{tpu_custom_call.1} parent=11 // pred_fallthru
          _
        // Predicated region
        $region25: #{tpu_custom_call.1} parent=11 // pred_check
          %p768 = pneg %p215
        $region26: #{tpu_custom_call.1} parent=11 // pred_check_branch
          %770 = sbr.rel (%p768) target = $region28
        $region27: #{tpu_custom_call.1} parent=11 // pred_region
          %s772 = ssub.s32 256, 256
          %773 = vsyncadd [#allocation9], %s772
          %s774 = sshll.u32 [#allocation8], 4
          %s775 = int_to_ptr.vmem [resolvable:$true] %s774
          %780 = dma.hbm_to_vmem [thread:$0]  %s11, 256, %s775, [#allocation9], 64, 64, 4
        $region28: #{tpu_custom_call.1} parent=11 // pred_fallthru
          _
        // Predicated region
        $region29: #{tpu_custom_call.1} parent=11 // pred_check
          %p781 = pneg %p236
        $region30: #{tpu_custom_call.1} parent=11 // pred_check_branch
          %783 = sbr.rel (%p781) target = $region32
        $region31: #{tpu_custom_call.1} parent=11 // pred_region
          %s785 = ssub.s32 16, 16
          %786 = vsyncadd [#allocation9], %s785
          %s788 = sshll.u32 [#allocation10], 4
          %s789 = int_to_ptr.vmem [resolvable:$true] %s788
          %791 = dma.hbm_to_vmem [thread:$0]  %s13, 16, %s789, [#allocation9]
        $region32: #{tpu_custom_call.1} parent=11 // pred_fallthru
          _
        // Predicated region
        $region33: #{tpu_custom_call.1} parent=11 // pred_check
          %p792 = pneg %p257
        $region34: #{tpu_custom_call.1} parent=11 // pred_check_branch
          %794 = sbr.rel (%p792) target = $region36
        $region35: #{tpu_custom_call.1} parent=11 // pred_region
          %s796 = ssub.s32 16, 16
          %797 = vsyncadd [#allocation12], %s796
          %s799 = sshll.u32 [#allocation11], 4
          %s800 = int_to_ptr.vmem [resolvable:$true] %s799
          %802 = dma.hbm_to_vmem [thread:$0]  %s15, 16, %s800, [#allocation12]
        $region36: #{tpu_custom_call.1} parent=11 // pred_fallthru
          _
        // Predicated region
        $region37: #{tpu_custom_call.1} parent=11 // pred_check
          %p803 = pneg %p278
        $region38: #{tpu_custom_call.1} parent=11 // pred_check_branch
          %805 = sbr.rel (%p803) target = $region40
        $region39: #{tpu_custom_call.1} parent=11 // pred_region
          %s807 = ssub.s32 16, 16
          %808 = vsyncadd [#allocation12], %s807
          %s810 = sshll.u32 [#allocation13], 4
          %s811 = int_to_ptr.vmem [resolvable:$true] %s810
          %813 = dma.hbm_to_vmem [thread:$0]  %s17, 16, %s811, [#allocation12]
        $region40: #{tpu_custom_call.1} parent=11 // pred_fallthru
          _
        // Predicated region
        $region41: #{tpu_custom_call.1} parent=11 // pred_check
          %p814 = pneg %p299
        $region42: #{tpu_custom_call.1} parent=11 // pred_check_branch
          %816 = sbr.rel (%p814) target = $region44
        $region43: #{tpu_custom_call.1} parent=11 // pred_region
          _
        $region44: #{tpu_custom_call.1} parent=11 // pred_fallthru
          _
        // Predicated region
        $region45: #{tpu_custom_call.1} parent=11 // pred_check
          %p817 = pneg %p320
        $region46: #{tpu_custom_call.1} parent=11 // pred_check_branch
          %819 = sbr.rel (%p817) target = $region48
        $region47: #{tpu_custom_call.1} parent=11 // pred_region
          %s821 = ssub.s32 16, 16
          %822 = vsyncadd [#allocation15], %s821
          %s824 = sshll.u32 [#allocation14], 4
          %s825 = int_to_ptr.vmem [resolvable:$true] %s824
          %827 = dma.hbm_to_vmem [thread:$0]  %s21, 16, %s825, [#allocation15]
        $region48: #{tpu_custom_call.1} parent=11 // pred_fallthru
          _
        // Predicated region
        $region49: #{tpu_custom_call.1} parent=11 // pred_check
          %p828 = pneg %p341
        $region50: #{tpu_custom_call.1} parent=11 // pred_check_branch
          %830 = sbr.rel (%p828) target = $region52
        $region51: #{tpu_custom_call.1} parent=11 // pred_region
          %s832 = ssub.s32 256, 256
          %833 = vsyncadd [#allocation15], %s832
          %s834 = sshll.u32 [#allocation16], 4
          %s835 = int_to_ptr.vmem [resolvable:$true] %s834
          %840 = dma.hbm_to_vmem [thread:$0]  %s23, 256, %s835, [#allocation15], 64, 64, 4
        $region52: #{tpu_custom_call.1} parent=11 // pred_fallthru
          _
        // Predicated region
        $region53: #{tpu_custom_call.1} parent=11 // pred_check
          %p841 = pneg %p362
        $region54: #{tpu_custom_call.1} parent=11 // pred_check_branch
          %843 = sbr.rel (%p841) target = $region56
        $region55: #{tpu_custom_call.1} parent=11 // pred_region
          %s845 = ssub.s32 256, 256
          %846 = vsyncadd [#allocation18], %s845
          %s847 = sshll.u32 [#allocation17], 4
          %s848 = int_to_ptr.vmem [resolvable:$true] %s847
          %853 = dma.hbm_to_vmem [thread:$0]  %s25, 256, %s848, [#allocation18], 64, 64, 4
        $region56: #{tpu_custom_call.1} parent=11 // pred_fallthru
          _
        // Predicated region
        $region57: #{tpu_custom_call.1} parent=11 // pred_check
          %p854 = pneg %p383
        $region58: #{tpu_custom_call.1} parent=11 // pred_check_branch
          %856 = sbr.rel (%p854) target = $region60
        $region59: #{tpu_custom_call.1} parent=11 // pred_region
          %s858 = ssub.s32 256, 256
          %859 = vsyncadd [#allocation18], %s858
          %s860 = sshll.u32 [#allocation19], 4
          %s861 = int_to_ptr.vmem [resolvable:$true] %s860
          %866 = dma.hbm_to_vmem [thread:$0]  %s27, 256, %s861, [#allocation18], 64, 64, 4
        $region60: #{tpu_custom_call.1} parent=11 // pred_fallthru
          _
        // Predicated region
        $region61: #{tpu_custom_call.1} parent=11 // pred_check
          %p867 = pneg %p404
        $region62: #{tpu_custom_call.1} parent=11 // pred_check_branch
          %869 = sbr.rel (%p867) target = $region64
        $region63: #{tpu_custom_call.1} parent=11 // pred_region
          %s871 = ssub.s32 16, 16
          %872 = vsyncadd [#allocation21], %s871
          %s874 = sshll.u32 [#allocation20], 4
          %s875 = int_to_ptr.vmem [resolvable:$true] %s874
          %877 = dma.hbm_to_vmem [thread:$0]  %s29, 16, %s875, [#allocation21]
        $region64: #{tpu_custom_call.1} parent=11 // pred_fallthru
          _
        // Predicated region
        $region65: #{tpu_custom_call.1} parent=11 // pred_check
          %p878 = pneg %p425
        $region66: #{tpu_custom_call.1} parent=11 // pred_check_branch
          %880 = sbr.rel (%p878) target = $region68
        $region67: #{tpu_custom_call.1} parent=11 // pred_region
          %s882 = ssub.s32 16, 16
          %883 = vsyncadd [#allocation21], %s882
          %s885 = sshll.u32 [#allocation22], 4
          %s886 = int_to_ptr.vmem [resolvable:$true] %s885
          %888 = dma.hbm_to_vmem [thread:$0]  %s31, 16, %s886, [#allocation21]
        $region68: #{tpu_custom_call.1} parent=11 // pred_fallthru
          _
        // Predicated region
        $region69: #{tpu_custom_call.1} parent=11 // pred_check
          %p889 = pneg %p446
        $region70: #{tpu_custom_call.1} parent=11 // pred_check_branch
          %891 = sbr.rel (%p889) target = $region72
        $region71: #{tpu_custom_call.1} parent=11 // pred_region
          %s893 = ssub.s32 16, 16
          %894 = vsyncadd [#allocation24], %s893
          %s896 = sshll.u32 [#allocation23], 4
          %s897 = int_to_ptr.vmem [resolvable:$true] %s896
          %899 = dma.hbm_to_vmem [thread:$0]  %s33, 16, %s897, [#allocation24]
        $region72: #{tpu_custom_call.1} parent=11 // pred_fallthru
          _
        // Predicated region
        $region73: #{tpu_custom_call.1} parent=11 // pred_check
          %p900 = pneg %p467
        $region74: #{tpu_custom_call.1} parent=11 // pred_check_branch
          %902 = sbr.rel (%p900) target = $region76
        $region75: #{tpu_custom_call.1} parent=11 // pred_region
          %s904 = ssub.s32 256, 256
          %905 = vsyncadd [#allocation24], %s904
          %s906 = sshll.u32 [#allocation25], 4
          %s907 = int_to_ptr.vmem [resolvable:$true] %s906
          %912 = dma.hbm_to_vmem [thread:$0]  %s35, 256, %s907, [#allocation24], 64, 64, 4
        $region76: #{tpu_custom_call.1} parent=11 // pred_fallthru
          _
        // Predicated region
        $region77: #{tpu_custom_call.1} parent=11 // pred_check
          %p913 = pneg %p488
        $region78: #{tpu_custom_call.1} parent=11 // pred_check_branch
          %915 = sbr.rel (%p913) target = $region80
        $region79: #{tpu_custom_call.1} parent=11 // pred_region
          %s917 = ssub.s32 16, 16
          %918 = vsyncadd [#allocation27], %s917
          %s920 = sshll.u32 [#allocation26], 4
          %s921 = int_to_ptr.vmem [resolvable:$true] %s920
          %923 = dma.hbm_to_vmem [thread:$0]  %s37, 16, %s921, [#allocation27]
        $region80: #{tpu_custom_call.1} parent=11 // pred_fallthru
          _
        // Predicated region
        $region81: #{tpu_custom_call.1} parent=11 // pred_check
          %p924 = pneg %p509
        $region82: #{tpu_custom_call.1} parent=11 // pred_check_branch
          %926 = sbr.rel (%p924) target = $region84
        $region83: #{tpu_custom_call.1} parent=11 // pred_region
          %s928 = ssub.s32 256, 256
          %929 = vsyncadd [#allocation27], %s928
          %s930 = sshll.u32 [#allocation28], 4
          %s931 = int_to_ptr.vmem [resolvable:$true] %s930
          %936 = dma.hbm_to_vmem [thread:$0]  %s39, 256, %s931, [#allocation27], 64, 64, 4
        $region84: #{tpu_custom_call.1} parent=11 // pred_fallthru
          _
        // Predicated region
        $region85: #{tpu_custom_call.1} parent=11 // pred_check
          %p937 = pneg %p530
        $region86: #{tpu_custom_call.1} parent=11 // pred_check_branch
          %939 = sbr.rel (%p937) target = $region88
        $region87: #{tpu_custom_call.1} parent=11 // pred_region
          _
        $region88: #{tpu_custom_call.1} parent=11 // pred_fallthru
          _
        // Predicated region
        $region89: #{tpu_custom_call.1} parent=11 // pred_check
          %p940 = pneg %p551
        $region90: #{tpu_custom_call.1} parent=11 // pred_check_branch
          %942 = sbr.rel (%p940) target = $region92
        $region91: #{tpu_custom_call.1} parent=11 // pred_region
          _
        $region92: #{tpu_custom_call.1} parent=11 // pred_fallthru
          _
        // Predicated region
        $region93: #{tpu_custom_call.1} parent=11 // pred_check
          %p943 = pneg %p572
        $region94: #{tpu_custom_call.1} parent=11 // pred_check_branch
          %945 = sbr.rel (%p943) target = $region96
        $region95: #{tpu_custom_call.1} parent=11 // pred_region
          _
        $region96: #{tpu_custom_call.1} parent=11 // pred_fallthru
          _
        // Predicated region
        $region97: #{tpu_custom_call.1} parent=11 // pred_check
          %p946 = pneg %p593
        $region98: #{tpu_custom_call.1} parent=11 // pred_check_branch
          %948 = sbr.rel (%p946) target = $region100
        $region99: #{tpu_custom_call.1} parent=11 // pred_region
          _
        $region100: #{tpu_custom_call.1} parent=11 // pred_fallthru
          _
        // Predicated region
        $region101: #{tpu_custom_call.1} parent=11 // pred_check
          %p949 = pneg %p614
        $region102: #{tpu_custom_call.1} parent=11 // pred_check_branch
          %951 = sbr.rel (%p949) target = $region104
        $region103: #{tpu_custom_call.1} parent=11 // pred_region
          _
        $region104: #{tpu_custom_call.1} parent=11 // pred_fallthru
          _
        // Predicated region
        $region105: #{tpu_custom_call.1} parent=11 // pred_check
          %p952 = pneg %p635
        $region106: #{tpu_custom_call.1} parent=11 // pred_check_branch
          %954 = sbr.rel (%p952) target = $region108
        $region107: #{tpu_custom_call.1} parent=11 // pred_region
          _
        $region108: #{tpu_custom_call.1} parent=11 // pred_fallthru
          _
        // Predicated region
        $region109: #{tpu_custom_call.1} parent=11 // pred_check
          %p955 = pneg %p656
        $region110: #{tpu_custom_call.1} parent=11 // pred_check_branch
          %957 = sbr.rel (%p955) target = $region112
        $region111: #{tpu_custom_call.1} parent=11 // pred_region
          _
        $region112: #{tpu_custom_call.1} parent=11 // pred_fallthru
          _
        // Predicated region
        $region113: #{tpu_custom_call.1} parent=11 // pred_check
          %p958 = pneg %p677
        $region114: #{tpu_custom_call.1} parent=11 // pred_check_branch
          %960 = sbr.rel (%p958) target = $region116
        $region115: #{tpu_custom_call.1} parent=11 // pred_region
          _
        $region116: #{tpu_custom_call.1} parent=11 // pred_fallthru
          _
        // Predicated region
        $region117: #{tpu_custom_call.1} parent=11 // pred_check
          %p961 = pneg %p698
        $region118: #{tpu_custom_call.1} parent=11 // pred_check_branch
          %963 = sbr.rel (%p961) target = $region120
        $region119: #{tpu_custom_call.1} parent=11 // pred_region
          _
        $region120: #{tpu_custom_call.1} parent=11 // pred_fallthru
          _
      $region12: #{tpu_custom_call.1} parent=5 // pred_fallthru
        _
      %p964 = scmp.lt.s32.totalorder %s79, 2
      // Predicated region
      $region121: #{tpu_custom_call.1} parent=5 // pred_check
        %p965 = pneg %p964
      $region122: #{tpu_custom_call.1} parent=5 // pred_check_branch
        %967 = sbr.rel (%p965) target = $region124
      $region123: #{tpu_custom_call.1} parent=5 // pred_region
        // Predicated region
        $region125: #{tpu_custom_call.1} parent=123 // pred_check
          %p968 = pneg %p99
        $region126: #{tpu_custom_call.1} parent=123 // pred_check_branch
          %970 = sbr.rel (%p968) target = $region128
        $region127: #{tpu_custom_call.1} parent=123 // pred_region
          %p971 = scmp.lt.s32.totalorder %s79, 1
          %s972 = scalar_select %p971, %s79, 1
          %s973 = smul.addr %s972, 2
          %s974 = smul.addr %s973, 8
          %s975 = scalar_lea.vmem %s1, %s974
        $region128: #{tpu_custom_call.1} parent=123 // pred_fallthru
          _
        // Predicated region
        $region129: #{tpu_custom_call.1} parent=123 // pred_check
          %p976 = pneg %p125
        $region130: #{tpu_custom_call.1} parent=123 // pred_check_branch
          %978 = sbr.rel (%p976) target = $region132
        $region131: #{tpu_custom_call.1} parent=123 // pred_region
          %s979 = sand.u32 %s115, 1
          %s980 = scalar_lea.sflag [#allocation3], %s979
          %s981 = sand.u32 %s115, 1
          %s982 = smul.addr %s981, 16
          %s983 = scalar_lea.vmem [#allocation2], %s982
          %s985 = ssub.s32 256, 256
          %986 = vsyncadd %s980, %s985
          %s987 = smul.addr %s79, 2
          %s988 = smul.addr %s987, 128
          %s989 = scalar_lea.hbm %s3, %s988
          %s990 = sshll.u32 %s983, 4
          %s991 = int_to_ptr.vmem [resolvable:$true] %s990
          %996 = dma.hbm_to_vmem [thread:$0]  %s989, 256, %s991, %s980, 128, 128, 8
        $region132: #{tpu_custom_call.1} parent=123 // pred_fallthru
          _
      $region124: #{tpu_custom_call.1} parent=5 // pred_fallthru
        _
      %p997 = scmp.le.s32.totalorder 1, %s79
      %p998 = scmp.lt.s32.totalorder %s79, 3
      %p999 = pnand %p997, %p998
      %p1000 = pneg %p999
      // Predicated region
      $region133: #{tpu_custom_call.1} parent=5 // pred_check
        _
      $region134: #{tpu_custom_call.1} parent=5 // pred_check_branch
        %1002 = sbr.rel (%p999) target = $region136
      $region135: #{tpu_custom_call.1} parent=5 // pred_region
        %s1003 = ssub.s32 %s79, 1
        %s1004 = sand.u32 %s118, 1
        %s1005 = scalar_lea.sflag [#allocation3], %s1004
        %s1006 = sand.u32 %s118, 1
        %s1007 = smul.addr %s1006, 16
        %s1008 = scalar_lea.vmem [#allocation2], %s1007
        // Predicated region
        $region137: #{tpu_custom_call.1} parent=135 // pred_check
          %p1009 = pneg %p131
        $region138: #{tpu_custom_call.1} parent=135 // pred_check_branch
          %1011 = sbr.rel (%p1009) target = $region140
        $region139: #{tpu_custom_call.1} parent=135 // pred_region
          %1012 = dma.done %s1005, 256
        $region140: #{tpu_custom_call.1} parent=135 // pred_fallthru
          _
        // Predicated region
        $region141: #{tpu_custom_call.1} parent=135 // pred_check
          %p1013 = pneg %p173
        $region142: #{tpu_custom_call.1} parent=135 // pred_check_branch
          %1015 = sbr.rel (%p1013) target = $region144
        $region143: #{tpu_custom_call.1} parent=135 // pred_region
          %1016 = dma.done [#allocation6], 256
        $region144: #{tpu_custom_call.1} parent=135 // pred_fallthru
          _
        // Predicated region
        $region145: #{tpu_custom_call.1} parent=135 // pred_check
          %p1017 = pneg %p194
        $region146: #{tpu_custom_call.1} parent=135 // pred_check_branch
          %1019 = sbr.rel (%p1017) target = $region148
        $region147: #{tpu_custom_call.1} parent=135 // pred_region
          %1020 = dma.done [#allocation6], 256
        $region148: #{tpu_custom_call.1} parent=135 // pred_fallthru
          _
        // Predicated region
        $region149: #{tpu_custom_call.1} parent=135 // pred_check
          %p1021 = pneg %p215
        $region150: #{tpu_custom_call.1} parent=135 // pred_check_branch
          %1023 = sbr.rel (%p1021) target = $region152
        $region151: #{tpu_custom_call.1} parent=135 // pred_region
          %1024 = dma.done [#allocation9], 256
        $region152: #{tpu_custom_call.1} parent=135 // pred_fallthru
          _
        // Predicated region
        $region153: #{tpu_custom_call.1} parent=135 // pred_check
          %p1025 = pneg %p236
        $region154: #{tpu_custom_call.1} parent=135 // pred_check_branch
          %1027 = sbr.rel (%p1025) target = $region156
        $region155: #{tpu_custom_call.1} parent=135 // pred_region
          %1028 = dma.done [#allocation9], 16
        $region156: #{tpu_custom_call.1} parent=135 // pred_fallthru
          _
        // Predicated region
        $region157: #{tpu_custom_call.1} parent=135 // pred_check
          %p1029 = pneg %p257
        $region158: #{tpu_custom_call.1} parent=135 // pred_check_branch
          %1031 = sbr.rel (%p1029) target = $region160
        $region159: #{tpu_custom_call.1} parent=135 // pred_region
          %1032 = dma.done [#allocation12], 16
        $region160: #{tpu_custom_call.1} parent=135 // pred_fallthru
          _
        // Predicated region
        $region161: #{tpu_custom_call.1} parent=135 // pred_check
          %p1033 = pneg %p278
        $region162: #{tpu_custom_call.1} parent=135 // pred_check_branch
          %1035 = sbr.rel (%p1033) target = $region164
        $region163: #{tpu_custom_call.1} parent=135 // pred_region
          %1036 = dma.done [#allocation12], 16
        $region164: #{tpu_custom_call.1} parent=135 // pred_fallthru
          _
        // Predicated region
        $region165: #{tpu_custom_call.1} parent=135 // pred_check
          %p1037 = pneg %p320
        $region166: #{tpu_custom_call.1} parent=135 // pred_check_branch
          %1039 = sbr.rel (%p1037) target = $region168
        $region167: #{tpu_custom_call.1} parent=135 // pred_region
          %1040 = dma.done [#allocation15], 16
        $region168: #{tpu_custom_call.1} parent=135 // pred_fallthru
          _
        // Predicated region
        $region169: #{tpu_custom_call.1} parent=135 // pred_check
          %p1041 = pneg %p341
        $region170: #{tpu_custom_call.1} parent=135 // pred_check_branch
          %1043 = sbr.rel (%p1041) target = $region172
        $region171: #{tpu_custom_call.1} parent=135 // pred_region
          %1044 = dma.done [#allocation15], 256
        $region172: #{tpu_custom_call.1} parent=135 // pred_fallthru
          _
        // Predicated region
        $region173: #{tpu_custom_call.1} parent=135 // pred_check
          %p1045 = pneg %p362
        $region174: #{tpu_custom_call.1} parent=135 // pred_check_branch
          %1047 = sbr.rel (%p1045) target = $region176
        $region175: #{tpu_custom_call.1} parent=135 // pred_region
          %1048 = dma.done [#allocation18], 256
        $region176: #{tpu_custom_call.1} parent=135 // pred_fallthru
          _
        // Predicated region
        $region177: #{tpu_custom_call.1} parent=135 // pred_check
          %p1049 = pneg %p383
        $region178: #{tpu_custom_call.1} parent=135 // pred_check_branch
          %1051 = sbr.rel (%p1049) target = $region180
        $region179: #{tpu_custom_call.1} parent=135 // pred_region
          %1052 = dma.done [#allocation18], 256
        $region180: #{tpu_custom_call.1} parent=135 // pred_fallthru
          _
        // Predicated region
        $region181: #{tpu_custom_call.1} parent=135 // pred_check
          %p1053 = pneg %p404
        $region182: #{tpu_custom_call.1} parent=135 // pred_check_branch
          %1055 = sbr.rel (%p1053) target = $region184
        $region183: #{tpu_custom_call.1} parent=135 // pred_region
          %1056 = dma.done [#allocation21], 16
        $region184: #{tpu_custom_call.1} parent=135 // pred_fallthru
          _
        // Predicated region
        $region185: #{tpu_custom_call.1} parent=135 // pred_check
          %p1057 = pneg %p425
        $region186: #{tpu_custom_call.1} parent=135 // pred_check_branch
          %1059 = sbr.rel (%p1057) target = $region188
        $region187: #{tpu_custom_call.1} parent=135 // pred_region
          %1060 = dma.done [#allocation21], 16
        $region188: #{tpu_custom_call.1} parent=135 // pred_fallthru
          _
        // Predicated region
        $region189: #{tpu_custom_call.1} parent=135 // pred_check
          %p1061 = pneg %p446
        $region190: #{tpu_custom_call.1} parent=135 // pred_check_branch
          %1063 = sbr.rel (%p1061) target = $region192
        $region191: #{tpu_custom_call.1} parent=135 // pred_region
          %1064 = dma.done [#allocation24], 16
        $region192: #{tpu_custom_call.1} parent=135 // pred_fallthru
          _
        // Predicated region
        $region193: #{tpu_custom_call.1} parent=135 // pred_check
          %p1065 = pneg %p467
        $region194: #{tpu_custom_call.1} parent=135 // pred_check_branch
          %1067 = sbr.rel (%p1065) target = $region196
        $region195: #{tpu_custom_call.1} parent=135 // pred_region
          %1068 = dma.done [#allocation24], 256
        $region196: #{tpu_custom_call.1} parent=135 // pred_fallthru
          _
        // Predicated region
        $region197: #{tpu_custom_call.1} parent=135 // pred_check
          %p1069 = pneg %p488
        $region198: #{tpu_custom_call.1} parent=135 // pred_check_branch
          %1071 = sbr.rel (%p1069) target = $region200
        $region199: #{tpu_custom_call.1} parent=135 // pred_region
          %1072 = dma.done [#allocation27], 16
        $region200: #{tpu_custom_call.1} parent=135 // pred_fallthru
          _
        // Predicated region
        $region201: #{tpu_custom_call.1} parent=135 // pred_check
          %p1073 = pneg %p509
        $region202: #{tpu_custom_call.1} parent=135 // pred_check_branch
          %1075 = sbr.rel (%p1073) target = $region204
        $region203: #{tpu_custom_call.1} parent=135 // pred_region
          %1076 = dma.done [#allocation27], 256
        $region204: #{tpu_custom_call.1} parent=135 // pred_fallthru
          _
        %p1077 = scmp.lt.s32.totalorder %s84, 1
        %s1078 = scalar_select %p1077, %s84, 1
        %s1079 = smul.addr %s1078, 2
        %s1080 = smul.addr %s1079, 8
        %s1081 = scalar_lea.vmem %s1, %s1080
        %p1082 = pneg %p105
        %p1083 = pneg %p102
        %s1084 = sand.u32 %s118, 1
        %s1085 = scalar_lea.sflag [#allocation3], %s1084
        %s1086 = sand.u32 %s118, 1
        %s1087 = smul.addr %s1086, 16
        %s1088 = scalar_lea.vmem [#allocation2], %s1087
        %p1089 = pneg %p131
        %p1090 = pneg %p128
        %p1091 = pneg %p152
        %p1092 = pneg %p149
        %p1093 = pneg %p173
        %p1094 = pneg %p170
        %p1095 = pneg %p194
        %p1096 = pneg %p191
        %p1097 = pneg %p215
        %p1098 = pneg %p212
        %p1099 = pneg %p236
        %p1100 = pneg %p233
        %p1101 = pneg %p257
        %p1102 = pneg %p254
        %p1103 = pneg %p278
        %p1104 = pneg %p275
        %p1105 = pneg %p299
        %p1106 = pneg %p296
        %p1107 = pneg %p320
        %p1108 = pneg %p317
        %p1109 = pneg %p341
        %p1110 = pneg %p338
        %p1111 = pneg %p362
        %p1112 = pneg %p359
        %p1113 = pneg %p383
        %p1114 = pneg %p380
        %p1115 = pneg %p404
        %p1116 = pneg %p401
        %p1117 = pneg %p425
        %p1118 = pneg %p422
        %p1119 = pneg %p446
        %p1120 = pneg %p443
        %p1121 = pneg %p467
        %p1122 = pneg %p464
        %p1123 = pneg %p488
        %p1124 = pneg %p485
        %p1125 = pneg %p509
        %p1126 = pneg %p506
        %p1127 = pneg %p530
        %p1128 = pneg %p527
        %p1129 = pneg %p551
        %p1130 = pneg %p548
        %p1131 = pneg %p572
        %p1132 = pneg %p569
        %p1133 = pneg %p593
        %p1134 = pneg %p590
        %p1135 = pneg %p614
        %p1136 = pneg %p611
        %p1137 = pneg %p635
        %p1138 = pneg %p632
        %p1139 = pneg %p656
        %p1140 = pneg %p653
        %p1141 = pneg %p677
        %p1142 = pneg %p674
        %p1143 = pneg %p698
        %p1144 = pneg %p695
        %p1145 = pneg %p724
        %p1146 = pneg %p721
        %s1147 = sand.u32 %s711, 1
        %s1148 = scalar_lea.sflag [#allocation4], %s1147
        %s1149 = sand.u32 %s711, 1
        %s1150 = smul.addr %s1149, 8
        %s1151 = scalar_lea.vmem [#allocation29], %s1150
        %p1152 = scmp.lt.s32.totalorder %s84, 1
        %s1153 = scalar_select %p1152, %s84, 1
        %s1154 = smul.addr %s1153, 2
        %s1155 = smul.addr %s1154, 8
        %s1156 = scalar_lea.vmem %s1, %s1155
        %v1158 = vld [vmem:[%s1156] sm:$0xff]
        %v1159 = vld [vmem:[%s1156 + $0x8] sm:$0xff]
        %v1160 = vld [vmem:[%s1008] sm:$0xff]
        %v1161 = vld [vmem:[%s1008 + $0x8] sm:$0xff]
        %v1162 = vld [vmem:[%s5] sm:$0xff]
        %v1163 = vld [vmem:[%s5 + $0x8] sm:$0xf]
        %v1165 = vcombine.high %v1159, %v1159
        %v1167 = vadd.f32 %v1159, %v1163
        %v1168 = vadd.f32 %v1165, %v1163
        %v1171 = vcombine.low %v1167, %v1168
        %v1173 = vpack.c.bf16 %v1171, %v1171
        %v1174 = vld [vmem:[#allocation5] sm:$0xf]
        %v1175 = vld [vmem:[#allocation5 + $0x4] sm:$0xf]
        %v1176 = vld [vmem:[#allocation5 + $0x8] sm:$0xf]
        %v1177 = vld [vmem:[#allocation5 + $0xc] sm:$0xf]
        %v1178 = vld [vmem:[#allocation10] sm:$0x1]
        %v1180 = vlaneseq
        %v1181 = vshrl.u32 %v1180, 7
        %v1182 = vsub.s32 0, %v1181
        %v1183 = vrot.slane %v1178, %v1182
        %v1189 = vunpack.c.l.b16 %v1174
        %v1190 = vunpack.c.l.b16 %v1175
        %v1191 = vunpack.c.l.b16 %v1176
        %v1192 = vunpack.c.l.b16 %v1177
        %v1193 = vpack.c.b16 %v1190, %v1189
        %v1194 = vpack.c.b16 %v1192, %v1191
        %vm1197 = vcmask 261120
        %v1199 = vsel %vm1197, %v1173, 0
        %1201 = vmatprep.subr.bf16.mxu0 0
        %1202 = vmatpush1.bf16.msra.mxu0 0
        %1203 = vmatprep.subr.bf16.mxu0 0
        %1204 = vmatpush1.bf16.msra.mxu0 0
        %1205 = vmatprep.subr.bf16.mxu0 0
        %1206 = vmatpush1.bf16.msra.mxu0 0
        %1207 = vmatprep.subr.bf16.mxu0 0
        %1208 = vmatpush1.bf16.msra.mxu0 0
        %1209 = vmatprep.subr.bf16.mxu0 0
        %1210 = vmatpush1.bf16.msra.mxu0 0
        %1211 = vmatprep.subr.bf16.mxu0 0
        %1212 = vmatpush1.bf16.msra.mxu0 0
        %1213 = vmatprep.subr.bf16.mxu0 0
        %1214 = vmatpush1.bf16.msra.mxu0 %v1194
        %1215 = vmatprep.subr.bf16.mxu0 0
        %1216 = vmatpush1.bf16.msra.mxu0 %v1193
        %1217 = vmatprep.subr.bf16.mxu0 0
        %1218 = vmatpush2.bf16.msra.mxu0 0
        %1219 = vmatprep.subr.bf16.mxu0 0
        %1220 = vmatpush2.bf16.msra.mxu0 0
        %1221 = vmatprep.subr.bf16.mxu0 0
        %1222 = vmatpush2.bf16.msra.mxu0 0
        %1223 = vmatprep.subr.bf16.mxu0 0
        %1224 = vmatpush2.bf16.msra.mxu0 0
        %1225 = vmatprep.subr.bf16.mxu0 0
        %1226 = vmatpush2.bf16.msra.mxu0 0
        %1227 = vmatprep.subr.bf16.mxu0 0
        %1228 = vmatpush2.bf16.msra.mxu0 0
        %1229 = vmatprep.subr.bf16.mxu0 0
        %1230 = vmatpush2.bf16.msra.mxu0 0
        %1231 = vmatprep.subr.bf16.mxu0 0
        %1232 = vmatpush2.bf16.msra.mxu0 0
        %1233 = vmatprep.mubr.bf16.mxu0 0
        %1234 = vmatmul.mubr.bf16.gmra.mxu0 %v1199
        %v1235 = vpop.f32.mrf.mxu0
        %v1236 = vadd.f32 %v1183, %v1235
        %v1237 = vpop.f32.mrf.mxu0
        %v1238 = vpop.f32.mrf.mxu0
        %v1239 = vpop.f32.mrf.mxu0
        %1240 = vdwg.mxu0
        %v1241 = vpack.c.bf16 %v1159, %v1158
        %v1242 = vld [vmem:[#allocation7] sm:$0xf]
        %v1243 = vld [vmem:[#allocation7 + $0x4] sm:$0xf]
        %v1244 = vld [vmem:[#allocation7 + $0x8] sm:$0xf]
        %v1245 = vld [vmem:[#allocation7 + $0xc] sm:$0xf]
        %v1250 = vunpack.c.l.b16 %v1242
        %v1251 = vunpack.c.l.b16 %v1243
        %v1252 = vunpack.c.l.b16 %v1244
        %v1253 = vunpack.c.l.b16 %v1245
        %v1254 = vpack.c.b16 %v1251, %v1250
        %v1255 = vpack.c.b16 %v1253, %v1252
        %v1259 = vsel %vm1197, %v1241, 0
        %1261 = vmatprep.subr.bf16.mxu0 0
        %1262 = vmatpush1.bf16.msra.mxu0 0
        %1263 = vmatprep.subr.bf16.mxu0 0
        %1264 = vmatpush1.bf16.msra.mxu0 0
        %1265 = vmatprep.subr.bf16.mxu0 0
        %1266 = vmatpush1.bf16.msra.mxu0 0
        %1267 = vmatprep.subr.bf16.mxu0 0
        %1268 = vmatpush1.bf16.msra.mxu0 0
        %1269 = vmatprep.subr.bf16.mxu0 0
        %1270 = vmatpush1.bf16.msra.mxu0 0
        %1271 = vmatprep.subr.bf16.mxu0 0
        %1272 = vmatpush1.bf16.msra.mxu0 0
        %1273 = vmatprep.subr.bf16.mxu0 0
        %1274 = vmatpush1.bf16.msra.mxu0 %v1255
        %1275 = vmatprep.subr.bf16.mxu0 0
        %1276 = vmatpush1.bf16.msra.mxu0 %v1254
        %1277 = vmatprep.subr.bf16.mxu0 0
        %1278 = vmatpush2.bf16.msra.mxu0 0
        %1279 = vmatprep.subr.bf16.mxu0 0
        %1280 = vmatpush2.bf16.msra.mxu0 0
        %1281 = vmatprep.subr.bf16.mxu0 0
        %1282 = vmatpush2.bf16.msra.mxu0 0
        %1283 = vmatprep.subr.bf16.mxu0 0
        %1284 = vmatpush2.bf16.msra.mxu0 0
        %1285 = vmatprep.subr.bf16.mxu0 0
        %1286 = vmatpush2.bf16.msra.mxu0 0
        %1287 = vmatprep.subr.bf16.mxu0 0
        %1288 = vmatpush2.bf16.msra.mxu0 0
        %1289 = vmatprep.subr.bf16.mxu0 0
        %1290 = vmatpush2.bf16.msra.mxu0 0
        %1291 = vmatprep.subr.bf16.mxu0 0
        %1292 = vmatpush2.bf16.msra.mxu0 0
        %1293 = vmatprep.mubr.bf16.mxu0 0
        %1294 = vmatmul.mubr.bf16.gmra.mxu0 %v1259
        %v1295 = vpop.f32.mrf.mxu0
        %v1296 = vadd.f32 0.0, %v1295
        %v1297 = vpop.f32.mrf.mxu0
        %v1298 = vpop.f32.mrf.mxu0
        %v1299 = vadd.f32 0.0, %v1298
        %v1300 = vpop.f32.mrf.mxu0
        %1301 = vdwg.mxu0
        %vm1304 = vcmask 1043456
        %v1305 = vrot.slane %v1296, 4
        %v1306 = vrot.slane %v1299, 4
        %v1307 = vsel %vm1304, %v1305, %v1306
        %v1310 = vpack.c.bf16 %v1163, %v1162
        %v1311 = vld [vmem:[#allocation11] sm:$0x1]
        %v1313 = vlaneseq
        %v1314 = vshrl.u32 %v1313, 7
        %v1315 = vsub.s32 0, %v1314
        %v1316 = vrot.slane %v1311, %v1315
        %v1319 = vsel %vm1197, %v1310, 0
        %1321 = vmatprep.subr.bf16.mxu0 0
        %1322 = vmatpush1.bf16.msra.mxu0 0
        %1323 = vmatprep.subr.bf16.mxu0 0
        %1324 = vmatpush1.bf16.msra.mxu0 0
        %1325 = vmatprep.subr.bf16.mxu0 0
        %1326 = vmatpush1.bf16.msra.mxu0 0
        %1327 = vmatprep.subr.bf16.mxu0 0
        %1328 = vmatpush1.bf16.msra.mxu0 0
        %1329 = vmatprep.subr.bf16.mxu0 0
        %1330 = vmatpush1.bf16.msra.mxu0 0
        %1331 = vmatprep.subr.bf16.mxu0 0
        %1332 = vmatpush1.bf16.msra.mxu0 0
        %1333 = vmatprep.subr.bf16.mxu0 0
        %1334 = vmatpush1.bf16.msra.mxu0 %v1255
        %1335 = vmatprep.subr.bf16.mxu0 0
        %1336 = vmatpush1.bf16.msra.mxu0 %v1254
        %1337 = vmatprep.subr.bf16.mxu0 0
        %1338 = vmatpush2.bf16.msra.mxu0 0
        %1339 = vmatprep.subr.bf16.mxu0 0
        %1340 = vmatpush2.bf16.msra.mxu0 0
        %1341 = vmatprep.subr.bf16.mxu0 0
        %1342 = vmatpush2.bf16.msra.mxu0 0
        %1343 = vmatprep.subr.bf16.mxu0 0
        %1344 = vmatpush2.bf16.msra.mxu0 0
        %1345 = vmatprep.subr.bf16.mxu0 0
        %1346 = vmatpush2.bf16.msra.mxu0 0
        %1347 = vmatprep.subr.bf16.mxu0 0
        %1348 = vmatpush2.bf16.msra.mxu0 0
        %1349 = vmatprep.subr.bf16.mxu0 0
        %1350 = vmatpush2.bf16.msra.mxu0 0
        %1351 = vmatprep.subr.bf16.mxu0 0
        %1352 = vmatpush2.bf16.msra.mxu0 0
        %1353 = vmatprep.mubr.bf16.mxu0 0
        %1354 = vmatmul.mubr.bf16.gmra.mxu0 %v1319
        %v1355 = vpop.f32.mrf.mxu0
        %v1356 = vadd.f32 %v1316, %v1355
        %v1357 = vpop.f32.mrf.mxu0
        %v1358 = vpop.f32.mrf.mxu0
        %v1359 = vadd.f32 %v1316, %v1358
        %v1360 = vpop.f32.mrf.mxu0
        %1361 = vdwg.mxu0
        %v1362 = vadd.f32 %v1296, %v1356
        %v1363 = vadd.f32 %v1299, %v1359
        %v1364 = vadd.f32 %v1307, %v1356
        %v1365 = vadd.f32 %v1306, %v1359
        %v1366 = vld [vmem:[#allocation8] sm:$0xf]
        %v1367 = vld [vmem:[#allocation8 + $0x4] sm:$0xf]
        %v1368 = vld [vmem:[#allocation8 + $0x8] sm:$0xf]
        %v1369 = vld [vmem:[#allocation8 + $0xc] sm:$0xf]
        %v1374 = vunpack.c.l.b16 %v1366
        %v1375 = vunpack.c.l.b16 %v1367
        %v1376 = vunpack.c.l.b16 %v1368
        %v1377 = vunpack.c.l.b16 %v1369
        %v1378 = vpack.c.b16 %v1375, %v1374
        %v1379 = vpack.c.b16 %v1377, %v1376
        %1382 = vmatprep.subr.bf16.mxu0 0
        %1383 = vmatpush1.bf16.msra.mxu0 0
        %1384 = vmatprep.subr.bf16.mxu0 0
        %1385 = vmatpush1.bf16.msra.mxu0 0
        %1386 = vmatprep.subr.bf16.mxu0 0
        %1387 = vmatpush1.bf16.msra.mxu0 0
        %1388 = vmatprep.subr.bf16.mxu0 0
        %1389 = vmatpush1.bf16.msra.mxu0 0
        %1390 = vmatprep.subr.bf16.mxu0 0
        %1391 = vmatpush1.bf16.msra.mxu0 0
        %1392 = vmatprep.subr.bf16.mxu0 0
        %1393 = vmatpush1.bf16.msra.mxu0 0
        %1394 = vmatprep.subr.bf16.mxu0 0
        %1395 = vmatpush1.bf16.msra.mxu0 %v1379
        %1396 = vmatprep.subr.bf16.mxu0 0
        %1397 = vmatpush1.bf16.msra.mxu0 %v1378
        %1398 = vmatprep.subr.bf16.mxu0 0
        %1399 = vmatpush2.bf16.msra.mxu0 0
        %1400 = vmatprep.subr.bf16.mxu0 0
        %1401 = vmatpush2.bf16.msra.mxu0 0
        %1402 = vmatprep.subr.bf16.mxu0 0
        %1403 = vmatpush2.bf16.msra.mxu0 0
        %1404 = vmatprep.subr.bf16.mxu0 0
        %1405 = vmatpush2.bf16.msra.mxu0 0
        %1406 = vmatprep.subr.bf16.mxu0 0
        %1407 = vmatpush2.bf16.msra.mxu0 0
        %1408 = vmatprep.subr.bf16.mxu0 0
        %1409 = vmatpush2.bf16.msra.mxu0 0
        %1410 = vmatprep.subr.bf16.mxu0 0
        %1411 = vmatpush2.bf16.msra.mxu0 0
        %1412 = vmatprep.subr.bf16.mxu0 0
        %1413 = vmatpush2.bf16.msra.mxu0 0
        %1414 = vmatprep.mubr.bf16.mxu0 0
        %1415 = vmatmul.mubr.bf16.gmra.mxu0 %v1259
        %v1416 = vpop.f32.mrf.mxu0
        %v1417 = vadd.f32 0.0, %v1416
        %v1418 = vpop.f32.mrf.mxu0
        %v1419 = vpop.f32.mrf.mxu0
        %v1420 = vadd.f32 0.0, %v1419
        %v1421 = vpop.f32.mrf.mxu0
        %1422 = vdwg.mxu0
        %v1425 = vrot.slane %v1417, 4
        %v1426 = vrot.slane %v1420, 4
        %v1427 = vsel %vm1304, %v1425, %v1426
        %v1430 = vld [vmem:[#allocation13] sm:$0x1]
        %v1432 = vlaneseq
        %v1433 = vshrl.u32 %v1432, 7
        %v1434 = vsub.s32 0, %v1433
        %v1435 = vrot.slane %v1430, %v1434
        %1437 = vmatprep.subr.bf16.mxu0 0
        %1438 = vmatpush1.bf16.msra.mxu0 0
        %1439 = vmatprep.subr.bf16.mxu0 0
        %1440 = vmatpush1.bf16.msra.mxu0 0
        %1441 = vmatprep.subr.bf16.mxu0 0
        %1442 = vmatpush1.bf16.msra.mxu0 0
        %1443 = vmatprep.subr.bf16.mxu0 0
        %1444 = vmatpush1.bf16.msra.mxu0 0
        %1445 = vmatprep.subr.bf16.mxu0 0
        %1446 = vmatpush1.bf16.msra.mxu0 0
        %1447 = vmatprep.subr.bf16.mxu0 0
        %1448 = vmatpush1.bf16.msra.mxu0 0
        %1449 = vmatprep.subr.bf16.mxu0 0
        %1450 = vmatpush1.bf16.msra.mxu0 %v1379
        %1451 = vmatprep.subr.bf16.mxu0 0
        %1452 = vmatpush1.bf16.msra.mxu0 %v1378
        %1453 = vmatprep.subr.bf16.mxu0 0
        %1454 = vmatpush2.bf16.msra.mxu0 0
        %1455 = vmatprep.subr.bf16.mxu0 0
        %1456 = vmatpush2.bf16.msra.mxu0 0
        %1457 = vmatprep.subr.bf16.mxu0 0
        %1458 = vmatpush2.bf16.msra.mxu0 0
        %1459 = vmatprep.subr.bf16.mxu0 0
        %1460 = vmatpush2.bf16.msra.mxu0 0
        %1461 = vmatprep.subr.bf16.mxu0 0
        %1462 = vmatpush2.bf16.msra.mxu0 0
        %1463 = vmatprep.subr.bf16.mxu0 0
        %1464 = vmatpush2.bf16.msra.mxu0 0
        %1465 = vmatprep.subr.bf16.mxu0 0
        %1466 = vmatpush2.bf16.msra.mxu0 0
        %1467 = vmatprep.subr.bf16.mxu0 0
        %1468 = vmatpush2.bf16.msra.mxu0 0
        %1469 = vmatprep.mubr.bf16.mxu0 0
        %1470 = vmatmul.mubr.bf16.gmra.mxu0 %v1319
        %v1471 = vpop.f32.mrf.mxu0
        %v1472 = vadd.f32 %v1435, %v1471
        %v1473 = vpop.f32.mrf.mxu0
        %v1474 = vpop.f32.mrf.mxu0
        %v1475 = vadd.f32 %v1435, %v1474
        %v1476 = vpop.f32.mrf.mxu0
        %1477 = vdwg.mxu0
        %v1478 = vadd.f32 %v1417, %v1472
        %v1479 = vadd.f32 %v1420, %v1475
        %v1480 = vadd.f32 %v1427, %v1472
        %v1481 = vadd.f32 %v1426, %v1475
        %v1483 = vcombine.high %v1236, %v1236
        %v1485 = vmul.f32 %v1236, 0.35355338
        %v1486 = vmul.f32 %v1483, 0.35355338
        %vm1487 = vcmask 64512
        %v1489 = vsel %vm1487, %v1485, 0
        %v1492 = vsel %vm1487, %v1362, 0
        %v1495 = vsel %vm1487, %v1363, 0
        %1497 = vmatprep.subr.mxu0 0.0
        %1498 = vmatpush1.xpose.msra.mxu0 0.0
        %1499 = vmatprep.subr.mxu0 0.0
        %1500 = vmatpush1.xpose.msra.mxu0 0.0
        %1501 = vmatprep.subr.mxu0 0.0
        %1502 = vmatpush1.xpose.msra.mxu0 0.0
        %1503 = vmatprep.subr.mxu0 0.0
        %1504 = vmatpush1.xpose.msra.mxu0 0.0
        %1505 = vmatprep.subr.mxu0 0.0
        %1506 = vmatpush1.xpose.msra.mxu0 0.0
        %1507 = vmatprep.subr.mxu0 0.0
        %1508 = vmatpush1.xpose.msra.mxu0 0.0
        %1509 = vmatprep.subr.mxu0 0.0
        %1510 = vmatpush1.xpose.msra.mxu0 0.0
        %1511 = vmatprep.subr.mxu0 0.0
        %1512 = vmatpush1.xpose.msra.mxu0 0.0
        %1513 = vmatprep.subr.mxu0 0.0
        %1514 = vmatpush1.xpose.msra.mxu0 0.0
        %1515 = vmatprep.subr.mxu0 0.0
        %1516 = vmatpush1.xpose.msra.mxu0 0.0
        %1517 = vmatprep.subr.mxu0 0.0
        %1518 = vmatpush1.xpose.msra.mxu0 0.0
        %1519 = vmatprep.subr.mxu0 0.0
        %1520 = vmatpush1.xpose.msra.mxu0 0.0
        %1521 = vmatprep.subr.mxu0 0.0
        %1522 = vmatpush1.xpose.msra.mxu0 0.0
        %1523 = vmatprep.subr.mxu0 0.0
        %1524 = vmatpush1.xpose.msra.mxu0 0.0
        %1525 = vmatprep.subr.mxu0 0.0
        %1526 = vmatpush1.xpose.msra.mxu0 %v1495
        %1527 = vmatprep.subr.mxu0 0.0
        %1528 = vmatpush1.xpose.msra.mxu0 %v1492
        %1529 = vmatprep.subr.mxu0 0.0
        %1530 = vmatpush2.xpose.msra.mxu0 0.0
        %1531 = vmatprep.subr.mxu0 0.0
        %1532 = vmatpush2.xpose.msra.mxu0 0.0
        %1533 = vmatprep.subr.mxu0 0.0
        %1534 = vmatpush2.xpose.msra.mxu0 0.0
        %1535 = vmatprep.subr.mxu0 0.0
        %1536 = vmatpush2.xpose.msra.mxu0 0.0
        %1537 = vmatprep.subr.mxu0 0.0
        %1538 = vmatpush2.xpose.msra.mxu0 0.0
        %1539 = vmatprep.subr.mxu0 0.0
        %1540 = vmatpush2.xpose.msra.mxu0 0.0
        %1541 = vmatprep.subr.mxu0 0.0
        %1542 = vmatpush2.xpose.msra.mxu0 0.0
        %1543 = vmatprep.subr.mxu0 0.0
        %1544 = vmatpush2.xpose.msra.mxu0 0.0
        %1545 = vmatprep.subr.mxu0 0.0
        %1546 = vmatpush2.xpose.msra.mxu0 0.0
        %1547 = vmatprep.subr.mxu0 0.0
        %1548 = vmatpush2.xpose.msra.mxu0 0.0
        %1549 = vmatprep.subr.mxu0 0.0
        %1550 = vmatpush2.xpose.msra.mxu0 0.0
        %1551 = vmatprep.subr.mxu0 0.0
        %1552 = vmatpush2.xpose.msra.mxu0 0.0
        %1553 = vmatprep.subr.mxu0 0.0
        %1554 = vmatpush2.xpose.msra.mxu0 0.0
        %1555 = vmatprep.subr.mxu0 0.0
        %1556 = vmatpush2.xpose.msra.mxu0 0.0
        %1557 = vmatprep.subr.mxu0 0.0
        %1558 = vmatpush2.xpose.msra.mxu0 0.0
        %1559 = vmatprep.subr.mxu0 0.0
        %1560 = vmatpush2.xpose.msra.mxu0 0.0
        %1561 = vmatprep.mubr.f32.mxu0 0.0
        %1562 = vmatmul.mubr.f32.gmra.mxu0 %v1489
        %v1563 = vpop.f32.mrf.mxu0
        %v1564 = vadd.f32 0.0, %v1563
        %v1565 = vpop.f32.mrf.mxu0
        %1566 = vdwg.mxu0
        %v1568 = vsel %vm1487, %v1486, 0
        %v1571 = vsel %vm1487, %v1364, 0
        %v1574 = vsel %vm1487, %v1365, 0
        %1576 = vmatprep.subr.mxu0 0.0
        %1577 = vmatpush1.xpose.msra.mxu0 0.0
        %1578 = vmatprep.subr.mxu0 0.0
        %1579 = vmatpush1.xpose.msra.mxu0 0.0
        %1580 = vmatprep.subr.mxu0 0.0
        %1581 = vmatpush1.xpose.msra.mxu0 0.0
        %1582 = vmatprep.subr.mxu0 0.0
        %1583 = vmatpush1.xpose.msra.mxu0 0.0
        %1584 = vmatprep.subr.mxu0 0.0
        %1585 = vmatpush1.xpose.msra.mxu0 0.0
        %1586 = vmatprep.subr.mxu0 0.0
        %1587 = vmatpush1.xpose.msra.mxu0 0.0
        %1588 = vmatprep.subr.mxu0 0.0
        %1589 = vmatpush1.xpose.msra.mxu0 0.0
        %1590 = vmatprep.subr.mxu0 0.0
        %1591 = vmatpush1.xpose.msra.mxu0 0.0
        %1592 = vmatprep.subr.mxu0 0.0
        %1593 = vmatpush1.xpose.msra.mxu0 0.0
        %1594 = vmatprep.subr.mxu0 0.0
        %1595 = vmatpush1.xpose.msra.mxu0 0.0
        %1596 = vmatprep.subr.mxu0 0.0
        %1597 = vmatpush1.xpose.msra.mxu0 0.0
        %1598 = vmatprep.subr.mxu0 0.0
        %1599 = vmatpush1.xpose.msra.mxu0 0.0
        %1600 = vmatprep.subr.mxu0 0.0
        %1601 = vmatpush1.xpose.msra.mxu0 0.0
        %1602 = vmatprep.subr.mxu0 0.0
        %1603 = vmatpush1.xpose.msra.mxu0 0.0
        %1604 = vmatprep.subr.mxu0 0.0
        %1605 = vmatpush1.xpose.msra.mxu0 %v1574
        %1606 = vmatprep.subr.mxu0 0.0
        %1607 = vmatpush1.xpose.msra.mxu0 %v1571
        %1608 = vmatprep.subr.mxu0 0.0
        %1609 = vmatpush2.xpose.msra.mxu0 0.0
        %1610 = vmatprep.subr.mxu0 0.0
        %1611 = vmatpush2.xpose.msra.mxu0 0.0
        %1612 = vmatprep.subr.mxu0 0.0
        %1613 = vmatpush2.xpose.msra.mxu0 0.0
        %1614 = vmatprep.subr.mxu0 0.0
        %1615 = vmatpush2.xpose.msra.mxu0 0.0
        %1616 = vmatprep.subr.mxu0 0.0
        %1617 = vmatpush2.xpose.msra.mxu0 0.0
        %1618 = vmatprep.subr.mxu0 0.0
        %1619 = vmatpush2.xpose.msra.mxu0 0.0
        %1620 = vmatprep.subr.mxu0 0.0
        %1621 = vmatpush2.xpose.msra.mxu0 0.0
        %1622 = vmatprep.subr.mxu0 0.0
        %1623 = vmatpush2.xpose.msra.mxu0 0.0
        %1624 = vmatprep.subr.mxu0 0.0
        %1625 = vmatpush2.xpose.msra.mxu0 0.0
        %1626 = vmatprep.subr.mxu0 0.0
        %1627 = vmatpush2.xpose.msra.mxu0 0.0
        %1628 = vmatprep.subr.mxu0 0.0
        %1629 = vmatpush2.xpose.msra.mxu0 0.0
        %1630 = vmatprep.subr.mxu0 0.0
        %1631 = vmatpush2.xpose.msra.mxu0 0.0
        %1632 = vmatprep.subr.mxu0 0.0
        %1633 = vmatpush2.xpose.msra.mxu0 0.0
        %1634 = vmatprep.subr.mxu0 0.0
        %1635 = vmatpush2.xpose.msra.mxu0 0.0
        %1636 = vmatprep.subr.mxu0 0.0
        %1637 = vmatpush2.xpose.msra.mxu0 0.0
        %1638 = vmatprep.subr.mxu0 0.0
        %1639 = vmatpush2.xpose.msra.mxu0 0.0
        %1640 = vmatprep.mubr.f32.mxu0 0.0
        %1641 = vmatmul.mubr.f32.gmra.mxu0 %v1568
        %v1642 = vpop.f32.mrf.mxu0
        %v1643 = vadd.f32 0.0, %v1642
        %v1644 = vpop.f32.mrf.mxu0
        %1645 = vdwg.mxu0
        %vm1646 = vcmask 93184
        %v1647 = vsel %vm1646, %v1564, -inf
        %1648 = vmax.xlane.f32.xlu0 %v1647
        %v1649 = vpop.xlane.xlu0 %1648
        %v1650 = vsel %vm1646, %v1643, -inf
        %1651 = vmax.xlane.f32.xlu0 %v1650
        %v1652 = vpop.xlane.xlu0 %1651
        %v1653 = vsub.f32 %v1564, %v1649
        %v1654 = vsub.f32 %v1643, %v1652
        %v1655 = vmul.f32 %v1653, 1.442695
        %v1656 = vpow.pop %v1655
        %v1657 = vmul.f32 %v1654, 1.442695
        %v1658 = vpow.pop %v1657
        %v1659 = vsel %vm1646, %v1656, 0.0
        %1660 = vadd.xlane.f32.xlu0 %v1659
        %v1661 = vpop.xlane.xlu0 %1660
        %v1662 = vsel %vm1646, %v1658, 0.0
        %1663 = vadd.xlane.f32.xlu0 %v1662
        %v1664 = vpop.xlane.xlu0 %1663
        %v1665 = vrcp.pop %v1661
        %v1666 = vrcp.pop %v1664
        %v1667 = vmul.f32 %v1656, %v1665
        %v1668 = vmul.f32 %v1658, %v1666
        %vm1669 = vcmask 97280
        %v1671 = vsel %vm1669, %v1667, 0
        %v1674 = vsel %vm1304, %v1479, 0
        %1676 = vmatprep.subr.mxu0 0.0
        %1677 = vmatpush1.msra.mxu0 0.0
        %1678 = vmatprep.subr.mxu0 0.0
        %1679 = vmatpush1.msra.mxu0 0.0
        %1680 = vmatprep.subr.mxu0 0.0
        %1681 = vmatpush1.msra.mxu0 0.0
        %1682 = vmatprep.subr.mxu0 0.0
        %1683 = vmatpush1.msra.mxu0 0.0
        %1684 = vmatprep.subr.mxu0 0.0
        %1685 = vmatpush1.msra.mxu0 0.0
        %1686 = vmatprep.subr.mxu0 0.0
        %1687 = vmatpush1.msra.mxu0 0.0
        %1688 = vmatprep.subr.mxu0 0.0
        %1689 = vmatpush1.msra.mxu0 0.0
        %1690 = vmatprep.subr.mxu0 0.0
        %1691 = vmatpush1.msra.mxu0 0.0
        %1692 = vmatprep.subr.mxu0 0.0
        %1693 = vmatpush1.msra.mxu0 0.0
        %1694 = vmatprep.subr.mxu0 0.0
        %1695 = vmatpush1.msra.mxu0 0.0
        %1696 = vmatprep.subr.mxu0 0.0
        %1697 = vmatpush1.msra.mxu0 0.0
        %1698 = vmatprep.subr.mxu0 0.0
        %1699 = vmatpush1.msra.mxu0 0.0
        %1700 = vmatprep.subr.mxu0 0.0
        %1701 = vmatpush1.msra.mxu0 0.0
        %1702 = vmatprep.subr.mxu0 0.0
        %1703 = vmatpush1.msra.mxu0 0.0
        %1704 = vmatprep.subr.mxu0 0.0
        %1705 = vmatpush1.msra.mxu0 %v1674
        %1706 = vmatprep.subr.mxu0 0.0
        %1707 = vmatpush1.msra.mxu0 %v1478
        %1708 = vmatprep.subr.mxu0 0.0
        %1709 = vmatpush2.msra.mxu0 0.0
        %1710 = vmatprep.subr.mxu0 0.0
        %1711 = vmatpush2.msra.mxu0 0.0
        %1712 = vmatprep.subr.mxu0 0.0
        %1713 = vmatpush2.msra.mxu0 0.0
        %1714 = vmatprep.subr.mxu0 0.0
        %1715 = vmatpush2.msra.mxu0 0.0
        %1716 = vmatprep.subr.mxu0 0.0
        %1717 = vmatpush2.msra.mxu0 0.0
        %1718 = vmatprep.subr.mxu0 0.0
        %1719 = vmatpush2.msra.mxu0 0.0
        %1720 = vmatprep.subr.mxu0 0.0
        %1721 = vmatpush2.msra.mxu0 0.0
        %1722 = vmatprep.subr.mxu0 0.0
        %1723 = vmatpush2.msra.mxu0 0.0
        %1724 = vmatprep.subr.mxu0 0.0
        %1725 = vmatpush2.msra.mxu0 0.0
        %1726 = vmatprep.subr.mxu0 0.0
        %1727 = vmatpush2.msra.mxu0 0.0
        %1728 = vmatprep.subr.mxu0 0.0
        %1729 = vmatpush2.msra.mxu0 0.0
        %1730 = vmatprep.subr.mxu0 0.0
        %1731 = vmatpush2.msra.mxu0 0.0
        %1732 = vmatprep.subr.mxu0 0.0
        %1733 = vmatpush2.msra.mxu0 0.0
        %1734 = vmatprep.subr.mxu0 0.0
        %1735 = vmatpush2.msra.mxu0 0.0
        %1736 = vmatprep.subr.mxu0 0.0
        %1737 = vmatpush2.msra.mxu0 0.0
        %1738 = vmatprep.subr.mxu0 0.0
        %1739 = vmatpush2.msra.mxu0 0.0
        %1740 = vmatprep.mubr.f32.mxu0 0.0
        %1741 = vmatmul.mubr.f32.gmra.mxu0 %v1671
        %v1742 = vpop.f32.mrf.mxu0
        %v1743 = vadd.f32 0.0, %v1742
        %v1744 = vpop.f32.mrf.mxu0
        %1745 = vdwg.mxu0
        %v1747 = vsel %vm1669, %v1668, 0
        %v1750 = vsel %vm1304, %v1481, 0
        %1752 = vmatprep.subr.mxu0 0.0
        %1753 = vmatpush1.msra.mxu0 0.0
        %1754 = vmatprep.subr.mxu0 0.0
        %1755 = vmatpush1.msra.mxu0 0.0
        %1756 = vmatprep.subr.mxu0 0.0
        %1757 = vmatpush1.msra.mxu0 0.0
        %1758 = vmatprep.subr.mxu0 0.0
        %1759 = vmatpush1.msra.mxu0 0.0
        %1760 = vmatprep.subr.mxu0 0.0
        %1761 = vmatpush1.msra.mxu0 0.0
        %1762 = vmatprep.subr.mxu0 0.0
        %1763 = vmatpush1.msra.mxu0 0.0
        %1764 = vmatprep.subr.mxu0 0.0
        %1765 = vmatpush1.msra.mxu0 0.0
        %1766 = vmatprep.subr.mxu0 0.0
        %1767 = vmatpush1.msra.mxu0 0.0
        %1768 = vmatprep.subr.mxu0 0.0
        %1769 = vmatpush1.msra.mxu0 0.0
        %1770 = vmatprep.subr.mxu0 0.0
        %1771 = vmatpush1.msra.mxu0 0.0
        %1772 = vmatprep.subr.mxu0 0.0
        %1773 = vmatpush1.msra.mxu0 0.0
        %1774 = vmatprep.subr.mxu0 0.0
        %1775 = vmatpush1.msra.mxu0 0.0
        %1776 = vmatprep.subr.mxu0 0.0
        %1777 = vmatpush1.msra.mxu0 0.0
        %1778 = vmatprep.subr.mxu0 0.0
        %1779 = vmatpush1.msra.mxu0 0.0
        %1780 = vmatprep.subr.mxu0 0.0
        %1781 = vmatpush1.msra.mxu0 %v1750
        %1782 = vmatprep.subr.mxu0 0.0
        %1783 = vmatpush1.msra.mxu0 %v1480
        %1784 = vmatprep.subr.mxu0 0.0
        %1785 = vmatpush2.msra.mxu0 0.0
        %1786 = vmatprep.subr.mxu0 0.0
        %1787 = vmatpush2.msra.mxu0 0.0
        %1788 = vmatprep.subr.mxu0 0.0
        %1789 = vmatpush2.msra.mxu0 0.0
        %1790 = vmatprep.subr.mxu0 0.0
        %1791 = vmatpush2.msra.mxu0 0.0
        %1792 = vmatprep.subr.mxu0 0.0
        %1793 = vmatpush2.msra.mxu0 0.0
        %1794 = vmatprep.subr.mxu0 0.0
        %1795 = vmatpush2.msra.mxu0 0.0
        %1796 = vmatprep.subr.mxu0 0.0
        %1797 = vmatpush2.msra.mxu0 0.0
        %1798 = vmatprep.subr.mxu0 0.0
        %1799 = vmatpush2.msra.mxu0 0.0
        %1800 = vmatprep.subr.mxu0 0.0
        %1801 = vmatpush2.msra.mxu0 0.0
        %1802 = vmatprep.subr.mxu0 0.0
        %1803 = vmatpush2.msra.mxu0 0.0
        %1804 = vmatprep.subr.mxu0 0.0
        %1805 = vmatpush2.msra.mxu0 0.0
        %1806 = vmatprep.subr.mxu0 0.0
        %1807 = vmatpush2.msra.mxu0 0.0
        %1808 = vmatprep.subr.mxu0 0.0
        %1809 = vmatpush2.msra.mxu0 0.0
        %1810 = vmatprep.subr.mxu0 0.0
        %1811 = vmatpush2.msra.mxu0 0.0
        %1812 = vmatprep.subr.mxu0 0.0
        %1813 = vmatpush2.msra.mxu0 0.0
        %1814 = vmatprep.subr.mxu0 0.0
        %1815 = vmatpush2.msra.mxu0 0.0
        %1816 = vmatprep.mubr.f32.mxu0 0.0
        %1817 = vmatmul.mubr.f32.gmra.mxu0 %v1747
        %v1818 = vpop.f32.mrf.mxu0
        %v1819 = vadd.f32 0.0, %v1818
        %v1820 = vpop.f32.mrf.mxu0
        %1821 = vdwg.mxu0
        %1822 = vrot.lane.b32.xlu0 %v1485, 120
        %v1823 = vpop.permute.xlu0 %1822
        %1824 = vrot.lane.b32.xlu0 %v1362, 120
        %v1825 = vpop.permute.xlu0 %1824
        %1826 = vrot.lane.b32.xlu0 %v1363, 120
        %v1827 = vpop.permute.xlu0 %1826
        %v1828 = vsel %vm1487, %v1823, 0
        %v1830 = vsel %vm1487, %v1825, 0
        %v1832 = vsel %vm1487, %v1827, 0
        %1834 = vmatprep.subr.mxu0 0.0
        %1835 = vmatpush1.xpose.msra.mxu0 0.0
        %1836 = vmatprep.subr.mxu0 0.0
        %1837 = vmatpush1.xpose.msra.mxu0 0.0
        %1838 = vmatprep.subr.mxu0 0.0
        %1839 = vmatpush1.xpose.msra.mxu0 0.0
        %1840 = vmatprep.subr.mxu0 0.0
        %1841 = vmatpush1.xpose.msra.mxu0 0.0
        %1842 = vmatprep.subr.mxu0 0.0
        %1843 = vmatpush1.xpose.msra.mxu0 0.0
        %1844 = vmatprep.subr.mxu0 0.0
        %1845 = vmatpush1.xpose.msra.mxu0 0.0
        %1846 = vmatprep.subr.mxu0 0.0
        %1847 = vmatpush1.xpose.msra.mxu0 0.0
        %1848 = vmatprep.subr.mxu0 0.0
        %1849 = vmatpush1.xpose.msra.mxu0 0.0
        %1850 = vmatprep.subr.mxu0 0.0
        %1851 = vmatpush1.xpose.msra.mxu0 0.0
        %1852 = vmatprep.subr.mxu0 0.0
        %1853 = vmatpush1.xpose.msra.mxu0 0.0
        %1854 = vmatprep.subr.mxu0 0.0
        %1855 = vmatpush1.xpose.msra.mxu0 0.0
        %1856 = vmatprep.subr.mxu0 0.0
        %1857 = vmatpush1.xpose.msra.mxu0 0.0
        %1858 = vmatprep.subr.mxu0 0.0
        %1859 = vmatpush1.xpose.msra.mxu0 0.0
        %1860 = vmatprep.subr.mxu0 0.0
        %1861 = vmatpush1.xpose.msra.mxu0 0.0
        %1862 = vmatprep.subr.mxu0 0.0
        %1863 = vmatpush1.xpose.msra.mxu0 %v1832
        %1864 = vmatprep.subr.mxu0 0.0
        %1865 = vmatpush1.xpose.msra.mxu0 %v1830
        %1866 = vmatprep.subr.mxu0 0.0
        %1867 = vmatpush2.xpose.msra.mxu0 0.0
        %1868 = vmatprep.subr.mxu0 0.0
        %1869 = vmatpush2.xpose.msra.mxu0 0.0
        %1870 = vmatprep.subr.mxu0 0.0
        %1871 = vmatpush2.xpose.msra.mxu0 0.0
        %1872 = vmatprep.subr.mxu0 0.0
        %1873 = vmatpush2.xpose.msra.mxu0 0.0
        %1874 = vmatprep.subr.mxu0 0.0
        %1875 = vmatpush2.xpose.msra.mxu0 0.0
        %1876 = vmatprep.subr.mxu0 0.0
        %1877 = vmatpush2.xpose.msra.mxu0 0.0
        %1878 = vmatprep.subr.mxu0 0.0
        %1879 = vmatpush2.xpose.msra.mxu0 0.0
        %1880 = vmatprep.subr.mxu0 0.0
        %1881 = vmatpush2.xpose.msra.mxu0 0.0
        %1882 = vmatprep.subr.mxu0 0.0
        %1883 = vmatpush2.xpose.msra.mxu0 0.0
        %1884 = vmatprep.subr.mxu0 0.0
        %1885 = vmatpush2.xpose.msra.mxu0 0.0
        %1886 = vmatprep.subr.mxu0 0.0
        %1887 = vmatpush2.xpose.msra.mxu0 0.0
        %1888 = vmatprep.subr.mxu0 0.0
        %1889 = vmatpush2.xpose.msra.mxu0 0.0
        %1890 = vmatprep.subr.mxu0 0.0
        %1891 = vmatpush2.xpose.msra.mxu0 0.0
        %1892 = vmatprep.subr.mxu0 0.0
        %1893 = vmatpush2.xpose.msra.mxu0 0.0
        %1894 = vmatprep.subr.mxu0 0.0
        %1895 = vmatpush2.xpose.msra.mxu0 0.0
        %1896 = vmatprep.subr.mxu0 0.0
        %1897 = vmatpush2.xpose.msra.mxu0 0.0
        %1898 = vmatprep.mubr.f32.mxu0 0.0
        %1899 = vmatmul.mubr.f32.gmra.mxu0 %v1828
        %v1900 = vpop.f32.mrf.mxu0
        %v1901 = vadd.f32 0.0, %v1900
        %v1902 = vpop.f32.mrf.mxu0
        %1903 = vdwg.mxu0
        %1904 = vrot.lane.b32.xlu0 %v1486, 120
        %v1905 = vpop.permute.xlu0 %1904
        %1906 = vrot.lane.b32.xlu0 %v1364, 120
        %v1907 = vpop.permute.xlu0 %1906
        %1908 = vrot.lane.b32.xlu0 %v1365, 120
        %v1909 = vpop.permute.xlu0 %1908
        %v1910 = vsel %vm1487, %v1905, 0
        %v1912 = vsel %vm1487, %v1907, 0
        %v1914 = vsel %vm1487, %v1909, 0
        %1916 = vmatprep.subr.mxu0 0.0
        %1917 = vmatpush1.xpose.msra.mxu0 0.0
        %1918 = vmatprep.subr.mxu0 0.0
        %1919 = vmatpush1.xpose.msra.mxu0 0.0
        %1920 = vmatprep.subr.mxu0 0.0
        %1921 = vmatpush1.xpose.msra.mxu0 0.0
        %1922 = vmatprep.subr.mxu0 0.0
        %1923 = vmatpush1.xpose.msra.mxu0 0.0
        %1924 = vmatprep.subr.mxu0 0.0
        %1925 = vmatpush1.xpose.msra.mxu0 0.0
        %1926 = vmatprep.subr.mxu0 0.0
        %1927 = vmatpush1.xpose.msra.mxu0 0.0
        %1928 = vmatprep.subr.mxu0 0.0
        %1929 = vmatpush1.xpose.msra.mxu0 0.0
        %1930 = vmatprep.subr.mxu0 0.0
        %1931 = vmatpush1.xpose.msra.mxu0 0.0
        %1932 = vmatprep.subr.mxu0 0.0
        %1933 = vmatpush1.xpose.msra.mxu0 0.0
        %1934 = vmatprep.subr.mxu0 0.0
        %1935 = vmatpush1.xpose.msra.mxu0 0.0
        %1936 = vmatprep.subr.mxu0 0.0
        %1937 = vmatpush1.xpose.msra.mxu0 0.0
        %1938 = vmatprep.subr.mxu0 0.0
        %1939 = vmatpush1.xpose.msra.mxu0 0.0
        %1940 = vmatprep.subr.mxu0 0.0
        %1941 = vmatpush1.xpose.msra.mxu0 0.0
        %1942 = vmatprep.subr.mxu0 0.0
        %1943 = vmatpush1.xpose.msra.mxu0 0.0
        %1944 = vmatprep.subr.mxu0 0.0
        %1945 = vmatpush1.xpose.msra.mxu0 %v1914
        %1946 = vmatprep.subr.mxu0 0.0
        %1947 = vmatpush1.xpose.msra.mxu0 %v1912
        %1948 = vmatprep.subr.mxu0 0.0
        %1949 = vmatpush2.xpose.msra.mxu0 0.0
        %1950 = vmatprep.subr.mxu0 0.0
        %1951 = vmatpush2.xpose.msra.mxu0 0.0
        %1952 = vmatprep.subr.mxu0 0.0
        %1953 = vmatpush2.xpose.msra.mxu0 0.0
        %1954 = vmatprep.subr.mxu0 0.0
        %1955 = vmatpush2.xpose.msra.mxu0 0.0
        %1956 = vmatprep.subr.mxu0 0.0
        %1957 = vmatpush2.xpose.msra.mxu0 0.0
        %1958 = vmatprep.subr.mxu0 0.0
        %1959 = vmatpush2.xpose.msra.mxu0 0.0
        %1960 = vmatprep.subr.mxu0 0.0
        %1961 = vmatpush2.xpose.msra.mxu0 0.0
        %1962 = vmatprep.subr.mxu0 0.0
        %1963 = vmatpush2.xpose.msra.mxu0 0.0
        %1964 = vmatprep.subr.mxu0 0.0
        %1965 = vmatpush2.xpose.msra.mxu0 0.0
        %1966 = vmatprep.subr.mxu0 0.0
        %1967 = vmatpush2.xpose.msra.mxu0 0.0
        %1968 = vmatprep.subr.mxu0 0.0
        %1969 = vmatpush2.xpose.msra.mxu0 0.0
        %1970 = vmatprep.subr.mxu0 0.0
        %1971 = vmatpush2.xpose.msra.mxu0 0.0
        %1972 = vmatprep.subr.mxu0 0.0
        %1973 = vmatpush2.xpose.msra.mxu0 0.0
        %1974 = vmatprep.subr.mxu0 0.0
        %1975 = vmatpush2.xpose.msra.mxu0 0.0
        %1976 = vmatprep.subr.mxu0 0.0
        %1977 = vmatpush2.xpose.msra.mxu0 0.0
        %1978 = vmatprep.subr.mxu0 0.0
        %1979 = vmatpush2.xpose.msra.mxu0 0.0
        %1980 = vmatprep.mubr.f32.mxu0 0.0
        %1981 = vmatmul.mubr.f32.gmra.mxu0 %v1910
        %v1982 = vpop.f32.mrf.mxu0
        %v1983 = vadd.f32 0.0, %v1982
        %v1984 = vpop.f32.mrf.mxu0
        %1985 = vdwg.mxu0
        %v1986 = vsel %vm1646, %v1901, -inf
        %1987 = vmax.xlane.f32.xlu0 %v1986
        %v1988 = vpop.xlane.xlu0 %1987
        %v1989 = vsel %vm1646, %v1983, -inf
        %1990 = vmax.xlane.f32.xlu0 %v1989
        %v1991 = vpop.xlane.xlu0 %1990
        %v1992 = vsub.f32 %v1901, %v1988
        %v1993 = vsub.f32 %v1983, %v1991
        %v1994 = vmul.f32 %v1992, 1.442695
        %v1995 = vpow.pop %v1994
        %v1996 = vmul.f32 %v1993, 1.442695
        %v1997 = vpow.pop %v1996
        %v1998 = vsel %vm1646, %v1995, 0.0
        %1999 = vadd.xlane.f32.xlu0 %v1998
        %v2000 = vpop.xlane.xlu0 %1999
        %v2001 = vsel %vm1646, %v1997, 0.0
        %2002 = vadd.xlane.f32.xlu0 %v2001
        %v2003 = vpop.xlane.xlu0 %2002
        %v2004 = vrcp.pop %v2000
        %v2005 = vrcp.pop %v2003
        %v2006 = vmul.f32 %v1995, %v2004
        %v2007 = vmul.f32 %v1997, %v2005
        %2009 = vrot.lane.b32.xlu0 %v1478, 120
        %v2010 = vpop.permute.xlu0 %2009
        %2011 = vrot.lane.b32.xlu0 %v1479, 120
        %v2012 = vpop.permute.xlu0 %2011
        %v2015 = vsel %vm1669, %v2006, 0
        %v2017 = vsel %vm1304, %v2012, 0
        %2019 = vmatprep.subr.mxu0 0.0
        %2020 = vmatpush1.msra.mxu0 0.0
        %2021 = vmatprep.subr.mxu0 0.0
        %2022 = vmatpush1.msra.mxu0 0.0
        %2023 = vmatprep.subr.mxu0 0.0
        %2024 = vmatpush1.msra.mxu0 0.0
        %2025 = vmatprep.subr.mxu0 0.0
        %2026 = vmatpush1.msra.mxu0 0.0
        %2027 = vmatprep.subr.mxu0 0.0
        %2028 = vmatpush1.msra.mxu0 0.0
        %2029 = vmatprep.subr.mxu0 0.0
        %2030 = vmatpush1.msra.mxu0 0.0
        %2031 = vmatprep.subr.mxu0 0.0
        %2032 = vmatpush1.msra.mxu0 0.0
        %2033 = vmatprep.subr.mxu0 0.0
        %2034 = vmatpush1.msra.mxu0 0.0
        %2035 = vmatprep.subr.mxu0 0.0
        %2036 = vmatpush1.msra.mxu0 0.0
        %2037 = vmatprep.subr.mxu0 0.0
        %2038 = vmatpush1.msra.mxu0 0.0
        %2039 = vmatprep.subr.mxu0 0.0
        %2040 = vmatpush1.msra.mxu0 0.0
        %2041 = vmatprep.subr.mxu0 0.0
        %2042 = vmatpush1.msra.mxu0 0.0
        %2043 = vmatprep.subr.mxu0 0.0
        %2044 = vmatpush1.msra.mxu0 0.0
        %2045 = vmatprep.subr.mxu0 0.0
        %2046 = vmatpush1.msra.mxu0 0.0
        %2047 = vmatprep.subr.mxu0 0.0
        %2048 = vmatpush1.msra.mxu0 %v2017
        %2049 = vmatprep.subr.mxu0 0.0
        %2050 = vmatpush1.msra.mxu0 %v2010
        %2051 = vmatprep.subr.mxu0 0.0
        %2052 = vmatpush2.msra.mxu0 0.0
        %2053 = vmatprep.subr.mxu0 0.0
        %2054 = vmatpush2.msra.mxu0 0.0
        %2055 = vmatprep.subr.mxu0 0.0
        %2056 = vmatpush2.msra.mxu0 0.0
        %2057 = vmatprep.subr.mxu0 0.0
        %2058 = vmatpush2.msra.mxu0 0.0
        %2059 = vmatprep.subr.mxu0 0.0
        %2060 = vmatpush2.msra.mxu0 0.0
        %2061 = vmatprep.subr.mxu0 0.0
        %2062 = vmatpush2.msra.mxu0 0.0
        %2063 = vmatprep.subr.mxu0 0.0
        %2064 = vmatpush2.msra.mxu0 0.0
        %2065 = vmatprep.subr.mxu0 0.0
        %2066 = vmatpush2.msra.mxu0 0.0
        %2067 = vmatprep.subr.mxu0 0.0
        %2068 = vmatpush2.msra.mxu0 0.0
        %2069 = vmatprep.subr.mxu0 0.0
        %2070 = vmatpush2.msra.mxu0 0.0
        %2071 = vmatprep.subr.mxu0 0.0
        %2072 = vmatpush2.msra.mxu0 0.0
        %2073 = vmatprep.subr.mxu0 0.0
        %2074 = vmatpush2.msra.mxu0 0.0
        %2075 = vmatprep.subr.mxu0 0.0
        %2076 = vmatpush2.msra.mxu0 0.0
        %2077 = vmatprep.subr.mxu0 0.0
        %2078 = vmatpush2.msra.mxu0 0.0
        %2079 = vmatprep.subr.mxu0 0.0
        %2080 = vmatpush2.msra.mxu0 0.0
        %2081 = vmatprep.subr.mxu0 0.0
        %2082 = vmatpush2.msra.mxu0 0.0
        %2083 = vmatprep.mubr.f32.mxu0 0.0
        %2084 = vmatmul.mubr.f32.gmra.mxu0 %v2015
        %v2085 = vpop.f32.mrf.mxu0
        %v2086 = vadd.f32 0.0, %v2085
        %v2087 = vpop.f32.mrf.mxu0
        %2088 = vdwg.mxu0
        %2090 = vrot.lane.b32.xlu0 %v1480, 120
        %v2091 = vpop.permute.xlu0 %2090
        %2092 = vrot.lane.b32.xlu0 %v1481, 120
        %v2093 = vpop.permute.xlu0 %2092
        %v2096 = vsel %vm1669, %v2007, 0
        %v2098 = vsel %vm1304, %v2093, 0
        %2100 = vmatprep.subr.mxu0 0.0
        %2101 = vmatpush1.msra.mxu0 0.0
        %2102 = vmatprep.subr.mxu0 0.0
        %2103 = vmatpush1.msra.mxu0 0.0
        %2104 = vmatprep.subr.mxu0 0.0
        %2105 = vmatpush1.msra.mxu0 0.0
        %2106 = vmatprep.subr.mxu0 0.0
        %2107 = vmatpush1.msra.mxu0 0.0
        %2108 = vmatprep.subr.mxu0 0.0
        %2109 = vmatpush1.msra.mxu0 0.0
        %2110 = vmatprep.subr.mxu0 0.0
        %2111 = vmatpush1.msra.mxu0 0.0
        %2112 = vmatprep.subr.mxu0 0.0
        %2113 = vmatpush1.msra.mxu0 0.0
        %2114 = vmatprep.subr.mxu0 0.0
        %2115 = vmatpush1.msra.mxu0 0.0
        %2116 = vmatprep.subr.mxu0 0.0
        %2117 = vmatpush1.msra.mxu0 0.0
        %2118 = vmatprep.subr.mxu0 0.0
        %2119 = vmatpush1.msra.mxu0 0.0
        %2120 = vmatprep.subr.mxu0 0.0
        %2121 = vmatpush1.msra.mxu0 0.0
        %2122 = vmatprep.subr.mxu0 0.0
        %2123 = vmatpush1.msra.mxu0 0.0
        %2124 = vmatprep.subr.mxu0 0.0
        %2125 = vmatpush1.msra.mxu0 0.0
        %2126 = vmatprep.subr.mxu0 0.0
        %2127 = vmatpush1.msra.mxu0 0.0
        %2128 = vmatprep.subr.mxu0 0.0
        %2129 = vmatpush1.msra.mxu0 %v2098
        %2130 = vmatprep.subr.mxu0 0.0
        %2131 = vmatpush1.msra.mxu0 %v2091
        %2132 = vmatprep.subr.mxu0 0.0
        %2133 = vmatpush2.msra.mxu0 0.0
        %2134 = vmatprep.subr.mxu0 0.0
        %2135 = vmatpush2.msra.mxu0 0.0
        %2136 = vmatprep.subr.mxu0 0.0
        %2137 = vmatpush2.msra.mxu0 0.0
        %2138 = vmatprep.subr.mxu0 0.0
        %2139 = vmatpush2.msra.mxu0 0.0
        %2140 = vmatprep.subr.mxu0 0.0
        %2141 = vmatpush2.msra.mxu0 0.0
        %2142 = vmatprep.subr.mxu0 0.0
        %2143 = vmatpush2.msra.mxu0 0.0
        %2144 = vmatprep.subr.mxu0 0.0
        %2145 = vmatpush2.msra.mxu0 0.0
        %2146 = vmatprep.subr.mxu0 0.0
        %2147 = vmatpush2.msra.mxu0 0.0
        %2148 = vmatprep.subr.mxu0 0.0
        %2149 = vmatpush2.msra.mxu0 0.0
        %2150 = vmatprep.subr.mxu0 0.0
        %2151 = vmatpush2.msra.mxu0 0.0
        %2152 = vmatprep.subr.mxu0 0.0
        %2153 = vmatpush2.msra.mxu0 0.0
        %2154 = vmatprep.subr.mxu0 0.0
        %2155 = vmatpush2.msra.mxu0 0.0
        %2156 = vmatprep.subr.mxu0 0.0
        %2157 = vmatpush2.msra.mxu0 0.0
        %2158 = vmatprep.subr.mxu0 0.0
        %2159 = vmatpush2.msra.mxu0 0.0
        %2160 = vmatprep.subr.mxu0 0.0
        %2161 = vmatpush2.msra.mxu0 0.0
        %2162 = vmatprep.subr.mxu0 0.0
        %2163 = vmatpush2.msra.mxu0 0.0
        %2164 = vmatprep.mubr.f32.mxu0 0.0
        %2165 = vmatmul.mubr.f32.gmra.mxu0 %v2096
        %v2166 = vpop.f32.mrf.mxu0
        %v2167 = vadd.f32 0.0, %v2166
        %v2168 = vpop.f32.mrf.mxu0
        %2169 = vdwg.mxu0
        %2170 = vrot.lane.b32.xlu0 %v1485, 112
        %v2171 = vpop.permute.xlu0 %2170
        %2172 = vrot.lane.b32.xlu0 %v1362, 112
        %v2173 = vpop.permute.xlu0 %2172
        %2174 = vrot.lane.b32.xlu0 %v1363, 112
        %v2175 = vpop.permute.xlu0 %2174
        %v2176 = vsel %vm1487, %v2171, 0
        %v2178 = vsel %vm1487, %v2173, 0
        %v2180 = vsel %vm1487, %v2175, 0
        %2182 = vmatprep.subr.mxu0 0.0
        %2183 = vmatpush1.xpose.msra.mxu0 0.0
        %2184 = vmatprep.subr.mxu0 0.0
        %2185 = vmatpush1.xpose.msra.mxu0 0.0
        %2186 = vmatprep.subr.mxu0 0.0
        %2187 = vmatpush1.xpose.msra.mxu0 0.0
        %2188 = vmatprep.subr.mxu0 0.0
        %2189 = vmatpush1.xpose.msra.mxu0 0.0
        %2190 = vmatprep.subr.mxu0 0.0
        %2191 = vmatpush1.xpose.msra.mxu0 0.0
        %2192 = vmatprep.subr.mxu0 0.0
        %2193 = vmatpush1.xpose.msra.mxu0 0.0
        %2194 = vmatprep.subr.mxu0 0.0
        %2195 = vmatpush1.xpose.msra.mxu0 0.0
        %2196 = vmatprep.subr.mxu0 0.0
        %2197 = vmatpush1.xpose.msra.mxu0 0.0
        %2198 = vmatprep.subr.mxu0 0.0
        %2199 = vmatpush1.xpose.msra.mxu0 0.0
        %2200 = vmatprep.subr.mxu0 0.0
        %2201 = vmatpush1.xpose.msra.mxu0 0.0
        %2202 = vmatprep.subr.mxu0 0.0
        %2203 = vmatpush1.xpose.msra.mxu0 0.0
        %2204 = vmatprep.subr.mxu0 0.0
        %2205 = vmatpush1.xpose.msra.mxu0 0.0
        %2206 = vmatprep.subr.mxu0 0.0
        %2207 = vmatpush1.xpose.msra.mxu0 0.0
        %2208 = vmatprep.subr.mxu0 0.0
        %2209 = vmatpush1.xpose.msra.mxu0 0.0
        %2210 = vmatprep.subr.mxu0 0.0
        %2211 = vmatpush1.xpose.msra.mxu0 %v2180
        %2212 = vmatprep.subr.mxu0 0.0
        %2213 = vmatpush1.xpose.msra.mxu0 %v2178
        %2214 = vmatprep.subr.mxu0 0.0
        %2215 = vmatpush2.xpose.msra.mxu0 0.0
        %2216 = vmatprep.subr.mxu0 0.0
        %2217 = vmatpush2.xpose.msra.mxu0 0.0
        %2218 = vmatprep.subr.mxu0 0.0
        %2219 = vmatpush2.xpose.msra.mxu0 0.0
        %2220 = vmatprep.subr.mxu0 0.0
        %2221 = vmatpush2.xpose.msra.mxu0 0.0
        %2222 = vmatprep.subr.mxu0 0.0
        %2223 = vmatpush2.xpose.msra.mxu0 0.0
        %2224 = vmatprep.subr.mxu0 0.0
        %2225 = vmatpush2.xpose.msra.mxu0 0.0
        %2226 = vmatprep.subr.mxu0 0.0
        %2227 = vmatpush2.xpose.msra.mxu0 0.0
        %2228 = vmatprep.subr.mxu0 0.0
        %2229 = vmatpush2.xpose.msra.mxu0 0.0
        %2230 = vmatprep.subr.mxu0 0.0
        %2231 = vmatpush2.xpose.msra.mxu0 0.0
        %2232 = vmatprep.subr.mxu0 0.0
        %2233 = vmatpush2.xpose.msra.mxu0 0.0
        %2234 = vmatprep.subr.mxu0 0.0
        %2235 = vmatpush2.xpose.msra.mxu0 0.0
        %2236 = vmatprep.subr.mxu0 0.0
        %2237 = vmatpush2.xpose.msra.mxu0 0.0
        %2238 = vmatprep.subr.mxu0 0.0
        %2239 = vmatpush2.xpose.msra.mxu0 0.0
        %2240 = vmatprep.subr.mxu0 0.0
        %2241 = vmatpush2.xpose.msra.mxu0 0.0
        %2242 = vmatprep.subr.mxu0 0.0
        %2243 = vmatpush2.xpose.msra.mxu0 0.0
        %2244 = vmatprep.subr.mxu0 0.0
        %2245 = vmatpush2.xpose.msra.mxu0 0.0
        %2246 = vmatprep.mubr.f32.mxu0 0.0
        %2247 = vmatmul.mubr.f32.gmra.mxu0 %v2176
        %v2248 = vpop.f32.mrf.mxu0
        %v2249 = vadd.f32 0.0, %v2248
        %v2250 = vpop.f32.mrf.mxu0
        %2251 = vdwg.mxu0
        %2252 = vrot.lane.b32.xlu0 %v1486, 112
        %v2253 = vpop.permute.xlu0 %2252
        %2254 = vrot.lane.b32.xlu0 %v1364, 112
        %v2255 = vpop.permute.xlu0 %2254
        %2256 = vrot.lane.b32.xlu0 %v1365, 112
        %v2257 = vpop.permute.xlu0 %2256
        %v2258 = vsel %vm1487, %v2253, 0
        %v2260 = vsel %vm1487, %v2255, 0
        %v2262 = vsel %vm1487, %v2257, 0
        %2264 = vmatprep.subr.mxu0 0.0
        %2265 = vmatpush1.xpose.msra.mxu0 0.0
        %2266 = vmatprep.subr.mxu0 0.0
        %2267 = vmatpush1.xpose.msra.mxu0 0.0
        %2268 = vmatprep.subr.mxu0 0.0
        %2269 = vmatpush1.xpose.msra.mxu0 0.0
        %2270 = vmatprep.subr.mxu0 0.0
        %2271 = vmatpush1.xpose.msra.mxu0 0.0
        %2272 = vmatprep.subr.mxu0 0.0
        %2273 = vmatpush1.xpose.msra.mxu0 0.0
        %2274 = vmatprep.subr.mxu0 0.0
        %2275 = vmatpush1.xpose.msra.mxu0 0.0
        %2276 = vmatprep.subr.mxu0 0.0
        %2277 = vmatpush1.xpose.msra.mxu0 0.0
        %2278 = vmatprep.subr.mxu0 0.0
        %2279 = vmatpush1.xpose.msra.mxu0 0.0
        %2280 = vmatprep.subr.mxu0 0.0
        %2281 = vmatpush1.xpose.msra.mxu0 0.0
        %2282 = vmatprep.subr.mxu0 0.0
        %2283 = vmatpush1.xpose.msra.mxu0 0.0
        %2284 = vmatprep.subr.mxu0 0.0
        %2285 = vmatpush1.xpose.msra.mxu0 0.0
        %2286 = vmatprep.subr.mxu0 0.0
        %2287 = vmatpush1.xpose.msra.mxu0 0.0
        %2288 = vmatprep.subr.mxu0 0.0
        %2289 = vmatpush1.xpose.msra.mxu0 0.0
        %2290 = vmatprep.subr.mxu0 0.0
        %2291 = vmatpush1.xpose.msra.mxu0 0.0
        %2292 = vmatprep.subr.mxu0 0.0
        %2293 = vmatpush1.xpose.msra.mxu0 %v2262
        %2294 = vmatprep.subr.mxu0 0.0
        %2295 = vmatpush1.xpose.msra.mxu0 %v2260
        %2296 = vmatprep.subr.mxu0 0.0
        %2297 = vmatpush2.xpose.msra.mxu0 0.0
        %2298 = vmatprep.subr.mxu0 0.0
        %2299 = vmatpush2.xpose.msra.mxu0 0.0
        %2300 = vmatprep.subr.mxu0 0.0
        %2301 = vmatpush2.xpose.msra.mxu0 0.0
        %2302 = vmatprep.subr.mxu0 0.0
        %2303 = vmatpush2.xpose.msra.mxu0 0.0
        %2304 = vmatprep.subr.mxu0 0.0
        %2305 = vmatpush2.xpose.msra.mxu0 0.0
        %2306 = vmatprep.subr.mxu0 0.0
        %2307 = vmatpush2.xpose.msra.mxu0 0.0
        %2308 = vmatprep.subr.mxu0 0.0
        %2309 = vmatpush2.xpose.msra.mxu0 0.0
        %2310 = vmatprep.subr.mxu0 0.0
        %2311 = vmatpush2.xpose.msra.mxu0 0.0
        %2312 = vmatprep.subr.mxu0 0.0
        %2313 = vmatpush2.xpose.msra.mxu0 0.0
        %2314 = vmatprep.subr.mxu0 0.0
        %2315 = vmatpush2.xpose.msra.mxu0 0.0
        %2316 = vmatprep.subr.mxu0 0.0
        %2317 = vmatpush2.xpose.msra.mxu0 0.0
        %2318 = vmatprep.subr.mxu0 0.0
        %2319 = vmatpush2.xpose.msra.mxu0 0.0
        %2320 = vmatprep.subr.mxu0 0.0
        %2321 = vmatpush2.xpose.msra.mxu0 0.0
        %2322 = vmatprep.subr.mxu0 0.0
        %2323 = vmatpush2.xpose.msra.mxu0 0.0
        %2324 = vmatprep.subr.mxu0 0.0
        %2325 = vmatpush2.xpose.msra.mxu0 0.0
        %2326 = vmatprep.subr.mxu0 0.0
        %2327 = vmatpush2.xpose.msra.mxu0 0.0
        %2328 = vmatprep.mubr.f32.mxu0 0.0
        %2329 = vmatmul.mubr.f32.gmra.mxu0 %v2258
        %v2330 = vpop.f32.mrf.mxu0
        %v2331 = vadd.f32 0.0, %v2330
        %v2332 = vpop.f32.mrf.mxu0
        %2333 = vdwg.mxu0
        %v2334 = vsel %vm1646, %v2249, -inf
        %2335 = vmax.xlane.f32.xlu0 %v2334
        %v2336 = vpop.xlane.xlu0 %2335
        %v2337 = vsel %vm1646, %v2331, -inf
        %2338 = vmax.xlane.f32.xlu0 %v2337
        %v2339 = vpop.xlane.xlu0 %2338
        %v2340 = vsub.f32 %v2249, %v2336
        %v2341 = vsub.f32 %v2331, %v2339
        %v2342 = vmul.f32 %v2340, 1.442695
        %v2343 = vpow.pop %v2342
        %v2344 = vmul.f32 %v2341, 1.442695
        %v2345 = vpow.pop %v2344
        %v2346 = vsel %vm1646, %v2343, 0.0
        %2347 = vadd.xlane.f32.xlu0 %v2346
        %v2348 = vpop.xlane.xlu0 %2347
        %v2349 = vsel %vm1646, %v2345, 0.0
        %2350 = vadd.xlane.f32.xlu0 %v2349
        %v2351 = vpop.xlane.xlu0 %2350
        %v2352 = vrcp.pop %v2348
        %v2353 = vrcp.pop %v2351
        %v2354 = vmul.f32 %v2343, %v2352
        %v2355 = vmul.f32 %v2345, %v2353
        %2356 = vrot.lane.b32.xlu0 %v1478, 112
        %v2357 = vpop.permute.xlu0 %2356
        %2358 = vrot.lane.b32.xlu0 %v1479, 112
        %v2359 = vpop.permute.xlu0 %2358
        %v2362 = vsel %vm1669, %v2354, 0
        %v2364 = vsel %vm1304, %v2359, 0
        %2366 = vmatprep.subr.mxu0 0.0
        %2367 = vmatpush1.msra.mxu0 0.0
        %2368 = vmatprep.subr.mxu0 0.0
        %2369 = vmatpush1.msra.mxu0 0.0
        %2370 = vmatprep.subr.mxu0 0.0
        %2371 = vmatpush1.msra.mxu0 0.0
        %2372 = vmatprep.subr.mxu0 0.0
        %2373 = vmatpush1.msra.mxu0 0.0
        %2374 = vmatprep.subr.mxu0 0.0
        %2375 = vmatpush1.msra.mxu0 0.0
        %2376 = vmatprep.subr.mxu0 0.0
        %2377 = vmatpush1.msra.mxu0 0.0
        %2378 = vmatprep.subr.mxu0 0.0
        %2379 = vmatpush1.msra.mxu0 0.0
        %2380 = vmatprep.subr.mxu0 0.0
        %2381 = vmatpush1.msra.mxu0 0.0
        %2382 = vmatprep.subr.mxu0 0.0
        %2383 = vmatpush1.msra.mxu0 0.0
        %2384 = vmatprep.subr.mxu0 0.0
        %2385 = vmatpush1.msra.mxu0 0.0
        %2386 = vmatprep.subr.mxu0 0.0
        %2387 = vmatpush1.msra.mxu0 0.0
        %2388 = vmatprep.subr.mxu0 0.0
        %2389 = vmatpush1.msra.mxu0 0.0
        %2390 = vmatprep.subr.mxu0 0.0
        %2391 = vmatpush1.msra.mxu0 0.0
        %2392 = vmatprep.subr.mxu0 0.0
        %2393 = vmatpush1.msra.mxu0 0.0
        %2394 = vmatprep.subr.mxu0 0.0
        %2395 = vmatpush1.msra.mxu0 %v2364
        %2396 = vmatprep.subr.mxu0 0.0
        %2397 = vmatpush1.msra.mxu0 %v2357
        %2398 = vmatprep.subr.mxu0 0.0
        %2399 = vmatpush2.msra.mxu0 0.0
        %2400 = vmatprep.subr.mxu0 0.0
        %2401 = vmatpush2.msra.mxu0 0.0
        %2402 = vmatprep.subr.mxu0 0.0
        %2403 = vmatpush2.msra.mxu0 0.0
        %2404 = vmatprep.subr.mxu0 0.0
        %2405 = vmatpush2.msra.mxu0 0.0
        %2406 = vmatprep.subr.mxu0 0.0
        %2407 = vmatpush2.msra.mxu0 0.0
        %2408 = vmatprep.subr.mxu0 0.0
        %2409 = vmatpush2.msra.mxu0 0.0
        %2410 = vmatprep.subr.mxu0 0.0
        %2411 = vmatpush2.msra.mxu0 0.0
        %2412 = vmatprep.subr.mxu0 0.0
        %2413 = vmatpush2.msra.mxu0 0.0
        %2414 = vmatprep.subr.mxu0 0.0
        %2415 = vmatpush2.msra.mxu0 0.0
        %2416 = vmatprep.subr.mxu0 0.0
        %2417 = vmatpush2.msra.mxu0 0.0
        %2418 = vmatprep.subr.mxu0 0.0
        %2419 = vmatpush2.msra.mxu0 0.0
        %2420 = vmatprep.subr.mxu0 0.0
        %2421 = vmatpush2.msra.mxu0 0.0
        %2422 = vmatprep.subr.mxu0 0.0
        %2423 = vmatpush2.msra.mxu0 0.0
        %2424 = vmatprep.subr.mxu0 0.0
        %2425 = vmatpush2.msra.mxu0 0.0
        %2426 = vmatprep.subr.mxu0 0.0
        %2427 = vmatpush2.msra.mxu0 0.0
        %2428 = vmatprep.subr.mxu0 0.0
        %2429 = vmatpush2.msra.mxu0 0.0
        %2430 = vmatprep.mubr.f32.mxu0 0.0
        %2431 = vmatmul.mubr.f32.gmra.mxu0 %v2362
        %v2432 = vpop.f32.mrf.mxu0
        %v2433 = vadd.f32 0.0, %v2432
        %v2434 = vpop.f32.mrf.mxu0
        %2435 = vdwg.mxu0
        %2436 = vrot.lane.b32.xlu0 %v1480, 112
        %v2437 = vpop.permute.xlu0 %2436
        %2438 = vrot.lane.b32.xlu0 %v1481, 112
        %v2439 = vpop.permute.xlu0 %2438
        %v2442 = vsel %vm1669, %v2355, 0
        %v2444 = vsel %vm1304, %v2439, 0
        %2446 = vmatprep.subr.mxu0 0.0
        %2447 = vmatpush1.msra.mxu0 0.0
        %2448 = vmatprep.subr.mxu0 0.0
        %2449 = vmatpush1.msra.mxu0 0.0
        %2450 = vmatprep.subr.mxu0 0.0
        %2451 = vmatpush1.msra.mxu0 0.0
        %2452 = vmatprep.subr.mxu0 0.0
        %2453 = vmatpush1.msra.mxu0 0.0
        %2454 = vmatprep.subr.mxu0 0.0
        %2455 = vmatpush1.msra.mxu0 0.0
        %2456 = vmatprep.subr.mxu0 0.0
        %2457 = vmatpush1.msra.mxu0 0.0
        %2458 = vmatprep.subr.mxu0 0.0
        %2459 = vmatpush1.msra.mxu0 0.0
        %2460 = vmatprep.subr.mxu0 0.0
        %2461 = vmatpush1.msra.mxu0 0.0
        %2462 = vmatprep.subr.mxu0 0.0
        %2463 = vmatpush1.msra.mxu0 0.0
        %2464 = vmatprep.subr.mxu0 0.0
        %2465 = vmatpush1.msra.mxu0 0.0
        %2466 = vmatprep.subr.mxu0 0.0
        %2467 = vmatpush1.msra.mxu0 0.0
        %2468 = vmatprep.subr.mxu0 0.0
        %2469 = vmatpush1.msra.mxu0 0.0
        %2470 = vmatprep.subr.mxu0 0.0
        %2471 = vmatpush1.msra.mxu0 0.0
        %2472 = vmatprep.subr.mxu0 0.0
        %2473 = vmatpush1.msra.mxu0 0.0
        %2474 = vmatprep.subr.mxu0 0.0
        %2475 = vmatpush1.msra.mxu0 %v2444
        %2476 = vmatprep.subr.mxu0 0.0
        %2477 = vmatpush1.msra.mxu0 %v2437
        %2478 = vmatprep.subr.mxu0 0.0
        %2479 = vmatpush2.msra.mxu0 0.0
        %2480 = vmatprep.subr.mxu0 0.0
        %2481 = vmatpush2.msra.mxu0 0.0
        %2482 = vmatprep.subr.mxu0 0.0
        %2483 = vmatpush2.msra.mxu0 0.0
        %2484 = vmatprep.subr.mxu0 0.0
        %2485 = vmatpush2.msra.mxu0 0.0
        %2486 = vmatprep.subr.mxu0 0.0
        %2487 = vmatpush2.msra.mxu0 0.0
        %2488 = vmatprep.subr.mxu0 0.0
        %2489 = vmatpush2.msra.mxu0 0.0
        %2490 = vmatprep.subr.mxu0 0.0
        %2491 = vmatpush2.msra.mxu0 0.0
        %2492 = vmatprep.subr.mxu0 0.0
        %2493 = vmatpush2.msra.mxu0 0.0
        %2494 = vmatprep.subr.mxu0 0.0
        %2495 = vmatpush2.msra.mxu0 0.0
        %2496 = vmatprep.subr.mxu0 0.0
        %2497 = vmatpush2.msra.mxu0 0.0
        %2498 = vmatprep.subr.mxu0 0.0
        %2499 = vmatpush2.msra.mxu0 0.0
        %2500 = vmatprep.subr.mxu0 0.0
        %2501 = vmatpush2.msra.mxu0 0.0
        %2502 = vmatprep.subr.mxu0 0.0
        %2503 = vmatpush2.msra.mxu0 0.0
        %2504 = vmatprep.subr.mxu0 0.0
        %2505 = vmatpush2.msra.mxu0 0.0
        %2506 = vmatprep.subr.mxu0 0.0
        %2507 = vmatpush2.msra.mxu0 0.0
        %2508 = vmatprep.subr.mxu0 0.0
        %2509 = vmatpush2.msra.mxu0 0.0
        %2510 = vmatprep.mubr.f32.mxu0 0.0
        %2511 = vmatmul.mubr.f32.gmra.mxu0 %v2442
        %v2512 = vpop.f32.mrf.mxu0
        %v2513 = vadd.f32 0.0, %v2512
        %v2514 = vpop.f32.mrf.mxu0
        %2515 = vdwg.mxu0
        %2516 = vrot.lane.b32.xlu0 %v1485, 104
        %v2517 = vpop.permute.xlu0 %2516
        %2518 = vrot.lane.b32.xlu0 %v1362, 104
        %v2519 = vpop.permute.xlu0 %2518
        %2520 = vrot.lane.b32.xlu0 %v1363, 104
        %v2521 = vpop.permute.xlu0 %2520
        %v2522 = vsel %vm1487, %v2517, 0
        %v2524 = vsel %vm1487, %v2519, 0
        %v2526 = vsel %vm1487, %v2521, 0
        %2528 = vmatprep.subr.mxu0 0.0
        %2529 = vmatpush1.xpose.msra.mxu0 0.0
        %2530 = vmatprep.subr.mxu0 0.0
        %2531 = vmatpush1.xpose.msra.mxu0 0.0
        %2532 = vmatprep.subr.mxu0 0.0
        %2533 = vmatpush1.xpose.msra.mxu0 0.0
        %2534 = vmatprep.subr.mxu0 0.0
        %2535 = vmatpush1.xpose.msra.mxu0 0.0
        %2536 = vmatprep.subr.mxu0 0.0
        %2537 = vmatpush1.xpose.msra.mxu0 0.0
        %2538 = vmatprep.subr.mxu0 0.0
        %2539 = vmatpush1.xpose.msra.mxu0 0.0
        %2540 = vmatprep.subr.mxu0 0.0
        %2541 = vmatpush1.xpose.msra.mxu0 0.0
        %2542 = vmatprep.subr.mxu0 0.0
        %2543 = vmatpush1.xpose.msra.mxu0 0.0
        %2544 = vmatprep.subr.mxu0 0.0
        %2545 = vmatpush1.xpose.msra.mxu0 0.0
        %2546 = vmatprep.subr.mxu0 0.0
        %2547 = vmatpush1.xpose.msra.mxu0 0.0
        %2548 = vmatprep.subr.mxu0 0.0
        %2549 = vmatpush1.xpose.msra.mxu0 0.0
        %2550 = vmatprep.subr.mxu0 0.0
        %2551 = vmatpush1.xpose.msra.mxu0 0.0
        %2552 = vmatprep.subr.mxu0 0.0
        %2553 = vmatpush1.xpose.msra.mxu0 0.0
        %2554 = vmatprep.subr.mxu0 0.0
        %2555 = vmatpush1.xpose.msra.mxu0 0.0
        %2556 = vmatprep.subr.mxu0 0.0
        %2557 = vmatpush1.xpose.msra.mxu0 %v2526
        %2558 = vmatprep.subr.mxu0 0.0
        %2559 = vmatpush1.xpose.msra.mxu0 %v2524
        %2560 = vmatprep.subr.mxu0 0.0
        %2561 = vmatpush2.xpose.msra.mxu0 0.0
        %2562 = vmatprep.subr.mxu0 0.0
        %2563 = vmatpush2.xpose.msra.mxu0 0.0
        %2564 = vmatprep.subr.mxu0 0.0
        %2565 = vmatpush2.xpose.msra.mxu0 0.0
        %2566 = vmatprep.subr.mxu0 0.0
        %2567 = vmatpush2.xpose.msra.mxu0 0.0
        %2568 = vmatprep.subr.mxu0 0.0
        %2569 = vmatpush2.xpose.msra.mxu0 0.0
        %2570 = vmatprep.subr.mxu0 0.0
        %2571 = vmatpush2.xpose.msra.mxu0 0.0
        %2572 = vmatprep.subr.mxu0 0.0
        %2573 = vmatpush2.xpose.msra.mxu0 0.0
        %2574 = vmatprep.subr.mxu0 0.0
        %2575 = vmatpush2.xpose.msra.mxu0 0.0
        %2576 = vmatprep.subr.mxu0 0.0
        %2577 = vmatpush2.xpose.msra.mxu0 0.0
        %2578 = vmatprep.subr.mxu0 0.0
        %2579 = vmatpush2.xpose.msra.mxu0 0.0
        %2580 = vmatprep.subr.mxu0 0.0
        %2581 = vmatpush2.xpose.msra.mxu0 0.0
        %2582 = vmatprep.subr.mxu0 0.0
        %2583 = vmatpush2.xpose.msra.mxu0 0.0
        %2584 = vmatprep.subr.mxu0 0.0
        %2585 = vmatpush2.xpose.msra.mxu0 0.0
        %2586 = vmatprep.subr.mxu0 0.0
        %2587 = vmatpush2.xpose.msra.mxu0 0.0
        %2588 = vmatprep.subr.mxu0 0.0
        %2589 = vmatpush2.xpose.msra.mxu0 0.0
        %2590 = vmatprep.subr.mxu0 0.0
        %2591 = vmatpush2.xpose.msra.mxu0 0.0
        %2592 = vmatprep.mubr.f32.mxu0 0.0
        %2593 = vmatmul.mubr.f32.gmra.mxu0 %v2522
        %v2594 = vpop.f32.mrf.mxu0
        %v2595 = vadd.f32 0.0, %v2594
        %v2596 = vpop.f32.mrf.mxu0
        %2597 = vdwg.mxu0
        %2598 = vrot.lane.b32.xlu0 %v1486, 104
        %v2599 = vpop.permute.xlu0 %2598
        %2600 = vrot.lane.b32.xlu0 %v1364, 104
        %v2601 = vpop.permute.xlu0 %2600
        %2602 = vrot.lane.b32.xlu0 %v1365, 104
        %v2603 = vpop.permute.xlu0 %2602
        %v2604 = vsel %vm1487, %v2599, 0
        %v2606 = vsel %vm1487, %v2601, 0
        %v2608 = vsel %vm1487, %v2603, 0
        %2610 = vmatprep.subr.mxu0 0.0
        %2611 = vmatpush1.xpose.msra.mxu0 0.0
        %2612 = vmatprep.subr.mxu0 0.0
        %2613 = vmatpush1.xpose.msra.mxu0 0.0
        %2614 = vmatprep.subr.mxu0 0.0
        %2615 = vmatpush1.xpose.msra.mxu0 0.0
        %2616 = vmatprep.subr.mxu0 0.0
        %2617 = vmatpush1.xpose.msra.mxu0 0.0
        %2618 = vmatprep.subr.mxu0 0.0
        %2619 = vmatpush1.xpose.msra.mxu0 0.0
        %2620 = vmatprep.subr.mxu0 0.0
        %2621 = vmatpush1.xpose.msra.mxu0 0.0
        %2622 = vmatprep.subr.mxu0 0.0
        %2623 = vmatpush1.xpose.msra.mxu0 0.0
        %2624 = vmatprep.subr.mxu0 0.0
        %2625 = vmatpush1.xpose.msra.mxu0 0.0
        %2626 = vmatprep.subr.mxu0 0.0
        %2627 = vmatpush1.xpose.msra.mxu0 0.0
        %2628 = vmatprep.subr.mxu0 0.0
        %2629 = vmatpush1.xpose.msra.mxu0 0.0
        %2630 = vmatprep.subr.mxu0 0.0
        %2631 = vmatpush1.xpose.msra.mxu0 0.0
        %2632 = vmatprep.subr.mxu0 0.0
        %2633 = vmatpush1.xpose.msra.mxu0 0.0
        %2634 = vmatprep.subr.mxu0 0.0
        %2635 = vmatpush1.xpose.msra.mxu0 0.0
        %2636 = vmatprep.subr.mxu0 0.0
        %2637 = vmatpush1.xpose.msra.mxu0 0.0
        %2638 = vmatprep.subr.mxu0 0.0
        %2639 = vmatpush1.xpose.msra.mxu0 %v2608
        %2640 = vmatprep.subr.mxu0 0.0
        %2641 = vmatpush1.xpose.msra.mxu0 %v2606
        %2642 = vmatprep.subr.mxu0 0.0
        %2643 = vmatpush2.xpose.msra.mxu0 0.0
        %2644 = vmatprep.subr.mxu0 0.0
        %2645 = vmatpush2.xpose.msra.mxu0 0.0
        %2646 = vmatprep.subr.mxu0 0.0
        %2647 = vmatpush2.xpose.msra.mxu0 0.0
        %2648 = vmatprep.subr.mxu0 0.0
        %2649 = vmatpush2.xpose.msra.mxu0 0.0
        %2650 = vmatprep.subr.mxu0 0.0
        %2651 = vmatpush2.xpose.msra.mxu0 0.0
        %2652 = vmatprep.subr.mxu0 0.0
        %2653 = vmatpush2.xpose.msra.mxu0 0.0
        %2654 = vmatprep.subr.mxu0 0.0
        %2655 = vmatpush2.xpose.msra.mxu0 0.0
        %2656 = vmatprep.subr.mxu0 0.0
        %2657 = vmatpush2.xpose.msra.mxu0 0.0
        %2658 = vmatprep.subr.mxu0 0.0
        %2659 = vmatpush2.xpose.msra.mxu0 0.0
        %2660 = vmatprep.subr.mxu0 0.0
        %2661 = vmatpush2.xpose.msra.mxu0 0.0
        %2662 = vmatprep.subr.mxu0 0.0
        %2663 = vmatpush2.xpose.msra.mxu0 0.0
        %2664 = vmatprep.subr.mxu0 0.0
        %2665 = vmatpush2.xpose.msra.mxu0 0.0
        %2666 = vmatprep.subr.mxu0 0.0
        %2667 = vmatpush2.xpose.msra.mxu0 0.0
        %2668 = vmatprep.subr.mxu0 0.0
        %2669 = vmatpush2.xpose.msra.mxu0 0.0
        %2670 = vmatprep.subr.mxu0 0.0
        %2671 = vmatpush2.xpose.msra.mxu0 0.0
        %2672 = vmatprep.subr.mxu0 0.0
        %2673 = vmatpush2.xpose.msra.mxu0 0.0
        %2674 = vmatprep.mubr.f32.mxu0 0.0
        %2675 = vmatmul.mubr.f32.gmra.mxu0 %v2604
        %v2676 = vpop.f32.mrf.mxu0
        %v2677 = vadd.f32 0.0, %v2676
        %v2678 = vpop.f32.mrf.mxu0
        %2679 = vdwg.mxu0
        %v2680 = vsel %vm1646, %v2595, -inf
        %2681 = vmax.xlane.f32.xlu0 %v2680
        %v2682 = vpop.xlane.xlu0 %2681
        %v2683 = vsel %vm1646, %v2677, -inf
        %2684 = vmax.xlane.f32.xlu0 %v2683
        %v2685 = vpop.xlane.xlu0 %2684
        %v2686 = vsub.f32 %v2595, %v2682
        %v2687 = vsub.f32 %v2677, %v2685
        %v2688 = vmul.f32 %v2686, 1.442695
        %v2689 = vpow.pop %v2688
        %v2690 = vmul.f32 %v2687, 1.442695
        %v2691 = vpow.pop %v2690
        %v2692 = vsel %vm1646, %v2689, 0.0
        %2693 = vadd.xlane.f32.xlu0 %v2692
        %v2694 = vpop.xlane.xlu0 %2693
        %v2695 = vsel %vm1646, %v2691, 0.0
        %2696 = vadd.xlane.f32.xlu0 %v2695
        %v2697 = vpop.xlane.xlu0 %2696
        %v2698 = vrcp.pop %v2694
        %v2699 = vrcp.pop %v2697
        %v2700 = vmul.f32 %v2689, %v2698
        %v2701 = vmul.f32 %v2691, %v2699
        %2702 = vrot.lane.b32.xlu0 %v1478, 104
        %v2703 = vpop.permute.xlu0 %2702
        %2704 = vrot.lane.b32.xlu0 %v1479, 104
        %v2705 = vpop.permute.xlu0 %2704
        %v2708 = vsel %vm1669, %v2700, 0
        %v2710 = vsel %vm1304, %v2705, 0
        %2712 = vmatprep.subr.mxu0 0.0
        %2713 = vmatpush1.msra.mxu0 0.0
        %2714 = vmatprep.subr.mxu0 0.0
        %2715 = vmatpush1.msra.mxu0 0.0
        %2716 = vmatprep.subr.mxu0 0.0
        %2717 = vmatpush1.msra.mxu0 0.0
        %2718 = vmatprep.subr.mxu0 0.0
        %2719 = vmatpush1.msra.mxu0 0.0
        %2720 = vmatprep.subr.mxu0 0.0
        %2721 = vmatpush1.msra.mxu0 0.0
        %2722 = vmatprep.subr.mxu0 0.0
        %2723 = vmatpush1.msra.mxu0 0.0
        %2724 = vmatprep.subr.mxu0 0.0
        %2725 = vmatpush1.msra.mxu0 0.0
        %2726 = vmatprep.subr.mxu0 0.0
        %2727 = vmatpush1.msra.mxu0 0.0
        %2728 = vmatprep.subr.mxu0 0.0
        %2729 = vmatpush1.msra.mxu0 0.0
        %2730 = vmatprep.subr.mxu0 0.0
        %2731 = vmatpush1.msra.mxu0 0.0
        %2732 = vmatprep.subr.mxu0 0.0
        %2733 = vmatpush1.msra.mxu0 0.0
        %2734 = vmatprep.subr.mxu0 0.0
        %2735 = vmatpush1.msra.mxu0 0.0
        %2736 = vmatprep.subr.mxu0 0.0
        %2737 = vmatpush1.msra.mxu0 0.0
        %2738 = vmatprep.subr.mxu0 0.0
        %2739 = vmatpush1.msra.mxu0 0.0
        %2740 = vmatprep.subr.mxu0 0.0
        %2741 = vmatpush1.msra.mxu0 %v2710
        %2742 = vmatprep.subr.mxu0 0.0
        %2743 = vmatpush1.msra.mxu0 %v2703
        %2744 = vmatprep.subr.mxu0 0.0
        %2745 = vmatpush2.msra.mxu0 0.0
        %2746 = vmatprep.subr.mxu0 0.0
        %2747 = vmatpush2.msra.mxu0 0.0
        %2748 = vmatprep.subr.mxu0 0.0
        %2749 = vmatpush2.msra.mxu0 0.0
        %2750 = vmatprep.subr.mxu0 0.0
        %2751 = vmatpush2.msra.mxu0 0.0
        %2752 = vmatprep.subr.mxu0 0.0
        %2753 = vmatpush2.msra.mxu0 0.0
        %2754 = vmatprep.subr.mxu0 0.0
        %2755 = vmatpush2.msra.mxu0 0.0
        %2756 = vmatprep.subr.mxu0 0.0
        %2757 = vmatpush2.msra.mxu0 0.0
        %2758 = vmatprep.subr.mxu0 0.0
        %2759 = vmatpush2.msra.mxu0 0.0
        %2760 = vmatprep.subr.mxu0 0.0
        %2761 = vmatpush2.msra.mxu0 0.0
        %2762 = vmatprep.subr.mxu0 0.0
        %2763 = vmatpush2.msra.mxu0 0.0
        %2764 = vmatprep.subr.mxu0 0.0
        %2765 = vmatpush2.msra.mxu0 0.0
        %2766 = vmatprep.subr.mxu0 0.0
        %2767 = vmatpush2.msra.mxu0 0.0
        %2768 = vmatprep.subr.mxu0 0.0
        %2769 = vmatpush2.msra.mxu0 0.0
        %2770 = vmatprep.subr.mxu0 0.0
        %2771 = vmatpush2.msra.mxu0 0.0
        %2772 = vmatprep.subr.mxu0 0.0
        %2773 = vmatpush2.msra.mxu0 0.0
        %2774 = vmatprep.subr.mxu0 0.0
        %2775 = vmatpush2.msra.mxu0 0.0
        %2776 = vmatprep.mubr.f32.mxu0 0.0
        %2777 = vmatmul.mubr.f32.gmra.mxu0 %v2708
        %v2778 = vpop.f32.mrf.mxu0
        %v2779 = vadd.f32 0.0, %v2778
        %v2780 = vpop.f32.mrf.mxu0
        %2781 = vdwg.mxu0
        %2782 = vrot.lane.b32.xlu0 %v1480, 104
        %v2783 = vpop.permute.xlu0 %2782
        %2784 = vrot.lane.b32.xlu0 %v1481, 104
        %v2785 = vpop.permute.xlu0 %2784
        %v2788 = vsel %vm1669, %v2701, 0
        %v2790 = vsel %vm1304, %v2785, 0
        %2792 = vmatprep.subr.mxu0 0.0
        %2793 = vmatpush1.msra.mxu0 0.0
        %2794 = vmatprep.subr.mxu0 0.0
        %2795 = vmatpush1.msra.mxu0 0.0
        %2796 = vmatprep.subr.mxu0 0.0
        %2797 = vmatpush1.msra.mxu0 0.0
        %2798 = vmatprep.subr.mxu0 0.0
        %2799 = vmatpush1.msra.mxu0 0.0
        %2800 = vmatprep.subr.mxu0 0.0
        %2801 = vmatpush1.msra.mxu0 0.0
        %2802 = vmatprep.subr.mxu0 0.0
        %2803 = vmatpush1.msra.mxu0 0.0
        %2804 = vmatprep.subr.mxu0 0.0
        %2805 = vmatpush1.msra.mxu0 0.0
        %2806 = vmatprep.subr.mxu0 0.0
        %2807 = vmatpush1.msra.mxu0 0.0
        %2808 = vmatprep.subr.mxu0 0.0
        %2809 = vmatpush1.msra.mxu0 0.0
        %2810 = vmatprep.subr.mxu0 0.0
        %2811 = vmatpush1.msra.mxu0 0.0
        %2812 = vmatprep.subr.mxu0 0.0
        %2813 = vmatpush1.msra.mxu0 0.0
        %2814 = vmatprep.subr.mxu0 0.0
        %2815 = vmatpush1.msra.mxu0 0.0
        %2816 = vmatprep.subr.mxu0 0.0
        %2817 = vmatpush1.msra.mxu0 0.0
        %2818 = vmatprep.subr.mxu0 0.0
        %2819 = vmatpush1.msra.mxu0 0.0
        %2820 = vmatprep.subr.mxu0 0.0
        %2821 = vmatpush1.msra.mxu0 %v2790
        %2822 = vmatprep.subr.mxu0 0.0
        %2823 = vmatpush1.msra.mxu0 %v2783
        %2824 = vmatprep.subr.mxu0 0.0
        %2825 = vmatpush2.msra.mxu0 0.0
        %2826 = vmatprep.subr.mxu0 0.0
        %2827 = vmatpush2.msra.mxu0 0.0
        %2828 = vmatprep.subr.mxu0 0.0
        %2829 = vmatpush2.msra.mxu0 0.0
        %2830 = vmatprep.subr.mxu0 0.0
        %2831 = vmatpush2.msra.mxu0 0.0
        %2832 = vmatprep.subr.mxu0 0.0
        %2833 = vmatpush2.msra.mxu0 0.0
        %2834 = vmatprep.subr.mxu0 0.0
        %2835 = vmatpush2.msra.mxu0 0.0
        %2836 = vmatprep.subr.mxu0 0.0
        %2837 = vmatpush2.msra.mxu0 0.0
        %2838 = vmatprep.subr.mxu0 0.0
        %2839 = vmatpush2.msra.mxu0 0.0
        %2840 = vmatprep.subr.mxu0 0.0
        %2841 = vmatpush2.msra.mxu0 0.0
        %2842 = vmatprep.subr.mxu0 0.0
        %2843 = vmatpush2.msra.mxu0 0.0
        %2844 = vmatprep.subr.mxu0 0.0
        %2845 = vmatpush2.msra.mxu0 0.0
        %2846 = vmatprep.subr.mxu0 0.0
        %2847 = vmatpush2.msra.mxu0 0.0
        %2848 = vmatprep.subr.mxu0 0.0
        %2849 = vmatpush2.msra.mxu0 0.0
        %2850 = vmatprep.subr.mxu0 0.0
        %2851 = vmatpush2.msra.mxu0 0.0
        %2852 = vmatprep.subr.mxu0 0.0
        %2853 = vmatpush2.msra.mxu0 0.0
        %2854 = vmatprep.subr.mxu0 0.0
        %2855 = vmatpush2.msra.mxu0 0.0
        %2856 = vmatprep.mubr.f32.mxu0 0.0
        %2857 = vmatmul.mubr.f32.gmra.mxu0 %v2788
        %v2858 = vpop.f32.mrf.mxu0
        %v2859 = vadd.f32 0.0, %v2858
        %v2860 = vpop.f32.mrf.mxu0
        %2861 = vdwg.mxu0
        %2864 = vrot.lane.b32.xlu0 %v2086, 8
        %v2865 = vpop.permute.xlu0 %2864
        %2866 = vrot.lane.b32.xlu0 %v2167, 8
        %v2867 = vpop.permute.xlu0 %2866
        %2872 = vrot.lane.b32.xlu0 %v2433, 16
        %v2873 = vpop.permute.xlu0 %2872
        %2874 = vrot.lane.b32.xlu0 %v2513, 16
        %v2875 = vpop.permute.xlu0 %2874
        %2880 = vrot.lane.b32.xlu0 %v2779, 24
        %v2881 = vpop.permute.xlu0 %2880
        %2882 = vrot.lane.b32.xlu0 %v2859, 24
        %v2883 = vpop.permute.xlu0 %2882
        %v2886 = vsel %vm1487, %v1743, %v2865
        %v2887 = vsel %vm1487, %v1819, %v2867
        %vm2888 = vcmask 130048
        %v2889 = vsel %vm2888, %v2886, %v2873
        %v2890 = vsel %vm2888, %v2887, %v2875
        %vm2891 = vcmask 195584
        %v2892 = vsel %vm2891, %v2889, %v2881
        %v2893 = vsel %vm2891, %v2890, %v2883
        %v2896 = vcombine.low %v2892, %v2893
        %v2898 = vpack.c.bf16 %v2896, %v2896
        %v2899 = vld [vmem:[%s19] sm:$0xf]
        %v2900 = vld [vmem:[%s19 + $0x4] sm:$0xf]
        %v2901 = vld [vmem:[%s19 + $0x8] sm:$0xf]
        %v2902 = vld [vmem:[%s19 + $0xc] sm:$0xf]
        %v2903 = vld [vmem:[#allocation14] sm:$0x1]
        %v2905 = vlaneseq
        %v2906 = vshrl.u32 %v2905, 7
        %v2907 = vsub.s32 0, %v2906
        %v2908 = vrot.slane %v2903, %v2907
        %v2914 = vunpack.c.l.b16 %v2899
        %v2915 = vunpack.c.l.b16 %v2900
        %v2916 = vunpack.c.l.b16 %v2901
        %v2917 = vunpack.c.l.b16 %v2902
        %v2918 = vpack.c.b16 %v2915, %v2914
        %v2919 = vpack.c.b16 %v2917, %v2916
        %v2923 = vsel %vm1197, %v2898, 0
        %2925 = vmatprep.subr.bf16.mxu0 0
        %2926 = vmatpush1.bf16.msra.mxu0 0
        %2927 = vmatprep.subr.bf16.mxu0 0
        %2928 = vmatpush1.bf16.msra.mxu0 0
        %2929 = vmatprep.subr.bf16.mxu0 0
        %2930 = vmatpush1.bf16.msra.mxu0 0
        %2931 = vmatprep.subr.bf16.mxu0 0
        %2932 = vmatpush1.bf16.msra.mxu0 0
        %2933 = vmatprep.subr.bf16.mxu0 0
        %2934 = vmatpush1.bf16.msra.mxu0 0
        %2935 = vmatprep.subr.bf16.mxu0 0
        %2936 = vmatpush1.bf16.msra.mxu0 0
        %2937 = vmatprep.subr.bf16.mxu0 0
        %2938 = vmatpush1.bf16.msra.mxu0 %v2919
        %2939 = vmatprep.subr.bf16.mxu0 0
        %2940 = vmatpush1.bf16.msra.mxu0 %v2918
        %2941 = vmatprep.subr.bf16.mxu0 0
        %2942 = vmatpush2.bf16.msra.mxu0 0
        %2943 = vmatprep.subr.bf16.mxu0 0
        %2944 = vmatpush2.bf16.msra.mxu0 0
        %2945 = vmatprep.subr.bf16.mxu0 0
        %2946 = vmatpush2.bf16.msra.mxu0 0
        %2947 = vmatprep.subr.bf16.mxu0 0
        %2948 = vmatpush2.bf16.msra.mxu0 0
        %2949 = vmatprep.subr.bf16.mxu0 0
        %2950 = vmatpush2.bf16.msra.mxu0 0
        %2951 = vmatprep.subr.bf16.mxu0 0
        %2952 = vmatpush2.bf16.msra.mxu0 0
        %2953 = vmatprep.subr.bf16.mxu0 0
        %2954 = vmatpush2.bf16.msra.mxu0 0
        %2955 = vmatprep.subr.bf16.mxu0 0
        %2956 = vmatpush2.bf16.msra.mxu0 0
        %2957 = vmatprep.mubr.bf16.mxu0 0
        %2958 = vmatmul.mubr.bf16.gmra.mxu0 %v2923
        %v2959 = vpop.f32.mrf.mxu0
        %v2960 = vadd.f32 %v2908, %v2959
        %v2961 = vpop.f32.mrf.mxu0
        %v2962 = vpop.f32.mrf.mxu0
        %v2963 = vpop.f32.mrf.mxu0
        %2964 = vdwg.mxu0
        %v2966 = vcombine.high %v2960, %v2960
        %v2968 = vadd.f32 %v1167, %v2960
        %v2969 = vadd.f32 %v1168, %v2966
        %v2972 = vcombine.low %v2968, %v2969
        %v2974 = vsel %vm1197, %v2972, 0.0
        %2975 = vadd.xlane.f32.xlu0 %v2974
        %v2976 = vpop.xlane.xlu0 %2975
        %v2977 = vrcp.pop 32.0
        %v2978 = vmul.f32 %v2976, %v2977
        %v2981 = vunpack.c.l.s4 839922192
        %v2982 = vunpack.c.0.s8 %v2981
        %v2983 = vlaneseq
        %v2984 = vshrl.u32 %v2983, 7
        %v2985 = vsub.s32 %v2982, %v2984
        %v2986 = vrot.slane %v2978, %v2985
        %v2988 = vunpack.c.l.s4 1985246804
        %v2989 = vunpack.c.0.s8 %v2988
        %v2990 = vlaneseq
        %v2991 = vshrl.u32 %v2990, 7
        %v2992 = vsub.s32 %v2989, %v2991
        %v2993 = vrot.slane %v2978, %v2992
        %v2996 = vsub.f32 %v2968, %v2986
        %v2997 = vsub.f32 %v2969, %v2993
        %v2998 = vmul.f32 %v2996, %v2996
        %v2999 = vmul.f32 %v2997, %v2997
        %v3002 = vcombine.low %v2998, %v2999
        %v3004 = vsel %vm1197, %v3002, 0.0
        %3005 = vadd.xlane.f32.xlu0 %v3004
        %v3006 = vpop.xlane.xlu0 %3005
        %v3007 = vmul.f32 %v3006, %v2977
        %v3008 = vadd.f32 %v3007, 1e-05
        %v3009 = vrsqrt.pop %v3008
        %v3012 = vunpack.c.l.s4 839922192
        %v3013 = vunpack.c.0.s8 %v3012
        %v3014 = vlaneseq
        %v3015 = vshrl.u32 %v3014, 7
        %v3016 = vsub.s32 %v3013, %v3015
        %v3017 = vrot.slane %v3009, %v3016
        %v3019 = vunpack.c.l.s4 1985246804
        %v3020 = vunpack.c.0.s8 %v3019
        %v3021 = vlaneseq
        %v3022 = vshrl.u32 %v3021, 7
        %v3023 = vsub.s32 %v3020, %v3022
        %v3024 = vrot.slane %v3009, %v3023
        %v3027 = vmul.f32 %v2996, %v3017
        %v3028 = vmul.f32 %v2997, %v3024
        %v3029 = vld [vmem:[%s47] sm:$0x1]
        %v3031 = vlaneseq
        %v3032 = vshrl.u32 %v3031, 7
        %v3033 = vsub.s32 0, %v3032
        %v3034 = vrot.slane %v3029, %v3033
        %v3036 = vcombine.high %v3034, %v3034
        %v3038 = vmul.f32 %v3027, %v3034
        %v3039 = vmul.f32 %v3028, %v3036
        %v3040 = vld [vmem:[%s49] sm:$0x1]
        %v3042 = vlaneseq
        %v3043 = vshrl.u32 %v3042, 7
        %v3044 = vsub.s32 0, %v3043
        %v3045 = vrot.slane %v3040, %v3044
        %v3047 = vcombine.high %v3045, %v3045
        %v3049 = vadd.f32 %v3038, %v3045
        %v3050 = vadd.f32 %v3039, %v3047
        %v3053 = vcombine.low %v3049, %v3050
        %v3055 = vpack.c.bf16 %v3053, %v3053
        %v3056 = vld [vmem:[#allocation16] sm:$0xf]
        %v3057 = vld [vmem:[#allocation16 + $0x4] sm:$0xf]
        %v3058 = vld [vmem:[#allocation16 + $0x8] sm:$0xf]
        %v3059 = vld [vmem:[#allocation16 + $0xc] sm:$0xf]
        %v3060 = vld [vmem:[#allocation20] sm:$0x1]
        %v3062 = vlaneseq
        %v3063 = vshrl.u32 %v3062, 7
        %v3064 = vsub.s32 0, %v3063
        %v3065 = vrot.slane %v3060, %v3064
        %v3071 = vunpack.c.l.b16 %v3056
        %v3072 = vunpack.c.l.b16 %v3057
        %v3073 = vunpack.c.l.b16 %v3058
        %v3074 = vunpack.c.l.b16 %v3059
        %v3075 = vpack.c.b16 %v3072, %v3071
        %v3076 = vpack.c.b16 %v3074, %v3073
        %v3080 = vsel %vm1197, %v3055, 0
        %3082 = vmatprep.subr.bf16.mxu0 0
        %3083 = vmatpush1.bf16.msra.mxu0 0
        %3084 = vmatprep.subr.bf16.mxu0 0
        %3085 = vmatpush1.bf16.msra.mxu0 0
        %3086 = vmatprep.subr.bf16.mxu0 0
        %3087 = vmatpush1.bf16.msra.mxu0 0
        %3088 = vmatprep.subr.bf16.mxu0 0
        %3089 = vmatpush1.bf16.msra.mxu0 0
        %3090 = vmatprep.subr.bf16.mxu0 0
        %3091 = vmatpush1.bf16.msra.mxu0 0
        %3092 = vmatprep.subr.bf16.mxu0 0
        %3093 = vmatpush1.bf16.msra.mxu0 0
        %3094 = vmatprep.subr.bf16.mxu0 0
        %3095 = vmatpush1.bf16.msra.mxu0 %v3076
        %3096 = vmatprep.subr.bf16.mxu0 0
        %3097 = vmatpush1.bf16.msra.mxu0 %v3075
        %3098 = vmatprep.subr.bf16.mxu0 0
        %3099 = vmatpush2.bf16.msra.mxu0 0
        %3100 = vmatprep.subr.bf16.mxu0 0
        %3101 = vmatpush2.bf16.msra.mxu0 0
        %3102 = vmatprep.subr.bf16.mxu0 0
        %3103 = vmatpush2.bf16.msra.mxu0 0
        %3104 = vmatprep.subr.bf16.mxu0 0
        %3105 = vmatpush2.bf16.msra.mxu0 0
        %3106 = vmatprep.subr.bf16.mxu0 0
        %3107 = vmatpush2.bf16.msra.mxu0 0
        %3108 = vmatprep.subr.bf16.mxu0 0
        %3109 = vmatpush2.bf16.msra.mxu0 0
        %3110 = vmatprep.subr.bf16.mxu0 0
        %3111 = vmatpush2.bf16.msra.mxu0 0
        %3112 = vmatprep.subr.bf16.mxu0 0
        %3113 = vmatpush2.bf16.msra.mxu0 0
        %3114 = vmatprep.mubr.bf16.mxu0 0
        %3115 = vmatmul.mubr.bf16.gmra.mxu0 %v3080
        %v3116 = vpop.f32.mrf.mxu0
        %v3117 = vadd.f32 %v3065, %v3116
        %v3118 = vpop.f32.mrf.mxu0
        %v3119 = vpop.f32.mrf.mxu0
        %v3120 = vpop.f32.mrf.mxu0
        %3121 = vdwg.mxu0
        %v3122 = vpack.c.bf16 %v1161, %v1160
        %v3123 = vld [vmem:[#allocation17] sm:$0xf]
        %v3124 = vld [vmem:[#allocation17 + $0x4] sm:$0xf]
        %v3125 = vld [vmem:[#allocation17 + $0x8] sm:$0xf]
        %v3126 = vld [vmem:[#allocation17 + $0xc] sm:$0xf]
        %v3131 = vunpack.c.l.b16 %v3123
        %v3132 = vunpack.c.l.b16 %v3124
        %v3133 = vunpack.c.l.b16 %v3125
        %v3134 = vunpack.c.l.b16 %v3126
        %v3135 = vpack.c.b16 %v3132, %v3131
        %v3136 = vpack.c.b16 %v3134, %v3133
        %v3140 = vsel %vm1197, %v3122, 0
        %3142 = vmatprep.subr.bf16.mxu0 0
        %3143 = vmatpush1.bf16.msra.mxu0 0
        %3144 = vmatprep.subr.bf16.mxu0 0
        %3145 = vmatpush1.bf16.msra.mxu0 0
        %3146 = vmatprep.subr.bf16.mxu0 0
        %3147 = vmatpush1.bf16.msra.mxu0 0
        %3148 = vmatprep.subr.bf16.mxu0 0
        %3149 = vmatpush1.bf16.msra.mxu0 0
        %3150 = vmatprep.subr.bf16.mxu0 0
        %3151 = vmatpush1.bf16.msra.mxu0 0
        %3152 = vmatprep.subr.bf16.mxu0 0
        %3153 = vmatpush1.bf16.msra.mxu0 0
        %3154 = vmatprep.subr.bf16.mxu0 0
        %3155 = vmatpush1.bf16.msra.mxu0 %v3136
        %3156 = vmatprep.subr.bf16.mxu0 0
        %3157 = vmatpush1.bf16.msra.mxu0 %v3135
        %3158 = vmatprep.subr.bf16.mxu0 0
        %3159 = vmatpush2.bf16.msra.mxu0 0
        %3160 = vmatprep.subr.bf16.mxu0 0
        %3161 = vmatpush2.bf16.msra.mxu0 0
        %3162 = vmatprep.subr.bf16.mxu0 0
        %3163 = vmatpush2.bf16.msra.mxu0 0
        %3164 = vmatprep.subr.bf16.mxu0 0
        %3165 = vmatpush2.bf16.msra.mxu0 0
        %3166 = vmatprep.subr.bf16.mxu0 0
        %3167 = vmatpush2.bf16.msra.mxu0 0
        %3168 = vmatprep.subr.bf16.mxu0 0
        %3169 = vmatpush2.bf16.msra.mxu0 0
        %3170 = vmatprep.subr.bf16.mxu0 0
        %3171 = vmatpush2.bf16.msra.mxu0 0
        %3172 = vmatprep.subr.bf16.mxu0 0
        %3173 = vmatpush2.bf16.msra.mxu0 0
        %3174 = vmatprep.mubr.bf16.mxu0 0
        %3175 = vmatmul.mubr.bf16.gmra.mxu0 %v3140
        %v3176 = vpop.f32.mrf.mxu0
        %v3177 = vadd.f32 0.0, %v3176
        %v3178 = vpop.f32.mrf.mxu0
        %v3179 = vpop.f32.mrf.mxu0
        %v3180 = vadd.f32 0.0, %v3179
        %v3181 = vpop.f32.mrf.mxu0
        %3182 = vdwg.mxu0
        %v3185 = vrot.slane %v3177, 4
        %v3186 = vrot.slane %v3180, 4
        %v3187 = vsel %vm1304, %v3185, %v3186
        %v3190 = vld [vmem:[#allocation22] sm:$0x1]
        %v3192 = vlaneseq
        %v3193 = vshrl.u32 %v3192, 7
        %v3194 = vsub.s32 0, %v3193
        %v3195 = vrot.slane %v3190, %v3194
        %3197 = vmatprep.subr.bf16.mxu0 0
        %3198 = vmatpush1.bf16.msra.mxu0 0
        %3199 = vmatprep.subr.bf16.mxu0 0
        %3200 = vmatpush1.bf16.msra.mxu0 0
        %3201 = vmatprep.subr.bf16.mxu0 0
        %3202 = vmatpush1.bf16.msra.mxu0 0
        %3203 = vmatprep.subr.bf16.mxu0 0
        %3204 = vmatpush1.bf16.msra.mxu0 0
        %3205 = vmatprep.subr.bf16.mxu0 0
        %3206 = vmatpush1.bf16.msra.mxu0 0
        %3207 = vmatprep.subr.bf16.mxu0 0
        %3208 = vmatpush1.bf16.msra.mxu0 0
        %3209 = vmatprep.subr.bf16.mxu0 0
        %3210 = vmatpush1.bf16.msra.mxu0 %v3136
        %3211 = vmatprep.subr.bf16.mxu0 0
        %3212 = vmatpush1.bf16.msra.mxu0 %v3135
        %3213 = vmatprep.subr.bf16.mxu0 0
        %3214 = vmatpush2.bf16.msra.mxu0 0
        %3215 = vmatprep.subr.bf16.mxu0 0
        %3216 = vmatpush2.bf16.msra.mxu0 0
        %3217 = vmatprep.subr.bf16.mxu0 0
        %3218 = vmatpush2.bf16.msra.mxu0 0
        %3219 = vmatprep.subr.bf16.mxu0 0
        %3220 = vmatpush2.bf16.msra.mxu0 0
        %3221 = vmatprep.subr.bf16.mxu0 0
        %3222 = vmatpush2.bf16.msra.mxu0 0
        %3223 = vmatprep.subr.bf16.mxu0 0
        %3224 = vmatpush2.bf16.msra.mxu0 0
        %3225 = vmatprep.subr.bf16.mxu0 0
        %3226 = vmatpush2.bf16.msra.mxu0 0
        %3227 = vmatprep.subr.bf16.mxu0 0
        %3228 = vmatpush2.bf16.msra.mxu0 0
        %3229 = vmatprep.mubr.bf16.mxu0 0
        %3230 = vmatmul.mubr.bf16.gmra.mxu0 %v1319
        %v3231 = vpop.f32.mrf.mxu0
        %v3232 = vadd.f32 %v3195, %v3231
        %v3233 = vpop.f32.mrf.mxu0
        %v3234 = vpop.f32.mrf.mxu0
        %v3235 = vadd.f32 %v3195, %v3234
        %v3236 = vpop.f32.mrf.mxu0
        %3237 = vdwg.mxu0
        %v3238 = vadd.f32 %v3177, %v3232
        %v3239 = vadd.f32 %v3180, %v3235
        %v3240 = vadd.f32 %v3187, %v3232
        %v3241 = vadd.f32 %v3186, %v3235
        %v3242 = vld [vmem:[#allocation19] sm:$0xf]
        %v3243 = vld [vmem:[#allocation19 + $0x4] sm:$0xf]
        %v3244 = vld [vmem:[#allocation19 + $0x8] sm:$0xf]
        %v3245 = vld [vmem:[#allocation19 + $0xc] sm:$0xf]
        %v3250 = vunpack.c.l.b16 %v3242
        %v3251 = vunpack.c.l.b16 %v3243
        %v3252 = vunpack.c.l.b16 %v3244
        %v3253 = vunpack.c.l.b16 %v3245
        %v3254 = vpack.c.b16 %v3251, %v3250
        %v3255 = vpack.c.b16 %v3253, %v3252
        %3258 = vmatprep.subr.bf16.mxu0 0
        %3259 = vmatpush1.bf16.msra.mxu0 0
        %3260 = vmatprep.subr.bf16.mxu0 0
        %3261 = vmatpush1.bf16.msra.mxu0 0
        %3262 = vmatprep.subr.bf16.mxu0 0
        %3263 = vmatpush1.bf16.msra.mxu0 0
        %3264 = vmatprep.subr.bf16.mxu0 0
        %3265 = vmatpush1.bf16.msra.mxu0 0
        %3266 = vmatprep.subr.bf16.mxu0 0
        %3267 = vmatpush1.bf16.msra.mxu0 0
        %3268 = vmatprep.subr.bf16.mxu0 0
        %3269 = vmatpush1.bf16.msra.mxu0 0
        %3270 = vmatprep.subr.bf16.mxu0 0
        %3271 = vmatpush1.bf16.msra.mxu0 %v3255
        %3272 = vmatprep.subr.bf16.mxu0 0
        %3273 = vmatpush1.bf16.msra.mxu0 %v3254
        %3274 = vmatprep.subr.bf16.mxu0 0
        %3275 = vmatpush2.bf16.msra.mxu0 0
        %3276 = vmatprep.subr.bf16.mxu0 0
        %3277 = vmatpush2.bf16.msra.mxu0 0
        %3278 = vmatprep.subr.bf16.mxu0 0
        %3279 = vmatpush2.bf16.msra.mxu0 0
        %3280 = vmatprep.subr.bf16.mxu0 0
        %3281 = vmatpush2.bf16.msra.mxu0 0
        %3282 = vmatprep.subr.bf16.mxu0 0
        %3283 = vmatpush2.bf16.msra.mxu0 0
        %3284 = vmatprep.subr.bf16.mxu0 0
        %3285 = vmatpush2.bf16.msra.mxu0 0
        %3286 = vmatprep.subr.bf16.mxu0 0
        %3287 = vmatpush2.bf16.msra.mxu0 0
        %3288 = vmatprep.subr.bf16.mxu0 0
        %3289 = vmatpush2.bf16.msra.mxu0 0
        %3290 = vmatprep.mubr.bf16.mxu0 0
        %3291 = vmatmul.mubr.bf16.gmra.mxu0 %v3140
        %v3292 = vpop.f32.mrf.mxu0
        %v3293 = vadd.f32 0.0, %v3292
        %v3294 = vpop.f32.mrf.mxu0
        %v3295 = vpop.f32.mrf.mxu0
        %v3296 = vadd.f32 0.0, %v3295
        %v3297 = vpop.f32.mrf.mxu0
        %3298 = vdwg.mxu0
        %v3301 = vrot.slane %v3293, 4
        %v3302 = vrot.slane %v3296, 4
        %v3303 = vsel %vm1304, %v3301, %v3302
        %v3306 = vld [vmem:[#allocation23] sm:$0x1]
        %v3308 = vlaneseq
        %v3309 = vshrl.u32 %v3308, 7
        %v3310 = vsub.s32 0, %v3309
        %v3311 = vrot.slane %v3306, %v3310
        %3313 = vmatprep.subr.bf16.mxu0 0
        %3314 = vmatpush1.bf16.msra.mxu0 0
        %3315 = vmatprep.subr.bf16.mxu0 0
        %3316 = vmatpush1.bf16.msra.mxu0 0
        %3317 = vmatprep.subr.bf16.mxu0 0
        %3318 = vmatpush1.bf16.msra.mxu0 0
        %3319 = vmatprep.subr.bf16.mxu0 0
        %3320 = vmatpush1.bf16.msra.mxu0 0
        %3321 = vmatprep.subr.bf16.mxu0 0
        %3322 = vmatpush1.bf16.msra.mxu0 0
        %3323 = vmatprep.subr.bf16.mxu0 0
        %3324 = vmatpush1.bf16.msra.mxu0 0
        %3325 = vmatprep.subr.bf16.mxu0 0
        %3326 = vmatpush1.bf16.msra.mxu0 %v3255
        %3327 = vmatprep.subr.bf16.mxu0 0
        %3328 = vmatpush1.bf16.msra.mxu0 %v3254
        %3329 = vmatprep.subr.bf16.mxu0 0
        %3330 = vmatpush2.bf16.msra.mxu0 0
        %3331 = vmatprep.subr.bf16.mxu0 0
        %3332 = vmatpush2.bf16.msra.mxu0 0
        %3333 = vmatprep.subr.bf16.mxu0 0
        %3334 = vmatpush2.bf16.msra.mxu0 0
        %3335 = vmatprep.subr.bf16.mxu0 0
        %3336 = vmatpush2.bf16.msra.mxu0 0
        %3337 = vmatprep.subr.bf16.mxu0 0
        %3338 = vmatpush2.bf16.msra.mxu0 0
        %3339 = vmatprep.subr.bf16.mxu0 0
        %3340 = vmatpush2.bf16.msra.mxu0 0
        %3341 = vmatprep.subr.bf16.mxu0 0
        %3342 = vmatpush2.bf16.msra.mxu0 0
        %3343 = vmatprep.subr.bf16.mxu0 0
        %3344 = vmatpush2.bf16.msra.mxu0 0
        %3345 = vmatprep.mubr.bf16.mxu0 0
        %3346 = vmatmul.mubr.bf16.gmra.mxu0 %v1319
        %v3347 = vpop.f32.mrf.mxu0
        %v3348 = vadd.f32 %v3311, %v3347
        %v3349 = vpop.f32.mrf.mxu0
        %v3350 = vpop.f32.mrf.mxu0
        %v3351 = vadd.f32 %v3311, %v3350
        %v3352 = vpop.f32.mrf.mxu0
        %3353 = vdwg.mxu0
        %v3354 = vadd.f32 %v3293, %v3348
        %v3355 = vadd.f32 %v3296, %v3351
        %v3356 = vadd.f32 %v3303, %v3348
        %v3357 = vadd.f32 %v3302, %v3351
        %v3359 = vcombine.high %v3117, %v3117
        %v3361 = vmul.f32 %v3117, 0.35355338
        %v3362 = vmul.f32 %v3359, 0.35355338
        %v3364 = vsel %vm1487, %v3361, 0
        %v3367 = vsel %vm1487, %v3238, 0
        %v3370 = vsel %vm1487, %v3239, 0
        %3372 = vmatprep.subr.mxu0 0.0
        %3373 = vmatpush1.xpose.msra.mxu0 0.0
        %3374 = vmatprep.subr.mxu0 0.0
        %3375 = vmatpush1.xpose.msra.mxu0 0.0
        %3376 = vmatprep.subr.mxu0 0.0
        %3377 = vmatpush1.xpose.msra.mxu0 0.0
        %3378 = vmatprep.subr.mxu0 0.0
        %3379 = vmatpush1.xpose.msra.mxu0 0.0
        %3380 = vmatprep.subr.mxu0 0.0
        %3381 = vmatpush1.xpose.msra.mxu0 0.0
        %3382 = vmatprep.subr.mxu0 0.0
        %3383 = vmatpush1.xpose.msra.mxu0 0.0
        %3384 = vmatprep.subr.mxu0 0.0
        %3385 = vmatpush1.xpose.msra.mxu0 0.0
        %3386 = vmatprep.subr.mxu0 0.0
        %3387 = vmatpush1.xpose.msra.mxu0 0.0
        %3388 = vmatprep.subr.mxu0 0.0
        %3389 = vmatpush1.xpose.msra.mxu0 0.0
        %3390 = vmatprep.subr.mxu0 0.0
        %3391 = vmatpush1.xpose.msra.mxu0 0.0
        %3392 = vmatprep.subr.mxu0 0.0
        %3393 = vmatpush1.xpose.msra.mxu0 0.0
        %3394 = vmatprep.subr.mxu0 0.0
        %3395 = vmatpush1.xpose.msra.mxu0 0.0
        %3396 = vmatprep.subr.mxu0 0.0
        %3397 = vmatpush1.xpose.msra.mxu0 0.0
        %3398 = vmatprep.subr.mxu0 0.0
        %3399 = vmatpush1.xpose.msra.mxu0 0.0
        %3400 = vmatprep.subr.mxu0 0.0
        %3401 = vmatpush1.xpose.msra.mxu0 %v3370
        %3402 = vmatprep.subr.mxu0 0.0
        %3403 = vmatpush1.xpose.msra.mxu0 %v3367
        %3404 = vmatprep.subr.mxu0 0.0
        %3405 = vmatpush2.xpose.msra.mxu0 0.0
        %3406 = vmatprep.subr.mxu0 0.0
        %3407 = vmatpush2.xpose.msra.mxu0 0.0
        %3408 = vmatprep.subr.mxu0 0.0
        %3409 = vmatpush2.xpose.msra.mxu0 0.0
        %3410 = vmatprep.subr.mxu0 0.0
        %3411 = vmatpush2.xpose.msra.mxu0 0.0
        %3412 = vmatprep.subr.mxu0 0.0
        %3413 = vmatpush2.xpose.msra.mxu0 0.0
        %3414 = vmatprep.subr.mxu0 0.0
        %3415 = vmatpush2.xpose.msra.mxu0 0.0
        %3416 = vmatprep.subr.mxu0 0.0
        %3417 = vmatpush2.xpose.msra.mxu0 0.0
        %3418 = vmatprep.subr.mxu0 0.0
        %3419 = vmatpush2.xpose.msra.mxu0 0.0
        %3420 = vmatprep.subr.mxu0 0.0
        %3421 = vmatpush2.xpose.msra.mxu0 0.0
        %3422 = vmatprep.subr.mxu0 0.0
        %3423 = vmatpush2.xpose.msra.mxu0 0.0
        %3424 = vmatprep.subr.mxu0 0.0
        %3425 = vmatpush2.xpose.msra.mxu0 0.0
        %3426 = vmatprep.subr.mxu0 0.0
        %3427 = vmatpush2.xpose.msra.mxu0 0.0
        %3428 = vmatprep.subr.mxu0 0.0
        %3429 = vmatpush2.xpose.msra.mxu0 0.0
        %3430 = vmatprep.subr.mxu0 0.0
        %3431 = vmatpush2.xpose.msra.mxu0 0.0
        %3432 = vmatprep.subr.mxu0 0.0
        %3433 = vmatpush2.xpose.msra.mxu0 0.0
        %3434 = vmatprep.subr.mxu0 0.0
        %3435 = vmatpush2.xpose.msra.mxu0 0.0
        %3436 = vmatprep.mubr.f32.mxu0 0.0
        %3437 = vmatmul.mubr.f32.gmra.mxu0 %v3364
        %v3438 = vpop.f32.mrf.mxu0
        %v3439 = vadd.f32 0.0, %v3438
        %v3440 = vpop.f32.mrf.mxu0
        %3441 = vdwg.mxu0
        %v3443 = vsel %vm1487, %v3362, 0
        %v3446 = vsel %vm1487, %v3240, 0
        %v3449 = vsel %vm1487, %v3241, 0
        %3451 = vmatprep.subr.mxu0 0.0
        %3452 = vmatpush1.xpose.msra.mxu0 0.0
        %3453 = vmatprep.subr.mxu0 0.0
        %3454 = vmatpush1.xpose.msra.mxu0 0.0
        %3455 = vmatprep.subr.mxu0 0.0
        %3456 = vmatpush1.xpose.msra.mxu0 0.0
        %3457 = vmatprep.subr.mxu0 0.0
        %3458 = vmatpush1.xpose.msra.mxu0 0.0
        %3459 = vmatprep.subr.mxu0 0.0
        %3460 = vmatpush1.xpose.msra.mxu0 0.0
        %3461 = vmatprep.subr.mxu0 0.0
        %3462 = vmatpush1.xpose.msra.mxu0 0.0
        %3463 = vmatprep.subr.mxu0 0.0
        %3464 = vmatpush1.xpose.msra.mxu0 0.0
        %3465 = vmatprep.subr.mxu0 0.0
        %3466 = vmatpush1.xpose.msra.mxu0 0.0
        %3467 = vmatprep.subr.mxu0 0.0
        %3468 = vmatpush1.xpose.msra.mxu0 0.0
        %3469 = vmatprep.subr.mxu0 0.0
        %3470 = vmatpush1.xpose.msra.mxu0 0.0
        %3471 = vmatprep.subr.mxu0 0.0
        %3472 = vmatpush1.xpose.msra.mxu0 0.0
        %3473 = vmatprep.subr.mxu0 0.0
        %3474 = vmatpush1.xpose.msra.mxu0 0.0
        %3475 = vmatprep.subr.mxu0 0.0
        %3476 = vmatpush1.xpose.msra.mxu0 0.0
        %3477 = vmatprep.subr.mxu0 0.0
        %3478 = vmatpush1.xpose.msra.mxu0 0.0
        %3479 = vmatprep.subr.mxu0 0.0
        %3480 = vmatpush1.xpose.msra.mxu0 %v3449
        %3481 = vmatprep.subr.mxu0 0.0
        %3482 = vmatpush1.xpose.msra.mxu0 %v3446
        %3483 = vmatprep.subr.mxu0 0.0
        %3484 = vmatpush2.xpose.msra.mxu0 0.0
        %3485 = vmatprep.subr.mxu0 0.0
        %3486 = vmatpush2.xpose.msra.mxu0 0.0
        %3487 = vmatprep.subr.mxu0 0.0
        %3488 = vmatpush2.xpose.msra.mxu0 0.0
        %3489 = vmatprep.subr.mxu0 0.0
        %3490 = vmatpush2.xpose.msra.mxu0 0.0
        %3491 = vmatprep.subr.mxu0 0.0
        %3492 = vmatpush2.xpose.msra.mxu0 0.0
        %3493 = vmatprep.subr.mxu0 0.0
        %3494 = vmatpush2.xpose.msra.mxu0 0.0
        %3495 = vmatprep.subr.mxu0 0.0
        %3496 = vmatpush2.xpose.msra.mxu0 0.0
        %3497 = vmatprep.subr.mxu0 0.0
        %3498 = vmatpush2.xpose.msra.mxu0 0.0
        %3499 = vmatprep.subr.mxu0 0.0
        %3500 = vmatpush2.xpose.msra.mxu0 0.0
        %3501 = vmatprep.subr.mxu0 0.0
        %3502 = vmatpush2.xpose.msra.mxu0 0.0
        %3503 = vmatprep.subr.mxu0 0.0
        %3504 = vmatpush2.xpose.msra.mxu0 0.0
        %3505 = vmatprep.subr.mxu0 0.0
        %3506 = vmatpush2.xpose.msra.mxu0 0.0
        %3507 = vmatprep.subr.mxu0 0.0
        %3508 = vmatpush2.xpose.msra.mxu0 0.0
        %3509 = vmatprep.subr.mxu0 0.0
        %3510 = vmatpush2.xpose.msra.mxu0 0.0
        %3511 = vmatprep.subr.mxu0 0.0
        %3512 = vmatpush2.xpose.msra.mxu0 0.0
        %3513 = vmatprep.subr.mxu0 0.0
        %3514 = vmatpush2.xpose.msra.mxu0 0.0
        %3515 = vmatprep.mubr.f32.mxu0 0.0
        %3516 = vmatmul.mubr.f32.gmra.mxu0 %v3443
        %v3517 = vpop.f32.mrf.mxu0
        %v3518 = vadd.f32 0.0, %v3517
        %v3519 = vpop.f32.mrf.mxu0
        %3520 = vdwg.mxu0
        %v3521 = vsel %vm1646, %v3439, -inf
        %3522 = vmax.xlane.f32.xlu0 %v3521
        %v3523 = vpop.xlane.xlu0 %3522
        %v3524 = vsel %vm1646, %v3518, -inf
        %3525 = vmax.xlane.f32.xlu0 %v3524
        %v3526 = vpop.xlane.xlu0 %3525
        %v3527 = vsub.f32 %v3439, %v3523
        %v3528 = vsub.f32 %v3518, %v3526
        %v3529 = vmul.f32 %v3527, 1.442695
        %v3530 = vpow.pop %v3529
        %v3531 = vmul.f32 %v3528, 1.442695
        %v3532 = vpow.pop %v3531
        %v3533 = vsel %vm1646, %v3530, 0.0
        %3534 = vadd.xlane.f32.xlu0 %v3533
        %v3535 = vpop.xlane.xlu0 %3534
        %v3536 = vsel %vm1646, %v3532, 0.0
        %3537 = vadd.xlane.f32.xlu0 %v3536
        %v3538 = vpop.xlane.xlu0 %3537
        %v3539 = vrcp.pop %v3535
        %v3540 = vrcp.pop %v3538
        %v3541 = vmul.f32 %v3530, %v3539
        %v3542 = vmul.f32 %v3532, %v3540
        %v3544 = vsel %vm1669, %v3541, 0
        %v3547 = vsel %vm1304, %v3355, 0
        %3549 = vmatprep.subr.mxu0 0.0
        %3550 = vmatpush1.msra.mxu0 0.0
        %3551 = vmatprep.subr.mxu0 0.0
        %3552 = vmatpush1.msra.mxu0 0.0
        %3553 = vmatprep.subr.mxu0 0.0
        %3554 = vmatpush1.msra.mxu0 0.0
        %3555 = vmatprep.subr.mxu0 0.0
        %3556 = vmatpush1.msra.mxu0 0.0
        %3557 = vmatprep.subr.mxu0 0.0
        %3558 = vmatpush1.msra.mxu0 0.0
        %3559 = vmatprep.subr.mxu0 0.0
        %3560 = vmatpush1.msra.mxu0 0.0
        %3561 = vmatprep.subr.mxu0 0.0
        %3562 = vmatpush1.msra.mxu0 0.0
        %3563 = vmatprep.subr.mxu0 0.0
        %3564 = vmatpush1.msra.mxu0 0.0
        %3565 = vmatprep.subr.mxu0 0.0
        %3566 = vmatpush1.msra.mxu0 0.0
        %3567 = vmatprep.subr.mxu0 0.0
        %3568 = vmatpush1.msra.mxu0 0.0
        %3569 = vmatprep.subr.mxu0 0.0
        %3570 = vmatpush1.msra.mxu0 0.0
        %3571 = vmatprep.subr.mxu0 0.0
        %3572 = vmatpush1.msra.mxu0 0.0
        %3573 = vmatprep.subr.mxu0 0.0
        %3574 = vmatpush1.msra.mxu0 0.0
        %3575 = vmatprep.subr.mxu0 0.0
        %3576 = vmatpush1.msra.mxu0 0.0
        %3577 = vmatprep.subr.mxu0 0.0
        %3578 = vmatpush1.msra.mxu0 %v3547
        %3579 = vmatprep.subr.mxu0 0.0
        %3580 = vmatpush1.msra.mxu0 %v3354
        %3581 = vmatprep.subr.mxu0 0.0
        %3582 = vmatpush2.msra.mxu0 0.0
        %3583 = vmatprep.subr.mxu0 0.0
        %3584 = vmatpush2.msra.mxu0 0.0
        %3585 = vmatprep.subr.mxu0 0.0
        %3586 = vmatpush2.msra.mxu0 0.0
        %3587 = vmatprep.subr.mxu0 0.0
        %3588 = vmatpush2.msra.mxu0 0.0
        %3589 = vmatprep.subr.mxu0 0.0
        %3590 = vmatpush2.msra.mxu0 0.0
        %3591 = vmatprep.subr.mxu0 0.0
        %3592 = vmatpush2.msra.mxu0 0.0
        %3593 = vmatprep.subr.mxu0 0.0
        %3594 = vmatpush2.msra.mxu0 0.0
        %3595 = vmatprep.subr.mxu0 0.0
        %3596 = vmatpush2.msra.mxu0 0.0
        %3597 = vmatprep.subr.mxu0 0.0
        %3598 = vmatpush2.msra.mxu0 0.0
        %3599 = vmatprep.subr.mxu0 0.0
        %3600 = vmatpush2.msra.mxu0 0.0
        %3601 = vmatprep.subr.mxu0 0.0
        %3602 = vmatpush2.msra.mxu0 0.0
        %3603 = vmatprep.subr.mxu0 0.0
        %3604 = vmatpush2.msra.mxu0 0.0
        %3605 = vmatprep.subr.mxu0 0.0
        %3606 = vmatpush2.msra.mxu0 0.0
        %3607 = vmatprep.subr.mxu0 0.0
        %3608 = vmatpush2.msra.mxu0 0.0
        %3609 = vmatprep.subr.mxu0 0.0
        %3610 = vmatpush2.msra.mxu0 0.0
        %3611 = vmatprep.subr.mxu0 0.0
        %3612 = vmatpush2.msra.mxu0 0.0
        %3613 = vmatprep.mubr.f32.mxu0 0.0
        %3614 = vmatmul.mubr.f32.gmra.mxu0 %v3544
        %v3615 = vpop.f32.mrf.mxu0
        %v3616 = vadd.f32 0.0, %v3615
        %v3617 = vpop.f32.mrf.mxu0
        %3618 = vdwg.mxu0
        %v3620 = vsel %vm1669, %v3542, 0
        %v3623 = vsel %vm1304, %v3357, 0
        %3625 = vmatprep.subr.mxu0 0.0
        %3626 = vmatpush1.msra.mxu0 0.0
        %3627 = vmatprep.subr.mxu0 0.0
        %3628 = vmatpush1.msra.mxu0 0.0
        %3629 = vmatprep.subr.mxu0 0.0
        %3630 = vmatpush1.msra.mxu0 0.0
        %3631 = vmatprep.subr.mxu0 0.0
        %3632 = vmatpush1.msra.mxu0 0.0
        %3633 = vmatprep.subr.mxu0 0.0
        %3634 = vmatpush1.msra.mxu0 0.0
        %3635 = vmatprep.subr.mxu0 0.0
        %3636 = vmatpush1.msra.mxu0 0.0
        %3637 = vmatprep.subr.mxu0 0.0
        %3638 = vmatpush1.msra.mxu0 0.0
        %3639 = vmatprep.subr.mxu0 0.0
        %3640 = vmatpush1.msra.mxu0 0.0
        %3641 = vmatprep.subr.mxu0 0.0
        %3642 = vmatpush1.msra.mxu0 0.0
        %3643 = vmatprep.subr.mxu0 0.0
        %3644 = vmatpush1.msra.mxu0 0.0
        %3645 = vmatprep.subr.mxu0 0.0
        %3646 = vmatpush1.msra.mxu0 0.0
        %3647 = vmatprep.subr.mxu0 0.0
        %3648 = vmatpush1.msra.mxu0 0.0
        %3649 = vmatprep.subr.mxu0 0.0
        %3650 = vmatpush1.msra.mxu0 0.0
        %3651 = vmatprep.subr.mxu0 0.0
        %3652 = vmatpush1.msra.mxu0 0.0
        %3653 = vmatprep.subr.mxu0 0.0
        %3654 = vmatpush1.msra.mxu0 %v3623
        %3655 = vmatprep.subr.mxu0 0.0
        %3656 = vmatpush1.msra.mxu0 %v3356
        %3657 = vmatprep.subr.mxu0 0.0
        %3658 = vmatpush2.msra.mxu0 0.0
        %3659 = vmatprep.subr.mxu0 0.0
        %3660 = vmatpush2.msra.mxu0 0.0
        %3661 = vmatprep.subr.mxu0 0.0
        %3662 = vmatpush2.msra.mxu0 0.0
        %3663 = vmatprep.subr.mxu0 0.0
        %3664 = vmatpush2.msra.mxu0 0.0
        %3665 = vmatprep.subr.mxu0 0.0
        %3666 = vmatpush2.msra.mxu0 0.0
        %3667 = vmatprep.subr.mxu0 0.0
        %3668 = vmatpush2.msra.mxu0 0.0
        %3669 = vmatprep.subr.mxu0 0.0
        %3670 = vmatpush2.msra.mxu0 0.0
        %3671 = vmatprep.subr.mxu0 0.0
        %3672 = vmatpush2.msra.mxu0 0.0
        %3673 = vmatprep.subr.mxu0 0.0
        %3674 = vmatpush2.msra.mxu0 0.0
        %3675 = vmatprep.subr.mxu0 0.0
        %3676 = vmatpush2.msra.mxu0 0.0
        %3677 = vmatprep.subr.mxu0 0.0
        %3678 = vmatpush2.msra.mxu0 0.0
        %3679 = vmatprep.subr.mxu0 0.0
        %3680 = vmatpush2.msra.mxu0 0.0
        %3681 = vmatprep.subr.mxu0 0.0
        %3682 = vmatpush2.msra.mxu0 0.0
        %3683 = vmatprep.subr.mxu0 0.0
        %3684 = vmatpush2.msra.mxu0 0.0
        %3685 = vmatprep.subr.mxu0 0.0
        %3686 = vmatpush2.msra.mxu0 0.0
        %3687 = vmatprep.subr.mxu0 0.0
        %3688 = vmatpush2.msra.mxu0 0.0
        %3689 = vmatprep.mubr.f32.mxu0 0.0
        %3690 = vmatmul.mubr.f32.gmra.mxu0 %v3620
        %v3691 = vpop.f32.mrf.mxu0
        %v3692 = vadd.f32 0.0, %v3691
        %v3693 = vpop.f32.mrf.mxu0
        %3694 = vdwg.mxu0
        %3695 = vrot.lane.b32.xlu0 %v3361, 120
        %v3696 = vpop.permute.xlu0 %3695
        %3697 = vrot.lane.b32.xlu0 %v3238, 120
        %v3698 = vpop.permute.xlu0 %3697
        %3699 = vrot.lane.b32.xlu0 %v3239, 120
        %v3700 = vpop.permute.xlu0 %3699
        %v3701 = vsel %vm1487, %v3696, 0
        %v3703 = vsel %vm1487, %v3698, 0
        %v3705 = vsel %vm1487, %v3700, 0
        %3707 = vmatprep.subr.mxu0 0.0
        %3708 = vmatpush1.xpose.msra.mxu0 0.0
        %3709 = vmatprep.subr.mxu0 0.0
        %3710 = vmatpush1.xpose.msra.mxu0 0.0
        %3711 = vmatprep.subr.mxu0 0.0
        %3712 = vmatpush1.xpose.msra.mxu0 0.0
        %3713 = vmatprep.subr.mxu0 0.0
        %3714 = vmatpush1.xpose.msra.mxu0 0.0
        %3715 = vmatprep.subr.mxu0 0.0
        %3716 = vmatpush1.xpose.msra.mxu0 0.0
        %3717 = vmatprep.subr.mxu0 0.0
        %3718 = vmatpush1.xpose.msra.mxu0 0.0
        %3719 = vmatprep.subr.mxu0 0.0
        %3720 = vmatpush1.xpose.msra.mxu0 0.0
        %3721 = vmatprep.subr.mxu0 0.0
        %3722 = vmatpush1.xpose.msra.mxu0 0.0
        %3723 = vmatprep.subr.mxu0 0.0
        %3724 = vmatpush1.xpose.msra.mxu0 0.0
        %3725 = vmatprep.subr.mxu0 0.0
        %3726 = vmatpush1.xpose.msra.mxu0 0.0
        %3727 = vmatprep.subr.mxu0 0.0
        %3728 = vmatpush1.xpose.msra.mxu0 0.0
        %3729 = vmatprep.subr.mxu0 0.0
        %3730 = vmatpush1.xpose.msra.mxu0 0.0
        %3731 = vmatprep.subr.mxu0 0.0
        %3732 = vmatpush1.xpose.msra.mxu0 0.0
        %3733 = vmatprep.subr.mxu0 0.0
        %3734 = vmatpush1.xpose.msra.mxu0 0.0
        %3735 = vmatprep.subr.mxu0 0.0
        %3736 = vmatpush1.xpose.msra.mxu0 %v3705
        %3737 = vmatprep.subr.mxu0 0.0
        %3738 = vmatpush1.xpose.msra.mxu0 %v3703
        %3739 = vmatprep.subr.mxu0 0.0
        %3740 = vmatpush2.xpose.msra.mxu0 0.0
        %3741 = vmatprep.subr.mxu0 0.0
        %3742 = vmatpush2.xpose.msra.mxu0 0.0
        %3743 = vmatprep.subr.mxu0 0.0
        %3744 = vmatpush2.xpose.msra.mxu0 0.0
        %3745 = vmatprep.subr.mxu0 0.0
        %3746 = vmatpush2.xpose.msra.mxu0 0.0
        %3747 = vmatprep.subr.mxu0 0.0
        %3748 = vmatpush2.xpose.msra.mxu0 0.0
        %3749 = vmatprep.subr.mxu0 0.0
        %3750 = vmatpush2.xpose.msra.mxu0 0.0
        %3751 = vmatprep.subr.mxu0 0.0
        %3752 = vmatpush2.xpose.msra.mxu0 0.0
        %3753 = vmatprep.subr.mxu0 0.0
        %3754 = vmatpush2.xpose.msra.mxu0 0.0
        %3755 = vmatprep.subr.mxu0 0.0
        %3756 = vmatpush2.xpose.msra.mxu0 0.0
        %3757 = vmatprep.subr.mxu0 0.0
        %3758 = vmatpush2.xpose.msra.mxu0 0.0
        %3759 = vmatprep.subr.mxu0 0.0
        %3760 = vmatpush2.xpose.msra.mxu0 0.0
        %3761 = vmatprep.subr.mxu0 0.0
        %3762 = vmatpush2.xpose.msra.mxu0 0.0
        %3763 = vmatprep.subr.mxu0 0.0
        %3764 = vmatpush2.xpose.msra.mxu0 0.0
        %3765 = vmatprep.subr.mxu0 0.0
        %3766 = vmatpush2.xpose.msra.mxu0 0.0
        %3767 = vmatprep.subr.mxu0 0.0
        %3768 = vmatpush2.xpose.msra.mxu0 0.0
        %3769 = vmatprep.subr.mxu0 0.0
        %3770 = vmatpush2.xpose.msra.mxu0 0.0
        %3771 = vmatprep.mubr.f32.mxu0 0.0
        %3772 = vmatmul.mubr.f32.gmra.mxu0 %v3701
        %v3773 = vpop.f32.mrf.mxu0
        %v3774 = vadd.f32 0.0, %v3773
        %v3775 = vpop.f32.mrf.mxu0
        %3776 = vdwg.mxu0
        %3777 = vrot.lane.b32.xlu0 %v3362, 120
        %v3778 = vpop.permute.xlu0 %3777
        %3779 = vrot.lane.b32.xlu0 %v3240, 120
        %v3780 = vpop.permute.xlu0 %3779
        %3781 = vrot.lane.b32.xlu0 %v3241, 120
        %v3782 = vpop.permute.xlu0 %3781
        %v3783 = vsel %vm1487, %v3778, 0
        %v3785 = vsel %vm1487, %v3780, 0
        %v3787 = vsel %vm1487, %v3782, 0
        %3789 = vmatprep.subr.mxu0 0.0
        %3790 = vmatpush1.xpose.msra.mxu0 0.0
        %3791 = vmatprep.subr.mxu0 0.0
        %3792 = vmatpush1.xpose.msra.mxu0 0.0
        %3793 = vmatprep.subr.mxu0 0.0
        %3794 = vmatpush1.xpose.msra.mxu0 0.0
        %3795 = vmatprep.subr.mxu0 0.0
        %3796 = vmatpush1.xpose.msra.mxu0 0.0
        %3797 = vmatprep.subr.mxu0 0.0
        %3798 = vmatpush1.xpose.msra.mxu0 0.0
        %3799 = vmatprep.subr.mxu0 0.0
        %3800 = vmatpush1.xpose.msra.mxu0 0.0
        %3801 = vmatprep.subr.mxu0 0.0
        %3802 = vmatpush1.xpose.msra.mxu0 0.0
        %3803 = vmatprep.subr.mxu0 0.0
        %3804 = vmatpush1.xpose.msra.mxu0 0.0
        %3805 = vmatprep.subr.mxu0 0.0
        %3806 = vmatpush1.xpose.msra.mxu0 0.0
        %3807 = vmatprep.subr.mxu0 0.0
        %3808 = vmatpush1.xpose.msra.mxu0 0.0
        %3809 = vmatprep.subr.mxu0 0.0
        %3810 = vmatpush1.xpose.msra.mxu0 0.0
        %3811 = vmatprep.subr.mxu0 0.0
        %3812 = vmatpush1.xpose.msra.mxu0 0.0
        %3813 = vmatprep.subr.mxu0 0.0
        %3814 = vmatpush1.xpose.msra.mxu0 0.0
        %3815 = vmatprep.subr.mxu0 0.0
        %3816 = vmatpush1.xpose.msra.mxu0 0.0
        %3817 = vmatprep.subr.mxu0 0.0
        %3818 = vmatpush1.xpose.msra.mxu0 %v3787
        %3819 = vmatprep.subr.mxu0 0.0
        %3820 = vmatpush1.xpose.msra.mxu0 %v3785
        %3821 = vmatprep.subr.mxu0 0.0
        %3822 = vmatpush2.xpose.msra.mxu0 0.0
        %3823 = vmatprep.subr.mxu0 0.0
        %3824 = vmatpush2.xpose.msra.mxu0 0.0
        %3825 = vmatprep.subr.mxu0 0.0
        %3826 = vmatpush2.xpose.msra.mxu0 0.0
        %3827 = vmatprep.subr.mxu0 0.0
        %3828 = vmatpush2.xpose.msra.mxu0 0.0
        %3829 = vmatprep.subr.mxu0 0.0
        %3830 = vmatpush2.xpose.msra.mxu0 0.0
        %3831 = vmatprep.subr.mxu0 0.0
        %3832 = vmatpush2.xpose.msra.mxu0 0.0
        %3833 = vmatprep.subr.mxu0 0.0
        %3834 = vmatpush2.xpose.msra.mxu0 0.0
        %3835 = vmatprep.subr.mxu0 0.0
        %3836 = vmatpush2.xpose.msra.mxu0 0.0
        %3837 = vmatprep.subr.mxu0 0.0
        %3838 = vmatpush2.xpose.msra.mxu0 0.0
        %3839 = vmatprep.subr.mxu0 0.0
        %3840 = vmatpush2.xpose.msra.mxu0 0.0
        %3841 = vmatprep.subr.mxu0 0.0
        %3842 = vmatpush2.xpose.msra.mxu0 0.0
        %3843 = vmatprep.subr.mxu0 0.0
        %3844 = vmatpush2.xpose.msra.mxu0 0.0
        %3845 = vmatprep.subr.mxu0 0.0
        %3846 = vmatpush2.xpose.msra.mxu0 0.0
        %3847 = vmatprep.subr.mxu0 0.0
        %3848 = vmatpush2.xpose.msra.mxu0 0.0
        %3849 = vmatprep.subr.mxu0 0.0
        %3850 = vmatpush2.xpose.msra.mxu0 0.0
        %3851 = vmatprep.subr.mxu0 0.0
        %3852 = vmatpush2.xpose.msra.mxu0 0.0
        %3853 = vmatprep.mubr.f32.mxu0 0.0
        %3854 = vmatmul.mubr.f32.gmra.mxu0 %v3783
        %v3855 = vpop.f32.mrf.mxu0
        %v3856 = vadd.f32 0.0, %v3855
        %v3857 = vpop.f32.mrf.mxu0
        %3858 = vdwg.mxu0
        %v3859 = vsel %vm1646, %v3774, -inf
        %3860 = vmax.xlane.f32.xlu0 %v3859
        %v3861 = vpop.xlane.xlu0 %3860
        %v3862 = vsel %vm1646, %v3856, -inf
        %3863 = vmax.xlane.f32.xlu0 %v3862
        %v3864 = vpop.xlane.xlu0 %3863
        %v3865 = vsub.f32 %v3774, %v3861
        %v3866 = vsub.f32 %v3856, %v3864
        %v3867 = vmul.f32 %v3865, 1.442695
        %v3868 = vpow.pop %v3867
        %v3869 = vmul.f32 %v3866, 1.442695
        %v3870 = vpow.pop %v3869
        %v3871 = vsel %vm1646, %v3868, 0.0
        %3872 = vadd.xlane.f32.xlu0 %v3871
        %v3873 = vpop.xlane.xlu0 %3872
        %v3874 = vsel %vm1646, %v3870, 0.0
        %3875 = vadd.xlane.f32.xlu0 %v3874
        %v3876 = vpop.xlane.xlu0 %3875
        %v3877 = vrcp.pop %v3873
        %v3878 = vrcp.pop %v3876
        %v3879 = vmul.f32 %v3868, %v3877
        %v3880 = vmul.f32 %v3870, %v3878
        %3882 = vrot.lane.b32.xlu0 %v3354, 120
        %v3883 = vpop.permute.xlu0 %3882
        %3884 = vrot.lane.b32.xlu0 %v3355, 120
        %v3885 = vpop.permute.xlu0 %3884
        %v3888 = vsel %vm1669, %v3879, 0
        %v3890 = vsel %vm1304, %v3885, 0
        %3892 = vmatprep.subr.mxu0 0.0
        %3893 = vmatpush1.msra.mxu0 0.0
        %3894 = vmatprep.subr.mxu0 0.0
        %3895 = vmatpush1.msra.mxu0 0.0
        %3896 = vmatprep.subr.mxu0 0.0
        %3897 = vmatpush1.msra.mxu0 0.0
        %3898 = vmatprep.subr.mxu0 0.0
        %3899 = vmatpush1.msra.mxu0 0.0
        %3900 = vmatprep.subr.mxu0 0.0
        %3901 = vmatpush1.msra.mxu0 0.0
        %3902 = vmatprep.subr.mxu0 0.0
        %3903 = vmatpush1.msra.mxu0 0.0
        %3904 = vmatprep.subr.mxu0 0.0
        %3905 = vmatpush1.msra.mxu0 0.0
        %3906 = vmatprep.subr.mxu0 0.0
        %3907 = vmatpush1.msra.mxu0 0.0
        %3908 = vmatprep.subr.mxu0 0.0
        %3909 = vmatpush1.msra.mxu0 0.0
        %3910 = vmatprep.subr.mxu0 0.0
        %3911 = vmatpush1.msra.mxu0 0.0
        %3912 = vmatprep.subr.mxu0 0.0
        %3913 = vmatpush1.msra.mxu0 0.0
        %3914 = vmatprep.subr.mxu0 0.0
        %3915 = vmatpush1.msra.mxu0 0.0
        %3916 = vmatprep.subr.mxu0 0.0
        %3917 = vmatpush1.msra.mxu0 0.0
        %3918 = vmatprep.subr.mxu0 0.0
        %3919 = vmatpush1.msra.mxu0 0.0
        %3920 = vmatprep.subr.mxu0 0.0
        %3921 = vmatpush1.msra.mxu0 %v3890
        %3922 = vmatprep.subr.mxu0 0.0
        %3923 = vmatpush1.msra.mxu0 %v3883
        %3924 = vmatprep.subr.mxu0 0.0
        %3925 = vmatpush2.msra.mxu0 0.0
        %3926 = vmatprep.subr.mxu0 0.0
        %3927 = vmatpush2.msra.mxu0 0.0
        %3928 = vmatprep.subr.mxu0 0.0
        %3929 = vmatpush2.msra.mxu0 0.0
        %3930 = vmatprep.subr.mxu0 0.0
        %3931 = vmatpush2.msra.mxu0 0.0
        %3932 = vmatprep.subr.mxu0 0.0
        %3933 = vmatpush2.msra.mxu0 0.0
        %3934 = vmatprep.subr.mxu0 0.0
        %3935 = vmatpush2.msra.mxu0 0.0
        %3936 = vmatprep.subr.mxu0 0.0
        %3937 = vmatpush2.msra.mxu0 0.0
        %3938 = vmatprep.subr.mxu0 0.0
        %3939 = vmatpush2.msra.mxu0 0.0
        %3940 = vmatprep.subr.mxu0 0.0
        %3941 = vmatpush2.msra.mxu0 0.0
        %3942 = vmatprep.subr.mxu0 0.0
        %3943 = vmatpush2.msra.mxu0 0.0
        %3944 = vmatprep.subr.mxu0 0.0
        %3945 = vmatpush2.msra.mxu0 0.0
        %3946 = vmatprep.subr.mxu0 0.0
        %3947 = vmatpush2.msra.mxu0 0.0
        %3948 = vmatprep.subr.mxu0 0.0
        %3949 = vmatpush2.msra.mxu0 0.0
        %3950 = vmatprep.subr.mxu0 0.0
        %3951 = vmatpush2.msra.mxu0 0.0
        %3952 = vmatprep.subr.mxu0 0.0
        %3953 = vmatpush2.msra.mxu0 0.0
        %3954 = vmatprep.subr.mxu0 0.0
        %3955 = vmatpush2.msra.mxu0 0.0
        %3956 = vmatprep.mubr.f32.mxu0 0.0
        %3957 = vmatmul.mubr.f32.gmra.mxu0 %v3888
        %v3958 = vpop.f32.mrf.mxu0
        %v3959 = vadd.f32 0.0, %v3958
        %v3960 = vpop.f32.mrf.mxu0
        %3961 = vdwg.mxu0
        %3963 = vrot.lane.b32.xlu0 %v3356, 120
        %v3964 = vpop.permute.xlu0 %3963
        %3965 = vrot.lane.b32.xlu0 %v3357, 120
        %v3966 = vpop.permute.xlu0 %3965
        %v3969 = vsel %vm1669, %v3880, 0
        %v3971 = vsel %vm1304, %v3966, 0
        %3973 = vmatprep.subr.mxu0 0.0
        %3974 = vmatpush1.msra.mxu0 0.0
        %3975 = vmatprep.subr.mxu0 0.0
        %3976 = vmatpush1.msra.mxu0 0.0
        %3977 = vmatprep.subr.mxu0 0.0
        %3978 = vmatpush1.msra.mxu0 0.0
        %3979 = vmatprep.subr.mxu0 0.0
        %3980 = vmatpush1.msra.mxu0 0.0
        %3981 = vmatprep.subr.mxu0 0.0
        %3982 = vmatpush1.msra.mxu0 0.0
        %3983 = vmatprep.subr.mxu0 0.0
        %3984 = vmatpush1.msra.mxu0 0.0
        %3985 = vmatprep.subr.mxu0 0.0
        %3986 = vmatpush1.msra.mxu0 0.0
        %3987 = vmatprep.subr.mxu0 0.0
        %3988 = vmatpush1.msra.mxu0 0.0
        %3989 = vmatprep.subr.mxu0 0.0
        %3990 = vmatpush1.msra.mxu0 0.0
        %3991 = vmatprep.subr.mxu0 0.0
        %3992 = vmatpush1.msra.mxu0 0.0
        %3993 = vmatprep.subr.mxu0 0.0
        %3994 = vmatpush1.msra.mxu0 0.0
        %3995 = vmatprep.subr.mxu0 0.0
        %3996 = vmatpush1.msra.mxu0 0.0
        %3997 = vmatprep.subr.mxu0 0.0
        %3998 = vmatpush1.msra.mxu0 0.0
        %3999 = vmatprep.subr.mxu0 0.0
        %4000 = vmatpush1.msra.mxu0 0.0
        %4001 = vmatprep.subr.mxu0 0.0
        %4002 = vmatpush1.msra.mxu0 %v3971
        %4003 = vmatprep.subr.mxu0 0.0
        %4004 = vmatpush1.msra.mxu0 %v3964
        %4005 = vmatprep.subr.mxu0 0.0
        %4006 = vmatpush2.msra.mxu0 0.0
        %4007 = vmatprep.subr.mxu0 0.0
        %4008 = vmatpush2.msra.mxu0 0.0
        %4009 = vmatprep.subr.mxu0 0.0
        %4010 = vmatpush2.msra.mxu0 0.0
        %4011 = vmatprep.subr.mxu0 0.0
        %4012 = vmatpush2.msra.mxu0 0.0
        %4013 = vmatprep.subr.mxu0 0.0
        %4014 = vmatpush2.msra.mxu0 0.0
        %4015 = vmatprep.subr.mxu0 0.0
        %4016 = vmatpush2.msra.mxu0 0.0
        %4017 = vmatprep.subr.mxu0 0.0
        %4018 = vmatpush2.msra.mxu0 0.0
        %4019 = vmatprep.subr.mxu0 0.0
        %4020 = vmatpush2.msra.mxu0 0.0
        %4021 = vmatprep.subr.mxu0 0.0
        %4022 = vmatpush2.msra.mxu0 0.0
        %4023 = vmatprep.subr.mxu0 0.0
        %4024 = vmatpush2.msra.mxu0 0.0
        %4025 = vmatprep.subr.mxu0 0.0
        %4026 = vmatpush2.msra.mxu0 0.0
        %4027 = vmatprep.subr.mxu0 0.0
        %4028 = vmatpush2.msra.mxu0 0.0
        %4029 = vmatprep.subr.mxu0 0.0
        %4030 = vmatpush2.msra.mxu0 0.0
        %4031 = vmatprep.subr.mxu0 0.0
        %4032 = vmatpush2.msra.mxu0 0.0
        %4033 = vmatprep.subr.mxu0 0.0
        %4034 = vmatpush2.msra.mxu0 0.0
        %4035 = vmatprep.subr.mxu0 0.0
        %4036 = vmatpush2.msra.mxu0 0.0
        %4037 = vmatprep.mubr.f32.mxu0 0.0
        %4038 = vmatmul.mubr.f32.gmra.mxu0 %v3969
        %v4039 = vpop.f32.mrf.mxu0
        %v4040 = vadd.f32 0.0, %v4039
        %v4041 = vpop.f32.mrf.mxu0
        %4042 = vdwg.mxu0
        %4043 = vrot.lane.b32.xlu0 %v3361, 112
        %v4044 = vpop.permute.xlu0 %4043
        %4045 = vrot.lane.b32.xlu0 %v3238, 112
        %v4046 = vpop.permute.xlu0 %4045
        %4047 = vrot.lane.b32.xlu0 %v3239, 112
        %v4048 = vpop.permute.xlu0 %4047
        %v4049 = vsel %vm1487, %v4044, 0
        %v4051 = vsel %vm1487, %v4046, 0
        %v4053 = vsel %vm1487, %v4048, 0
        %4055 = vmatprep.subr.mxu0 0.0
        %4056 = vmatpush1.xpose.msra.mxu0 0.0
        %4057 = vmatprep.subr.mxu0 0.0
        %4058 = vmatpush1.xpose.msra.mxu0 0.0
        %4059 = vmatprep.subr.mxu0 0.0
        %4060 = vmatpush1.xpose.msra.mxu0 0.0
        %4061 = vmatprep.subr.mxu0 0.0
        %4062 = vmatpush1.xpose.msra.mxu0 0.0
        %4063 = vmatprep.subr.mxu0 0.0
        %4064 = vmatpush1.xpose.msra.mxu0 0.0
        %4065 = vmatprep.subr.mxu0 0.0
        %4066 = vmatpush1.xpose.msra.mxu0 0.0
        %4067 = vmatprep.subr.mxu0 0.0
        %4068 = vmatpush1.xpose.msra.mxu0 0.0
        %4069 = vmatprep.subr.mxu0 0.0
        %4070 = vmatpush1.xpose.msra.mxu0 0.0
        %4071 = vmatprep.subr.mxu0 0.0
        %4072 = vmatpush1.xpose.msra.mxu0 0.0
        %4073 = vmatprep.subr.mxu0 0.0
        %4074 = vmatpush1.xpose.msra.mxu0 0.0
        %4075 = vmatprep.subr.mxu0 0.0
        %4076 = vmatpush1.xpose.msra.mxu0 0.0
        %4077 = vmatprep.subr.mxu0 0.0
        %4078 = vmatpush1.xpose.msra.mxu0 0.0
        %4079 = vmatprep.subr.mxu0 0.0
        %4080 = vmatpush1.xpose.msra.mxu0 0.0
        %4081 = vmatprep.subr.mxu0 0.0
        %4082 = vmatpush1.xpose.msra.mxu0 0.0
        %4083 = vmatprep.subr.mxu0 0.0
        %4084 = vmatpush1.xpose.msra.mxu0 %v4053
        %4085 = vmatprep.subr.mxu0 0.0
        %4086 = vmatpush1.xpose.msra.mxu0 %v4051
        %4087 = vmatprep.subr.mxu0 0.0
        %4088 = vmatpush2.xpose.msra.mxu0 0.0
        %4089 = vmatprep.subr.mxu0 0.0
        %4090 = vmatpush2.xpose.msra.mxu0 0.0
        %4091 = vmatprep.subr.mxu0 0.0
        %4092 = vmatpush2.xpose.msra.mxu0 0.0
        %4093 = vmatprep.subr.mxu0 0.0
        %4094 = vmatpush2.xpose.msra.mxu0 0.0
        %4095 = vmatprep.subr.mxu0 0.0
        %4096 = vmatpush2.xpose.msra.mxu0 0.0
        %4097 = vmatprep.subr.mxu0 0.0
        %4098 = vmatpush2.xpose.msra.mxu0 0.0
        %4099 = vmatprep.subr.mxu0 0.0
        %4100 = vmatpush2.xpose.msra.mxu0 0.0
        %4101 = vmatprep.subr.mxu0 0.0
        %4102 = vmatpush2.xpose.msra.mxu0 0.0
        %4103 = vmatprep.subr.mxu0 0.0
        %4104 = vmatpush2.xpose.msra.mxu0 0.0
        %4105 = vmatprep.subr.mxu0 0.0
        %4106 = vmatpush2.xpose.msra.mxu0 0.0
        %4107 = vmatprep.subr.mxu0 0.0
        %4108 = vmatpush2.xpose.msra.mxu0 0.0
        %4109 = vmatprep.subr.mxu0 0.0
        %4110 = vmatpush2.xpose.msra.mxu0 0.0
        %4111 = vmatprep.subr.mxu0 0.0
        %4112 = vmatpush2.xpose.msra.mxu0 0.0
        %4113 = vmatprep.subr.mxu0 0.0
        %4114 = vmatpush2.xpose.msra.mxu0 0.0
        %4115 = vmatprep.subr.mxu0 0.0
        %4116 = vmatpush2.xpose.msra.mxu0 0.0
        %4117 = vmatprep.subr.mxu0 0.0
        %4118 = vmatpush2.xpose.msra.mxu0 0.0
        %4119 = vmatprep.mubr.f32.mxu0 0.0
        %4120 = vmatmul.mubr.f32.gmra.mxu0 %v4049
        %v4121 = vpop.f32.mrf.mxu0
        %v4122 = vadd.f32 0.0, %v4121
        %v4123 = vpop.f32.mrf.mxu0
        %4124 = vdwg.mxu0
        %4125 = vrot.lane.b32.xlu0 %v3362, 112
        %v4126 = vpop.permute.xlu0 %4125
        %4127 = vrot.lane.b32.xlu0 %v3240, 112
        %v4128 = vpop.permute.xlu0 %4127
        %4129 = vrot.lane.b32.xlu0 %v3241, 112
        %v4130 = vpop.permute.xlu0 %4129
        %v4131 = vsel %vm1487, %v4126, 0
        %v4133 = vsel %vm1487, %v4128, 0
        %v4135 = vsel %vm1487, %v4130, 0
        %4137 = vmatprep.subr.mxu0 0.0
        %4138 = vmatpush1.xpose.msra.mxu0 0.0
        %4139 = vmatprep.subr.mxu0 0.0
        %4140 = vmatpush1.xpose.msra.mxu0 0.0
        %4141 = vmatprep.subr.mxu0 0.0
        %4142 = vmatpush1.xpose.msra.mxu0 0.0
        %4143 = vmatprep.subr.mxu0 0.0
        %4144 = vmatpush1.xpose.msra.mxu0 0.0
        %4145 = vmatprep.subr.mxu0 0.0
        %4146 = vmatpush1.xpose.msra.mxu0 0.0
        %4147 = vmatprep.subr.mxu0 0.0
        %4148 = vmatpush1.xpose.msra.mxu0 0.0
        %4149 = vmatprep.subr.mxu0 0.0
        %4150 = vmatpush1.xpose.msra.mxu0 0.0
        %4151 = vmatprep.subr.mxu0 0.0
        %4152 = vmatpush1.xpose.msra.mxu0 0.0
        %4153 = vmatprep.subr.mxu0 0.0
        %4154 = vmatpush1.xpose.msra.mxu0 0.0
        %4155 = vmatprep.subr.mxu0 0.0
        %4156 = vmatpush1.xpose.msra.mxu0 0.0
        %4157 = vmatprep.subr.mxu0 0.0
        %4158 = vmatpush1.xpose.msra.mxu0 0.0
        %4159 = vmatprep.subr.mxu0 0.0
        %4160 = vmatpush1.xpose.msra.mxu0 0.0
        %4161 = vmatprep.subr.mxu0 0.0
        %4162 = vmatpush1.xpose.msra.mxu0 0.0
        %4163 = vmatprep.subr.mxu0 0.0
        %4164 = vmatpush1.xpose.msra.mxu0 0.0
        %4165 = vmatprep.subr.mxu0 0.0
        %4166 = vmatpush1.xpose.msra.mxu0 %v4135
        %4167 = vmatprep.subr.mxu0 0.0
        %4168 = vmatpush1.xpose.msra.mxu0 %v4133
        %4169 = vmatprep.subr.mxu0 0.0
        %4170 = vmatpush2.xpose.msra.mxu0 0.0
        %4171 = vmatprep.subr.mxu0 0.0
        %4172 = vmatpush2.xpose.msra.mxu0 0.0
        %4173 = vmatprep.subr.mxu0 0.0
        %4174 = vmatpush2.xpose.msra.mxu0 0.0
        %4175 = vmatprep.subr.mxu0 0.0
        %4176 = vmatpush2.xpose.msra.mxu0 0.0
        %4177 = vmatprep.subr.mxu0 0.0
        %4178 = vmatpush2.xpose.msra.mxu0 0.0
        %4179 = vmatprep.subr.mxu0 0.0
        %4180 = vmatpush2.xpose.msra.mxu0 0.0
        %4181 = vmatprep.subr.mxu0 0.0
        %4182 = vmatpush2.xpose.msra.mxu0 0.0
        %4183 = vmatprep.subr.mxu0 0.0
        %4184 = vmatpush2.xpose.msra.mxu0 0.0
        %4185 = vmatprep.subr.mxu0 0.0
        %4186 = vmatpush2.xpose.msra.mxu0 0.0
        %4187 = vmatprep.subr.mxu0 0.0
        %4188 = vmatpush2.xpose.msra.mxu0 0.0
        %4189 = vmatprep.subr.mxu0 0.0
        %4190 = vmatpush2.xpose.msra.mxu0 0.0
        %4191 = vmatprep.subr.mxu0 0.0
        %4192 = vmatpush2.xpose.msra.mxu0 0.0
        %4193 = vmatprep.subr.mxu0 0.0
        %4194 = vmatpush2.xpose.msra.mxu0 0.0
        %4195 = vmatprep.subr.mxu0 0.0
        %4196 = vmatpush2.xpose.msra.mxu0 0.0
        %4197 = vmatprep.subr.mxu0 0.0
        %4198 = vmatpush2.xpose.msra.mxu0 0.0
        %4199 = vmatprep.subr.mxu0 0.0
        %4200 = vmatpush2.xpose.msra.mxu0 0.0
        %4201 = vmatprep.mubr.f32.mxu0 0.0
        %4202 = vmatmul.mubr.f32.gmra.mxu0 %v4131
        %v4203 = vpop.f32.mrf.mxu0
        %v4204 = vadd.f32 0.0, %v4203
        %v4205 = vpop.f32.mrf.mxu0
        %4206 = vdwg.mxu0
        %v4207 = vsel %vm1646, %v4122, -inf
        %4208 = vmax.xlane.f32.xlu0 %v4207
        %v4209 = vpop.xlane.xlu0 %4208
        %v4210 = vsel %vm1646, %v4204, -inf
        %4211 = vmax.xlane.f32.xlu0 %v4210
        %v4212 = vpop.xlane.xlu0 %4211
        %v4213 = vsub.f32 %v4122, %v4209
        %v4214 = vsub.f32 %v4204, %v4212
        %v4215 = vmul.f32 %v4213, 1.442695
        %v4216 = vpow.pop %v4215
        %v4217 = vmul.f32 %v4214, 1.442695
        %v4218 = vpow.pop %v4217
        %v4219 = vsel %vm1646, %v4216, 0.0
        %4220 = vadd.xlane.f32.xlu0 %v4219
        %v4221 = vpop.xlane.xlu0 %4220
        %v4222 = vsel %vm1646, %v4218, 0.0
        %4223 = vadd.xlane.f32.xlu0 %v4222
        %v4224 = vpop.xlane.xlu0 %4223
        %v4225 = vrcp.pop %v4221
        %v4226 = vrcp.pop %v4224
        %v4227 = vmul.f32 %v4216, %v4225
        %v4228 = vmul.f32 %v4218, %v4226
        %4229 = vrot.lane.b32.xlu0 %v3354, 112
        %v4230 = vpop.permute.xlu0 %4229
        %4231 = vrot.lane.b32.xlu0 %v3355, 112
        %v4232 = vpop.permute.xlu0 %4231
        %v4235 = vsel %vm1669, %v4227, 0
        %v4237 = vsel %vm1304, %v4232, 0
        %4239 = vmatprep.subr.mxu0 0.0
        %4240 = vmatpush1.msra.mxu0 0.0
        %4241 = vmatprep.subr.mxu0 0.0
        %4242 = vmatpush1.msra.mxu0 0.0
        %4243 = vmatprep.subr.mxu0 0.0
        %4244 = vmatpush1.msra.mxu0 0.0
        %4245 = vmatprep.subr.mxu0 0.0
        %4246 = vmatpush1.msra.mxu0 0.0
        %4247 = vmatprep.subr.mxu0 0.0
        %4248 = vmatpush1.msra.mxu0 0.0
        %4249 = vmatprep.subr.mxu0 0.0
        %4250 = vmatpush1.msra.mxu0 0.0
        %4251 = vmatprep.subr.mxu0 0.0
        %4252 = vmatpush1.msra.mxu0 0.0
        %4253 = vmatprep.subr.mxu0 0.0
        %4254 = vmatpush1.msra.mxu0 0.0
        %4255 = vmatprep.subr.mxu0 0.0
        %4256 = vmatpush1.msra.mxu0 0.0
        %4257 = vmatprep.subr.mxu0 0.0
        %4258 = vmatpush1.msra.mxu0 0.0
        %4259 = vmatprep.subr.mxu0 0.0
        %4260 = vmatpush1.msra.mxu0 0.0
        %4261 = vmatprep.subr.mxu0 0.0
        %4262 = vmatpush1.msra.mxu0 0.0
        %4263 = vmatprep.subr.mxu0 0.0
        %4264 = vmatpush1.msra.mxu0 0.0
        %4265 = vmatprep.subr.mxu0 0.0
        %4266 = vmatpush1.msra.mxu0 0.0
        %4267 = vmatprep.subr.mxu0 0.0
        %4268 = vmatpush1.msra.mxu0 %v4237
        %4269 = vmatprep.subr.mxu0 0.0
        %4270 = vmatpush1.msra.mxu0 %v4230
        %4271 = vmatprep.subr.mxu0 0.0
        %4272 = vmatpush2.msra.mxu0 0.0
        %4273 = vmatprep.subr.mxu0 0.0
        %4274 = vmatpush2.msra.mxu0 0.0
        %4275 = vmatprep.subr.mxu0 0.0
        %4276 = vmatpush2.msra.mxu0 0.0
        %4277 = vmatprep.subr.mxu0 0.0
        %4278 = vmatpush2.msra.mxu0 0.0
        %4279 = vmatprep.subr.mxu0 0.0
        %4280 = vmatpush2.msra.mxu0 0.0
        %4281 = vmatprep.subr.mxu0 0.0
        %4282 = vmatpush2.msra.mxu0 0.0
        %4283 = vmatprep.subr.mxu0 0.0
        %4284 = vmatpush2.msra.mxu0 0.0
        %4285 = vmatprep.subr.mxu0 0.0
        %4286 = vmatpush2.msra.mxu0 0.0
        %4287 = vmatprep.subr.mxu0 0.0
        %4288 = vmatpush2.msra.mxu0 0.0
        %4289 = vmatprep.subr.mxu0 0.0
        %4290 = vmatpush2.msra.mxu0 0.0
        %4291 = vmatprep.subr.mxu0 0.0
        %4292 = vmatpush2.msra.mxu0 0.0
        %4293 = vmatprep.subr.mxu0 0.0
        %4294 = vmatpush2.msra.mxu0 0.0
        %4295 = vmatprep.subr.mxu0 0.0
        %4296 = vmatpush2.msra.mxu0 0.0
        %4297 = vmatprep.subr.mxu0 0.0
        %4298 = vmatpush2.msra.mxu0 0.0
        %4299 = vmatprep.subr.mxu0 0.0
        %4300 = vmatpush2.msra.mxu0 0.0
        %4301 = vmatprep.subr.mxu0 0.0
        %4302 = vmatpush2.msra.mxu0 0.0
        %4303 = vmatprep.mubr.f32.mxu0 0.0
        %4304 = vmatmul.mubr.f32.gmra.mxu0 %v4235
        %v4305 = vpop.f32.mrf.mxu0
        %v4306 = vadd.f32 0.0, %v4305
        %v4307 = vpop.f32.mrf.mxu0
        %4308 = vdwg.mxu0
        %4309 = vrot.lane.b32.xlu0 %v3356, 112
        %v4310 = vpop.permute.xlu0 %4309
        %4311 = vrot.lane.b32.xlu0 %v3357, 112
        %v4312 = vpop.permute.xlu0 %4311
        %v4315 = vsel %vm1669, %v4228, 0
        %v4317 = vsel %vm1304, %v4312, 0
        %4319 = vmatprep.subr.mxu0 0.0
        %4320 = vmatpush1.msra.mxu0 0.0
        %4321 = vmatprep.subr.mxu0 0.0
        %4322 = vmatpush1.msra.mxu0 0.0
        %4323 = vmatprep.subr.mxu0 0.0
        %4324 = vmatpush1.msra.mxu0 0.0
        %4325 = vmatprep.subr.mxu0 0.0
        %4326 = vmatpush1.msra.mxu0 0.0
        %4327 = vmatprep.subr.mxu0 0.0
        %4328 = vmatpush1.msra.mxu0 0.0
        %4329 = vmatprep.subr.mxu0 0.0
        %4330 = vmatpush1.msra.mxu0 0.0
        %4331 = vmatprep.subr.mxu0 0.0
        %4332 = vmatpush1.msra.mxu0 0.0
        %4333 = vmatprep.subr.mxu0 0.0
        %4334 = vmatpush1.msra.mxu0 0.0
        %4335 = vmatprep.subr.mxu0 0.0
        %4336 = vmatpush1.msra.mxu0 0.0
        %4337 = vmatprep.subr.mxu0 0.0
        %4338 = vmatpush1.msra.mxu0 0.0
        %4339 = vmatprep.subr.mxu0 0.0
        %4340 = vmatpush1.msra.mxu0 0.0
        %4341 = vmatprep.subr.mxu0 0.0
        %4342 = vmatpush1.msra.mxu0 0.0
        %4343 = vmatprep.subr.mxu0 0.0
        %4344 = vmatpush1.msra.mxu0 0.0
        %4345 = vmatprep.subr.mxu0 0.0
        %4346 = vmatpush1.msra.mxu0 0.0
        %4347 = vmatprep.subr.mxu0 0.0
        %4348 = vmatpush1.msra.mxu0 %v4317
        %4349 = vmatprep.subr.mxu0 0.0
        %4350 = vmatpush1.msra.mxu0 %v4310
        %4351 = vmatprep.subr.mxu0 0.0
        %4352 = vmatpush2.msra.mxu0 0.0
        %4353 = vmatprep.subr.mxu0 0.0
        %4354 = vmatpush2.msra.mxu0 0.0
        %4355 = vmatprep.subr.mxu0 0.0
        %4356 = vmatpush2.msra.mxu0 0.0
        %4357 = vmatprep.subr.mxu0 0.0
        %4358 = vmatpush2.msra.mxu0 0.0
        %4359 = vmatprep.subr.mxu0 0.0
        %4360 = vmatpush2.msra.mxu0 0.0
        %4361 = vmatprep.subr.mxu0 0.0
        %4362 = vmatpush2.msra.mxu0 0.0
        %4363 = vmatprep.subr.mxu0 0.0
        %4364 = vmatpush2.msra.mxu0 0.0
        %4365 = vmatprep.subr.mxu0 0.0
        %4366 = vmatpush2.msra.mxu0 0.0
        %4367 = vmatprep.subr.mxu0 0.0
        %4368 = vmatpush2.msra.mxu0 0.0
        %4369 = vmatprep.subr.mxu0 0.0
        %4370 = vmatpush2.msra.mxu0 0.0
        %4371 = vmatprep.subr.mxu0 0.0
        %4372 = vmatpush2.msra.mxu0 0.0
        %4373 = vmatprep.subr.mxu0 0.0
        %4374 = vmatpush2.msra.mxu0 0.0
        %4375 = vmatprep.subr.mxu0 0.0
        %4376 = vmatpush2.msra.mxu0 0.0
        %4377 = vmatprep.subr.mxu0 0.0
        %4378 = vmatpush2.msra.mxu0 0.0
        %4379 = vmatprep.subr.mxu0 0.0
        %4380 = vmatpush2.msra.mxu0 0.0
        %4381 = vmatprep.subr.mxu0 0.0
        %4382 = vmatpush2.msra.mxu0 0.0
        %4383 = vmatprep.mubr.f32.mxu0 0.0
        %4384 = vmatmul.mubr.f32.gmra.mxu0 %v4315
        %v4385 = vpop.f32.mrf.mxu0
        %v4386 = vadd.f32 0.0, %v4385
        %v4387 = vpop.f32.mrf.mxu0
        %4388 = vdwg.mxu0
        %4389 = vrot.lane.b32.xlu0 %v3361, 104
        %v4390 = vpop.permute.xlu0 %4389
        %4391 = vrot.lane.b32.xlu0 %v3238, 104
        %v4392 = vpop.permute.xlu0 %4391
        %4393 = vrot.lane.b32.xlu0 %v3239, 104
        %v4394 = vpop.permute.xlu0 %4393
        %v4395 = vsel %vm1487, %v4390, 0
        %v4397 = vsel %vm1487, %v4392, 0
        %v4399 = vsel %vm1487, %v4394, 0
        %4401 = vmatprep.subr.mxu0 0.0
        %4402 = vmatpush1.xpose.msra.mxu0 0.0
        %4403 = vmatprep.subr.mxu0 0.0
        %4404 = vmatpush1.xpose.msra.mxu0 0.0
        %4405 = vmatprep.subr.mxu0 0.0
        %4406 = vmatpush1.xpose.msra.mxu0 0.0
        %4407 = vmatprep.subr.mxu0 0.0
        %4408 = vmatpush1.xpose.msra.mxu0 0.0
        %4409 = vmatprep.subr.mxu0 0.0
        %4410 = vmatpush1.xpose.msra.mxu0 0.0
        %4411 = vmatprep.subr.mxu0 0.0
        %4412 = vmatpush1.xpose.msra.mxu0 0.0
        %4413 = vmatprep.subr.mxu0 0.0
        %4414 = vmatpush1.xpose.msra.mxu0 0.0
        %4415 = vmatprep.subr.mxu0 0.0
        %4416 = vmatpush1.xpose.msra.mxu0 0.0
        %4417 = vmatprep.subr.mxu0 0.0
        %4418 = vmatpush1.xpose.msra.mxu0 0.0
        %4419 = vmatprep.subr.mxu0 0.0
        %4420 = vmatpush1.xpose.msra.mxu0 0.0
        %4421 = vmatprep.subr.mxu0 0.0
        %4422 = vmatpush1.xpose.msra.mxu0 0.0
        %4423 = vmatprep.subr.mxu0 0.0
        %4424 = vmatpush1.xpose.msra.mxu0 0.0
        %4425 = vmatprep.subr.mxu0 0.0
        %4426 = vmatpush1.xpose.msra.mxu0 0.0
        %4427 = vmatprep.subr.mxu0 0.0
        %4428 = vmatpush1.xpose.msra.mxu0 0.0
        %4429 = vmatprep.subr.mxu0 0.0
        %4430 = vmatpush1.xpose.msra.mxu0 %v4399
        %4431 = vmatprep.subr.mxu0 0.0
        %4432 = vmatpush1.xpose.msra.mxu0 %v4397
        %4433 = vmatprep.subr.mxu0 0.0
        %4434 = vmatpush2.xpose.msra.mxu0 0.0
        %4435 = vmatprep.subr.mxu0 0.0
        %4436 = vmatpush2.xpose.msra.mxu0 0.0
        %4437 = vmatprep.subr.mxu0 0.0
        %4438 = vmatpush2.xpose.msra.mxu0 0.0
        %4439 = vmatprep.subr.mxu0 0.0
        %4440 = vmatpush2.xpose.msra.mxu0 0.0
        %4441 = vmatprep.subr.mxu0 0.0
        %4442 = vmatpush2.xpose.msra.mxu0 0.0
        %4443 = vmatprep.subr.mxu0 0.0
        %4444 = vmatpush2.xpose.msra.mxu0 0.0
        %4445 = vmatprep.subr.mxu0 0.0
        %4446 = vmatpush2.xpose.msra.mxu0 0.0
        %4447 = vmatprep.subr.mxu0 0.0
        %4448 = vmatpush2.xpose.msra.mxu0 0.0
        %4449 = vmatprep.subr.mxu0 0.0
        %4450 = vmatpush2.xpose.msra.mxu0 0.0
        %4451 = vmatprep.subr.mxu0 0.0
        %4452 = vmatpush2.xpose.msra.mxu0 0.0
        %4453 = vmatprep.subr.mxu0 0.0
        %4454 = vmatpush2.xpose.msra.mxu0 0.0
        %4455 = vmatprep.subr.mxu0 0.0
        %4456 = vmatpush2.xpose.msra.mxu0 0.0
        %4457 = vmatprep.subr.mxu0 0.0
        %4458 = vmatpush2.xpose.msra.mxu0 0.0
        %4459 = vmatprep.subr.mxu0 0.0
        %4460 = vmatpush2.xpose.msra.mxu0 0.0
        %4461 = vmatprep.subr.mxu0 0.0
        %4462 = vmatpush2.xpose.msra.mxu0 0.0
        %4463 = vmatprep.subr.mxu0 0.0
        %4464 = vmatpush2.xpose.msra.mxu0 0.0
        %4465 = vmatprep.mubr.f32.mxu0 0.0
        %4466 = vmatmul.mubr.f32.gmra.mxu0 %v4395
        %v4467 = vpop.f32.mrf.mxu0
        %v4468 = vadd.f32 0.0, %v4467
        %v4469 = vpop.f32.mrf.mxu0
        %4470 = vdwg.mxu0
        %4471 = vrot.lane.b32.xlu0 %v3362, 104
        %v4472 = vpop.permute.xlu0 %4471
        %4473 = vrot.lane.b32.xlu0 %v3240, 104
        %v4474 = vpop.permute.xlu0 %4473
        %4475 = vrot.lane.b32.xlu0 %v3241, 104
        %v4476 = vpop.permute.xlu0 %4475
        %v4477 = vsel %vm1487, %v4472, 0
        %v4479 = vsel %vm1487, %v4474, 0
        %v4481 = vsel %vm1487, %v4476, 0
        %4483 = vmatprep.subr.mxu0 0.0
        %4484 = vmatpush1.xpose.msra.mxu0 0.0
        %4485 = vmatprep.subr.mxu0 0.0
        %4486 = vmatpush1.xpose.msra.mxu0 0.0
        %4487 = vmatprep.subr.mxu0 0.0
        %4488 = vmatpush1.xpose.msra.mxu0 0.0
        %4489 = vmatprep.subr.mxu0 0.0
        %4490 = vmatpush1.xpose.msra.mxu0 0.0
        %4491 = vmatprep.subr.mxu0 0.0
        %4492 = vmatpush1.xpose.msra.mxu0 0.0
        %4493 = vmatprep.subr.mxu0 0.0
        %4494 = vmatpush1.xpose.msra.mxu0 0.0
        %4495 = vmatprep.subr.mxu0 0.0
        %4496 = vmatpush1.xpose.msra.mxu0 0.0
        %4497 = vmatprep.subr.mxu0 0.0
        %4498 = vmatpush1.xpose.msra.mxu0 0.0
        %4499 = vmatprep.subr.mxu0 0.0
        %4500 = vmatpush1.xpose.msra.mxu0 0.0
        %4501 = vmatprep.subr.mxu0 0.0
        %4502 = vmatpush1.xpose.msra.mxu0 0.0
        %4503 = vmatprep.subr.mxu0 0.0
        %4504 = vmatpush1.xpose.msra.mxu0 0.0
        %4505 = vmatprep.subr.mxu0 0.0
        %4506 = vmatpush1.xpose.msra.mxu0 0.0
        %4507 = vmatprep.subr.mxu0 0.0
        %4508 = vmatpush1.xpose.msra.mxu0 0.0
        %4509 = vmatprep.subr.mxu0 0.0
        %4510 = vmatpush1.xpose.msra.mxu0 0.0
        %4511 = vmatprep.subr.mxu0 0.0
        %4512 = vmatpush1.xpose.msra.mxu0 %v4481
        %4513 = vmatprep.subr.mxu0 0.0
        %4514 = vmatpush1.xpose.msra.mxu0 %v4479
        %4515 = vmatprep.subr.mxu0 0.0
        %4516 = vmatpush2.xpose.msra.mxu0 0.0
        %4517 = vmatprep.subr.mxu0 0.0
        %4518 = vmatpush2.xpose.msra.mxu0 0.0
        %4519 = vmatprep.subr.mxu0 0.0
        %4520 = vmatpush2.xpose.msra.mxu0 0.0
        %4521 = vmatprep.subr.mxu0 0.0
        %4522 = vmatpush2.xpose.msra.mxu0 0.0
        %4523 = vmatprep.subr.mxu0 0.0
        %4524 = vmatpush2.xpose.msra.mxu0 0.0
        %4525 = vmatprep.subr.mxu0 0.0
        %4526 = vmatpush2.xpose.msra.mxu0 0.0
        %4527 = vmatprep.subr.mxu0 0.0
        %4528 = vmatpush2.xpose.msra.mxu0 0.0
        %4529 = vmatprep.subr.mxu0 0.0
        %4530 = vmatpush2.xpose.msra.mxu0 0.0
        %4531 = vmatprep.subr.mxu0 0.0
        %4532 = vmatpush2.xpose.msra.mxu0 0.0
        %4533 = vmatprep.subr.mxu0 0.0
        %4534 = vmatpush2.xpose.msra.mxu0 0.0
        %4535 = vmatprep.subr.mxu0 0.0
        %4536 = vmatpush2.xpose.msra.mxu0 0.0
        %4537 = vmatprep.subr.mxu0 0.0
        %4538 = vmatpush2.xpose.msra.mxu0 0.0
        %4539 = vmatprep.subr.mxu0 0.0
        %4540 = vmatpush2.xpose.msra.mxu0 0.0
        %4541 = vmatprep.subr.mxu0 0.0
        %4542 = vmatpush2.xpose.msra.mxu0 0.0
        %4543 = vmatprep.subr.mxu0 0.0
        %4544 = vmatpush2.xpose.msra.mxu0 0.0
        %4545 = vmatprep.subr.mxu0 0.0
        %4546 = vmatpush2.xpose.msra.mxu0 0.0
        %4547 = vmatprep.mubr.f32.mxu0 0.0
        %4548 = vmatmul.mubr.f32.gmra.mxu0 %v4477
        %v4549 = vpop.f32.mrf.mxu0
        %v4550 = vadd.f32 0.0, %v4549
        %v4551 = vpop.f32.mrf.mxu0
        %4552 = vdwg.mxu0
        %v4553 = vsel %vm1646, %v4468, -inf
        %4554 = vmax.xlane.f32.xlu0 %v4553
        %v4555 = vpop.xlane.xlu0 %4554
        %v4556 = vsel %vm1646, %v4550, -inf
        %4557 = vmax.xlane.f32.xlu0 %v4556
        %v4558 = vpop.xlane.xlu0 %4557
        %v4559 = vsub.f32 %v4468, %v4555
        %v4560 = vsub.f32 %v4550, %v4558
        %v4561 = vmul.f32 %v4559, 1.442695
        %v4562 = vpow.pop %v4561
        %v4563 = vmul.f32 %v4560, 1.442695
        %v4564 = vpow.pop %v4563
        %v4565 = vsel %vm1646, %v4562, 0.0
        %4566 = vadd.xlane.f32.xlu0 %v4565
        %v4567 = vpop.xlane.xlu0 %4566
        %v4568 = vsel %vm1646, %v4564, 0.0
        %4569 = vadd.xlane.f32.xlu0 %v4568
        %v4570 = vpop.xlane.xlu0 %4569
        %v4571 = vrcp.pop %v4567
        %v4572 = vrcp.pop %v4570
        %v4573 = vmul.f32 %v4562, %v4571
        %v4574 = vmul.f32 %v4564, %v4572
        %4575 = vrot.lane.b32.xlu0 %v3354, 104
        %v4576 = vpop.permute.xlu0 %4575
        %4577 = vrot.lane.b32.xlu0 %v3355, 104
        %v4578 = vpop.permute.xlu0 %4577
        %v4581 = vsel %vm1669, %v4573, 0
        %v4583 = vsel %vm1304, %v4578, 0
        %4585 = vmatprep.subr.mxu0 0.0
        %4586 = vmatpush1.msra.mxu0 0.0
        %4587 = vmatprep.subr.mxu0 0.0
        %4588 = vmatpush1.msra.mxu0 0.0
        %4589 = vmatprep.subr.mxu0 0.0
        %4590 = vmatpush1.msra.mxu0 0.0
        %4591 = vmatprep.subr.mxu0 0.0
        %4592 = vmatpush1.msra.mxu0 0.0
        %4593 = vmatprep.subr.mxu0 0.0
        %4594 = vmatpush1.msra.mxu0 0.0
        %4595 = vmatprep.subr.mxu0 0.0
        %4596 = vmatpush1.msra.mxu0 0.0
        %4597 = vmatprep.subr.mxu0 0.0
        %4598 = vmatpush1.msra.mxu0 0.0
        %4599 = vmatprep.subr.mxu0 0.0
        %4600 = vmatpush1.msra.mxu0 0.0
        %4601 = vmatprep.subr.mxu0 0.0
        %4602 = vmatpush1.msra.mxu0 0.0
        %4603 = vmatprep.subr.mxu0 0.0
        %4604 = vmatpush1.msra.mxu0 0.0
        %4605 = vmatprep.subr.mxu0 0.0
        %4606 = vmatpush1.msra.mxu0 0.0
        %4607 = vmatprep.subr.mxu0 0.0
        %4608 = vmatpush1.msra.mxu0 0.0
        %4609 = vmatprep.subr.mxu0 0.0
        %4610 = vmatpush1.msra.mxu0 0.0
        %4611 = vmatprep.subr.mxu0 0.0
        %4612 = vmatpush1.msra.mxu0 0.0
        %4613 = vmatprep.subr.mxu0 0.0
        %4614 = vmatpush1.msra.mxu0 %v4583
        %4615 = vmatprep.subr.mxu0 0.0
        %4616 = vmatpush1.msra.mxu0 %v4576
        %4617 = vmatprep.subr.mxu0 0.0
        %4618 = vmatpush2.msra.mxu0 0.0
        %4619 = vmatprep.subr.mxu0 0.0
        %4620 = vmatpush2.msra.mxu0 0.0
        %4621 = vmatprep.subr.mxu0 0.0
        %4622 = vmatpush2.msra.mxu0 0.0
        %4623 = vmatprep.subr.mxu0 0.0
        %4624 = vmatpush2.msra.mxu0 0.0
        %4625 = vmatprep.subr.mxu0 0.0
        %4626 = vmatpush2.msra.mxu0 0.0
        %4627 = vmatprep.subr.mxu0 0.0
        %4628 = vmatpush2.msra.mxu0 0.0
        %4629 = vmatprep.subr.mxu0 0.0
        %4630 = vmatpush2.msra.mxu0 0.0
        %4631 = vmatprep.subr.mxu0 0.0
        %4632 = vmatpush2.msra.mxu0 0.0
        %4633 = vmatprep.subr.mxu0 0.0
        %4634 = vmatpush2.msra.mxu0 0.0
        %4635 = vmatprep.subr.mxu0 0.0
        %4636 = vmatpush2.msra.mxu0 0.0
        %4637 = vmatprep.subr.mxu0 0.0
        %4638 = vmatpush2.msra.mxu0 0.0
        %4639 = vmatprep.subr.mxu0 0.0
        %4640 = vmatpush2.msra.mxu0 0.0
        %4641 = vmatprep.subr.mxu0 0.0
        %4642 = vmatpush2.msra.mxu0 0.0
        %4643 = vmatprep.subr.mxu0 0.0
        %4644 = vmatpush2.msra.mxu0 0.0
        %4645 = vmatprep.subr.mxu0 0.0
        %4646 = vmatpush2.msra.mxu0 0.0
        %4647 = vmatprep.subr.mxu0 0.0
        %4648 = vmatpush2.msra.mxu0 0.0
        %4649 = vmatprep.mubr.f32.mxu0 0.0
        %4650 = vmatmul.mubr.f32.gmra.mxu0 %v4581
        %v4651 = vpop.f32.mrf.mxu0
        %v4652 = vadd.f32 0.0, %v4651
        %v4653 = vpop.f32.mrf.mxu0
        %4654 = vdwg.mxu0
        %4655 = vrot.lane.b32.xlu0 %v3356, 104
        %v4656 = vpop.permute.xlu0 %4655
        %4657 = vrot.lane.b32.xlu0 %v3357, 104
        %v4658 = vpop.permute.xlu0 %4657
        %v4661 = vsel %vm1669, %v4574, 0
        %v4663 = vsel %vm1304, %v4658, 0
        %4665 = vmatprep.subr.mxu0 0.0
        %4666 = vmatpush1.msra.mxu0 0.0
        %4667 = vmatprep.subr.mxu0 0.0
        %4668 = vmatpush1.msra.mxu0 0.0
        %4669 = vmatprep.subr.mxu0 0.0
        %4670 = vmatpush1.msra.mxu0 0.0
        %4671 = vmatprep.subr.mxu0 0.0
        %4672 = vmatpush1.msra.mxu0 0.0
        %4673 = vmatprep.subr.mxu0 0.0
        %4674 = vmatpush1.msra.mxu0 0.0
        %4675 = vmatprep.subr.mxu0 0.0
        %4676 = vmatpush1.msra.mxu0 0.0
        %4677 = vmatprep.subr.mxu0 0.0
        %4678 = vmatpush1.msra.mxu0 0.0
        %4679 = vmatprep.subr.mxu0 0.0
        %4680 = vmatpush1.msra.mxu0 0.0
        %4681 = vmatprep.subr.mxu0 0.0
        %4682 = vmatpush1.msra.mxu0 0.0
        %4683 = vmatprep.subr.mxu0 0.0
        %4684 = vmatpush1.msra.mxu0 0.0
        %4685 = vmatprep.subr.mxu0 0.0
        %4686 = vmatpush1.msra.mxu0 0.0
        %4687 = vmatprep.subr.mxu0 0.0
        %4688 = vmatpush1.msra.mxu0 0.0
        %4689 = vmatprep.subr.mxu0 0.0
        %4690 = vmatpush1.msra.mxu0 0.0
        %4691 = vmatprep.subr.mxu0 0.0
        %4692 = vmatpush1.msra.mxu0 0.0
        %4693 = vmatprep.subr.mxu0 0.0
        %4694 = vmatpush1.msra.mxu0 %v4663
        %4695 = vmatprep.subr.mxu0 0.0
        %4696 = vmatpush1.msra.mxu0 %v4656
        %4697 = vmatprep.subr.mxu0 0.0
        %4698 = vmatpush2.msra.mxu0 0.0
        %4699 = vmatprep.subr.mxu0 0.0
        %4700 = vmatpush2.msra.mxu0 0.0
        %4701 = vmatprep.subr.mxu0 0.0
        %4702 = vmatpush2.msra.mxu0 0.0
        %4703 = vmatprep.subr.mxu0 0.0
        %4704 = vmatpush2.msra.mxu0 0.0
        %4705 = vmatprep.subr.mxu0 0.0
        %4706 = vmatpush2.msra.mxu0 0.0
        %4707 = vmatprep.subr.mxu0 0.0
        %4708 = vmatpush2.msra.mxu0 0.0
        %4709 = vmatprep.subr.mxu0 0.0
        %4710 = vmatpush2.msra.mxu0 0.0
        %4711 = vmatprep.subr.mxu0 0.0
        %4712 = vmatpush2.msra.mxu0 0.0
        %4713 = vmatprep.subr.mxu0 0.0
        %4714 = vmatpush2.msra.mxu0 0.0
        %4715 = vmatprep.subr.mxu0 0.0
        %4716 = vmatpush2.msra.mxu0 0.0
        %4717 = vmatprep.subr.mxu0 0.0
        %4718 = vmatpush2.msra.mxu0 0.0
        %4719 = vmatprep.subr.mxu0 0.0
        %4720 = vmatpush2.msra.mxu0 0.0
        %4721 = vmatprep.subr.mxu0 0.0
        %4722 = vmatpush2.msra.mxu0 0.0
        %4723 = vmatprep.subr.mxu0 0.0
        %4724 = vmatpush2.msra.mxu0 0.0
        %4725 = vmatprep.subr.mxu0 0.0
        %4726 = vmatpush2.msra.mxu0 0.0
        %4727 = vmatprep.subr.mxu0 0.0
        %4728 = vmatpush2.msra.mxu0 0.0
        %4729 = vmatprep.mubr.f32.mxu0 0.0
        %4730 = vmatmul.mubr.f32.gmra.mxu0 %v4661
        %v4731 = vpop.f32.mrf.mxu0
        %v4732 = vadd.f32 0.0, %v4731
        %v4733 = vpop.f32.mrf.mxu0
        %4734 = vdwg.mxu0
        %4737 = vrot.lane.b32.xlu0 %v3959, 8
        %v4738 = vpop.permute.xlu0 %4737
        %4739 = vrot.lane.b32.xlu0 %v4040, 8
        %v4740 = vpop.permute.xlu0 %4739
        %4745 = vrot.lane.b32.xlu0 %v4306, 16
        %v4746 = vpop.permute.xlu0 %4745
        %4747 = vrot.lane.b32.xlu0 %v4386, 16
        %v4748 = vpop.permute.xlu0 %4747
        %4753 = vrot.lane.b32.xlu0 %v4652, 24
        %v4754 = vpop.permute.xlu0 %4753
        %4755 = vrot.lane.b32.xlu0 %v4732, 24
        %v4756 = vpop.permute.xlu0 %4755
        %v4759 = vsel %vm1487, %v3616, %v4738
        %v4760 = vsel %vm1487, %v3692, %v4740
        %v4761 = vsel %vm2888, %v4759, %v4746
        %v4762 = vsel %vm2888, %v4760, %v4748
        %v4763 = vsel %vm2891, %v4761, %v4754
        %v4764 = vsel %vm2891, %v4762, %v4756
        %v4767 = vcombine.low %v4763, %v4764
        %v4769 = vpack.c.bf16 %v4767, %v4767
        %v4770 = vld [vmem:[#allocation25] sm:$0xf]
        %v4771 = vld [vmem:[#allocation25 + $0x4] sm:$0xf]
        %v4772 = vld [vmem:[#allocation25 + $0x8] sm:$0xf]
        %v4773 = vld [vmem:[#allocation25 + $0xc] sm:$0xf]
        %v4774 = vld [vmem:[#allocation26] sm:$0x1]
        %v4776 = vlaneseq
        %v4777 = vshrl.u32 %v4776, 7
        %v4778 = vsub.s32 0, %v4777
        %v4779 = vrot.slane %v4774, %v4778
        %v4785 = vunpack.c.l.b16 %v4770
        %v4786 = vunpack.c.l.b16 %v4771
        %v4787 = vunpack.c.l.b16 %v4772
        %v4788 = vunpack.c.l.b16 %v4773
        %v4789 = vpack.c.b16 %v4786, %v4785
        %v4790 = vpack.c.b16 %v4788, %v4787
        %v4794 = vsel %vm1197, %v4769, 0
        %4796 = vmatprep.subr.bf16.mxu0 0
        %4797 = vmatpush1.bf16.msra.mxu0 0
        %4798 = vmatprep.subr.bf16.mxu0 0
        %4799 = vmatpush1.bf16.msra.mxu0 0
        %4800 = vmatprep.subr.bf16.mxu0 0
        %4801 = vmatpush1.bf16.msra.mxu0 0
        %4802 = vmatprep.subr.bf16.mxu0 0
        %4803 = vmatpush1.bf16.msra.mxu0 0
        %4804 = vmatprep.subr.bf16.mxu0 0
        %4805 = vmatpush1.bf16.msra.mxu0 0
        %4806 = vmatprep.subr.bf16.mxu0 0
        %4807 = vmatpush1.bf16.msra.mxu0 0
        %4808 = vmatprep.subr.bf16.mxu0 0
        %4809 = vmatpush1.bf16.msra.mxu0 %v4790
        %4810 = vmatprep.subr.bf16.mxu0 0
        %4811 = vmatpush1.bf16.msra.mxu0 %v4789
        %4812 = vmatprep.subr.bf16.mxu0 0
        %4813 = vmatpush2.bf16.msra.mxu0 0
        %4814 = vmatprep.subr.bf16.mxu0 0
        %4815 = vmatpush2.bf16.msra.mxu0 0
        %4816 = vmatprep.subr.bf16.mxu0 0
        %4817 = vmatpush2.bf16.msra.mxu0 0
        %4818 = vmatprep.subr.bf16.mxu0 0
        %4819 = vmatpush2.bf16.msra.mxu0 0
        %4820 = vmatprep.subr.bf16.mxu0 0
        %4821 = vmatpush2.bf16.msra.mxu0 0
        %4822 = vmatprep.subr.bf16.mxu0 0
        %4823 = vmatpush2.bf16.msra.mxu0 0
        %4824 = vmatprep.subr.bf16.mxu0 0
        %4825 = vmatpush2.bf16.msra.mxu0 0
        %4826 = vmatprep.subr.bf16.mxu0 0
        %4827 = vmatpush2.bf16.msra.mxu0 0
        %4828 = vmatprep.mubr.bf16.mxu0 0
        %4829 = vmatmul.mubr.bf16.gmra.mxu0 %v4794
        %v4830 = vpop.f32.mrf.mxu0
        %v4831 = vadd.f32 %v4779, %v4830
        %v4832 = vpop.f32.mrf.mxu0
        %v4833 = vpop.f32.mrf.mxu0
        %v4834 = vpop.f32.mrf.mxu0
        %4835 = vdwg.mxu0
        %v4837 = vcombine.high %v4831, %v4831
        %v4839 = vadd.f32 %v3049, %v4831
        %v4840 = vadd.f32 %v3050, %v4837
        %v4843 = vcombine.low %v4839, %v4840
        %v4845 = vsel %vm1197, %v4843, 0.0
        %4846 = vadd.xlane.f32.xlu0 %v4845
        %v4847 = vpop.xlane.xlu0 %4846
        %v4848 = vmul.f32 %v4847, %v2977
        %v4851 = vunpack.c.l.s4 839922192
        %v4852 = vunpack.c.0.s8 %v4851
        %v4853 = vlaneseq
        %v4854 = vshrl.u32 %v4853, 7
        %v4855 = vsub.s32 %v4852, %v4854
        %v4856 = vrot.slane %v4848, %v4855
        %v4858 = vunpack.c.l.s4 1985246804
        %v4859 = vunpack.c.0.s8 %v4858
        %v4860 = vlaneseq
        %v4861 = vshrl.u32 %v4860, 7
        %v4862 = vsub.s32 %v4859, %v4861
        %v4863 = vrot.slane %v4848, %v4862
        %v4866 = vsub.f32 %v4839, %v4856
        %v4867 = vsub.f32 %v4840, %v4863
        %v4868 = vmul.f32 %v4866, %v4866
        %v4869 = vmul.f32 %v4867, %v4867
        %v4872 = vcombine.low %v4868, %v4869
        %v4874 = vsel %vm1197, %v4872, 0.0
        %4875 = vadd.xlane.f32.xlu0 %v4874
        %v4876 = vpop.xlane.xlu0 %4875
        %v4877 = vmul.f32 %v4876, %v2977
        %v4878 = vadd.f32 %v4877, 1e-05
        %v4879 = vrsqrt.pop %v4878
        %v4882 = vunpack.c.l.s4 839922192
        %v4883 = vunpack.c.0.s8 %v4882
        %v4884 = vlaneseq
        %v4885 = vshrl.u32 %v4884, 7
        %v4886 = vsub.s32 %v4883, %v4885
        %v4887 = vrot.slane %v4879, %v4886
        %v4889 = vunpack.c.l.s4 1985246804
        %v4890 = vunpack.c.0.s8 %v4889
        %v4891 = vlaneseq
        %v4892 = vshrl.u32 %v4891, 7
        %v4893 = vsub.s32 %v4890, %v4892
        %v4894 = vrot.slane %v4879, %v4893
        %v4897 = vmul.f32 %v4866, %v4887
        %v4898 = vmul.f32 %v4867, %v4894
        %v4899 = vld [vmem:[%s51] sm:$0x1]
        %v4901 = vlaneseq
        %v4902 = vshrl.u32 %v4901, 7
        %v4903 = vsub.s32 0, %v4902
        %v4904 = vrot.slane %v4899, %v4903
        %v4906 = vcombine.high %v4904, %v4904
        %v4908 = vmul.f32 %v4897, %v4904
        %v4909 = vmul.f32 %v4898, %v4906
        %v4910 = vld [vmem:[%s53] sm:$0x1]
        %v4912 = vlaneseq
        %v4913 = vshrl.u32 %v4912, 7
        %v4914 = vsub.s32 0, %v4913
        %v4915 = vrot.slane %v4910, %v4914
        %v4917 = vcombine.high %v4915, %v4915
        %v4919 = vadd.f32 %v4908, %v4915
        %v4920 = vadd.f32 %v4909, %v4917
        %v4923 = vcombine.low %v4919, %v4920
        %v4925 = vpack.c.bf16 %v4923, %v4923
        %v4926 = vld [vmem:[#allocation28] sm:$0xf]
        %v4927 = vld [vmem:[#allocation28 + $0x4] sm:$0xf]
        %v4928 = vld [vmem:[#allocation28 + $0x8] sm:$0xf]
        %v4929 = vld [vmem:[#allocation28 + $0xc] sm:$0xf]
        %v4930 = vld [vmem:[%s41] sm:$0x1]
        %v4932 = vlaneseq
        %v4933 = vshrl.u32 %v4932, 7
        %v4934 = vsub.s32 0, %v4933
        %v4935 = vrot.slane %v4930, %v4934
        %v4941 = vunpack.c.l.b16 %v4926
        %v4942 = vunpack.c.l.b16 %v4927
        %v4943 = vunpack.c.l.b16 %v4928
        %v4944 = vunpack.c.l.b16 %v4929
        %v4945 = vpack.c.b16 %v4942, %v4941
        %v4946 = vpack.c.b16 %v4944, %v4943
        %v4950 = vsel %vm1197, %v4925, 0
        %4952 = vmatprep.subr.bf16.mxu0 0
        %4953 = vmatpush1.bf16.msra.mxu0 0
        %4954 = vmatprep.subr.bf16.mxu0 0
        %4955 = vmatpush1.bf16.msra.mxu0 0
        %4956 = vmatprep.subr.bf16.mxu0 0
        %4957 = vmatpush1.bf16.msra.mxu0 0
        %4958 = vmatprep.subr.bf16.mxu0 0
        %4959 = vmatpush1.bf16.msra.mxu0 0
        %4960 = vmatprep.subr.bf16.mxu0 0
        %4961 = vmatpush1.bf16.msra.mxu0 0
        %4962 = vmatprep.subr.bf16.mxu0 0
        %4963 = vmatpush1.bf16.msra.mxu0 0
        %4964 = vmatprep.subr.bf16.mxu0 0
        %4965 = vmatpush1.bf16.msra.mxu0 %v4946
        %4966 = vmatprep.subr.bf16.mxu0 0
        %4967 = vmatpush1.bf16.msra.mxu0 %v4945
        %4968 = vmatprep.subr.bf16.mxu0 0
        %4969 = vmatpush2.bf16.msra.mxu0 0
        %4970 = vmatprep.subr.bf16.mxu0 0
        %4971 = vmatpush2.bf16.msra.mxu0 0
        %4972 = vmatprep.subr.bf16.mxu0 0
        %4973 = vmatpush2.bf16.msra.mxu0 0
        %4974 = vmatprep.subr.bf16.mxu0 0
        %4975 = vmatpush2.bf16.msra.mxu0 0
        %4976 = vmatprep.subr.bf16.mxu0 0
        %4977 = vmatpush2.bf16.msra.mxu0 0
        %4978 = vmatprep.subr.bf16.mxu0 0
        %4979 = vmatpush2.bf16.msra.mxu0 0
        %4980 = vmatprep.subr.bf16.mxu0 0
        %4981 = vmatpush2.bf16.msra.mxu0 0
        %4982 = vmatprep.subr.bf16.mxu0 0
        %4983 = vmatpush2.bf16.msra.mxu0 0
        %4984 = vmatprep.mubr.bf16.mxu0 0
        %4985 = vmatmul.mubr.bf16.gmra.mxu0 %v4950
        %v4986 = vpop.f32.mrf.mxu0
        %v4987 = vadd.f32 %v4935, %v4986
        %v4988 = vpop.f32.mrf.mxu0
        %v4989 = vpop.f32.mrf.mxu0
        %v4990 = vpop.f32.mrf.mxu0
        %4991 = vdwg.mxu0
        %v4992 = vmax.f32 %v4987, 0.0
        %v4993 = vpack.c.bf16 %v4992, %v4992
        %v4994 = vld [vmem:[%s43] sm:$0xf]
        %v4995 = vld [vmem:[%s43 + $0x4] sm:$0xf]
        %v4996 = vld [vmem:[%s43 + $0x8] sm:$0xf]
        %v4997 = vld [vmem:[%s43 + $0xc] sm:$0xf]
        %v4998 = vld [vmem:[%s43 + $0x10] sm:$0xf]
        %v4999 = vld [vmem:[%s43 + $0x14] sm:$0xf]
        %v5000 = vld [vmem:[%s43 + $0x18] sm:$0xf]
        %v5001 = vld [vmem:[%s43 + $0x1c] sm:$0xf]
        %v5002 = vld [vmem:[%s45] sm:$0x1]
        %v5004 = vlaneseq
        %v5005 = vshrl.u32 %v5004, 7
        %v5006 = vsub.s32 0, %v5005
        %v5007 = vrot.slane %v5002, %v5006
        %v5017 = vunpack.c.l.b16 %v4994
        %v5018 = vunpack.c.l.b16 %v4995
        %v5019 = vunpack.c.l.b16 %v4996
        %v5020 = vunpack.c.l.b16 %v4997
        %v5021 = vunpack.c.l.b16 %v4998
        %v5022 = vunpack.c.l.b16 %v4999
        %v5023 = vunpack.c.l.b16 %v5000
        %v5024 = vunpack.c.l.b16 %v5001
        %v5025 = vpack.c.b16 %v5018, %v5017
        %v5026 = vpack.c.b16 %v5020, %v5019
        %v5027 = vpack.c.b16 %v5022, %v5021
        %v5028 = vpack.c.b16 %v5024, %v5023
        %vm5033 = vcmask 523264
        %v5035 = vsel %vm5033, %v4993, 0
        %5037 = vmatprep.subr.bf16.mxu0 0
        %5038 = vmatpush1.bf16.msra.mxu0 0
        %5039 = vmatprep.subr.bf16.mxu0 0
        %5040 = vmatpush1.bf16.msra.mxu0 0
        %5041 = vmatprep.subr.bf16.mxu0 0
        %5042 = vmatpush1.bf16.msra.mxu0 0
        %5043 = vmatprep.subr.bf16.mxu0 0
        %5044 = vmatpush1.bf16.msra.mxu0 0
        %5045 = vmatprep.subr.bf16.mxu0 0
        %5046 = vmatpush1.bf16.msra.mxu0 %v5028
        %5047 = vmatprep.subr.bf16.mxu0 0
        %5048 = vmatpush1.bf16.msra.mxu0 %v5027
        %5049 = vmatprep.subr.bf16.mxu0 0
        %5050 = vmatpush1.bf16.msra.mxu0 %v5026
        %5051 = vmatprep.subr.bf16.mxu0 0
        %5052 = vmatpush1.bf16.msra.mxu0 %v5025
        %5053 = vmatprep.subr.bf16.mxu0 0
        %5054 = vmatpush2.bf16.msra.mxu0 0
        %5055 = vmatprep.subr.bf16.mxu0 0
        %5056 = vmatpush2.bf16.msra.mxu0 0
        %5057 = vmatprep.subr.bf16.mxu0 0
        %5058 = vmatpush2.bf16.msra.mxu0 0
        %5059 = vmatprep.subr.bf16.mxu0 0
        %5060 = vmatpush2.bf16.msra.mxu0 0
        %5061 = vmatprep.subr.bf16.mxu0 0
        %5062 = vmatpush2.bf16.msra.mxu0 0
        %5063 = vmatprep.subr.bf16.mxu0 0
        %5064 = vmatpush2.bf16.msra.mxu0 0
        %5065 = vmatprep.subr.bf16.mxu0 0
        %5066 = vmatpush2.bf16.msra.mxu0 0
        %5067 = vmatprep.subr.bf16.mxu0 0
        %5068 = vmatpush2.bf16.msra.mxu0 0
        %5069 = vmatprep.mubr.bf16.mxu0 0
        %5070 = vmatmul.mubr.bf16.gmra.mxu0 %v5035
        %v5071 = vpop.f32.mrf.mxu0
        %v5072 = vadd.f32 %v5007, %v5071
        %v5073 = vpop.f32.mrf.mxu0
        %v5074 = vpop.f32.mrf.mxu0
        %v5075 = vpop.f32.mrf.mxu0
        %5076 = vdwg.mxu0
        %v5078 = vcombine.high %v5072, %v5072
        %v5080 = vadd.f32 %v4919, %v5072
        %v5081 = vadd.f32 %v4920, %v5078
        %v5084 = vcombine.low %v5080, %v5081
        %v5086 = vsel %vm1197, %v5084, 0.0
        %5087 = vadd.xlane.f32.xlu0 %v5086
        %v5088 = vpop.xlane.xlu0 %5087
        %v5089 = vmul.f32 %v5088, %v2977
        %v5092 = vunpack.c.l.s4 839922192
        %v5093 = vunpack.c.0.s8 %v5092
        %v5094 = vlaneseq
        %v5095 = vshrl.u32 %v5094, 7
        %v5096 = vsub.s32 %v5093, %v5095
        %v5097 = vrot.slane %v5089, %v5096
        %v5099 = vunpack.c.l.s4 1985246804
        %v5100 = vunpack.c.0.s8 %v5099
        %v5101 = vlaneseq
        %v5102 = vshrl.u32 %v5101, 7
        %v5103 = vsub.s32 %v5100, %v5102
        %v5104 = vrot.slane %v5089, %v5103
        %v5107 = vsub.f32 %v5080, %v5097
        %v5108 = vsub.f32 %v5081, %v5104
        %v5109 = vmul.f32 %v5107, %v5107
        %v5110 = vmul.f32 %v5108, %v5108
        %v5113 = vcombine.low %v5109, %v5110
        %v5115 = vsel %vm1197, %v5113, 0.0
        %5116 = vadd.xlane.f32.xlu0 %v5115
        %v5117 = vpop.xlane.xlu0 %5116
        %v5118 = vmul.f32 %v5117, %v2977
        %v5119 = vadd.f32 %v5118, 1e-05
        %v5120 = vrsqrt.pop %v5119
        %v5123 = vunpack.c.l.s4 839922192
        %v5124 = vunpack.c.0.s8 %v5123
        %v5125 = vlaneseq
        %v5126 = vshrl.u32 %v5125, 7
        %v5127 = vsub.s32 %v5124, %v5126
        %v5128 = vrot.slane %v5120, %v5127
        %v5130 = vunpack.c.l.s4 1985246804
        %v5131 = vunpack.c.0.s8 %v5130
        %v5132 = vlaneseq
        %v5133 = vshrl.u32 %v5132, 7
        %v5134 = vsub.s32 %v5131, %v5133
        %v5135 = vrot.slane %v5120, %v5134
        %v5138 = vmul.f32 %v5107, %v5128
        %v5139 = vmul.f32 %v5108, %v5135
        %v5140 = vld [vmem:[%s55] sm:$0x1]
        %v5142 = vlaneseq
        %v5143 = vshrl.u32 %v5142, 7
        %v5144 = vsub.s32 0, %v5143
        %v5145 = vrot.slane %v5140, %v5144
        %v5147 = vcombine.high %v5145, %v5145
        %v5149 = vmul.f32 %v5138, %v5145
        %v5150 = vmul.f32 %v5139, %v5147
        %v5151 = vld [vmem:[%s57] sm:$0x1]
        %v5153 = vlaneseq
        %v5154 = vshrl.u32 %v5153, 7
        %v5155 = vsub.s32 0, %v5154
        %v5156 = vrot.slane %v5151, %v5155
        %v5158 = vcombine.high %v5156, %v5156
        %v5160 = vadd.f32 %v5149, %v5156
        %v5161 = vadd.f32 %v5150, %v5158
        %v5164 = vcombine.low %v5160, %v5161
        %5166 = vst.msk [vmem:[%s1151] sm:$0xff] %vm1197, %v5164
        %s5167 = sand.u32 %s711, 1
        %s5168 = scalar_lea.sflag [#allocation4], %s5167
        %s5169 = sand.u32 %s711, 1
        %s5170 = smul.addr %s5169, 8
        %s5171 = scalar_lea.vmem [#allocation29], %s5170
        // Predicated region
        $region205: #{tpu_custom_call.1} parent=135 // pred_check
          %p5172 = pneg %p721
        $region206: #{tpu_custom_call.1} parent=135 // pred_check_branch
          %5174 = sbr.rel (%p5172) target = $region208
        $region207: #{tpu_custom_call.1} parent=135 // pred_region
          %s5176 = ssub.s32 128, 128
          %5177 = vsyncadd %s5168, %s5176
          %s5178 = smul.addr %s84, 128
          %s5179 = scalar_lea.hbm %s59, %s5178
          %s5181 = sshll.u32 %s5171, 4
          %s5182 = int_to_ptr.vmem [resolvable:$true] %s5181
          %5184 = dma.vmem_to_hbm [thread:$0]  %s5182, 128, %s5179, %s5168
        $region208: #{tpu_custom_call.1} parent=135 // pred_fallthru
          _
      $region136: #{tpu_custom_call.1} parent=5 // pred_fallthru
        _
      %p5185 = scmp.le.s32.totalorder 2, %s79
      // Predicated region
      $region209: #{tpu_custom_call.1} parent=5 // pred_check
        %p5186 = pneg %p5185
      $region210: #{tpu_custom_call.1} parent=5 // pred_check_branch
        %5188 = sbr.rel (%p5186) target = $region212
      $region211: #{tpu_custom_call.1} parent=5 // pred_region
        %s5189 = ssub.s32 %s79, 2
        // Predicated region
        $region213: #{tpu_custom_call.1} parent=211 // pred_check
          %p5190 = pneg %p727
        $region214: #{tpu_custom_call.1} parent=211 // pred_check_branch
          %5192 = sbr.rel (%p5190) target = $region216
        $region215: #{tpu_custom_call.1} parent=211 // pred_region
          %s5193 = sand.u32 %s712, 1
          %s5194 = scalar_lea.sflag [#allocation4], %s5193
          %s5195 = sand.u32 %s712, 1
          %s5196 = smul.addr %s5195, 8
          %s5197 = scalar_lea.vmem [#allocation29], %s5196
          %5198 = dma.done %s5194, 128
        $region216: #{tpu_custom_call.1} parent=211 // pred_fallthru
          _
      $region212: #{tpu_custom_call.1} parent=5 // pred_fallthru
        _
    $region6: #{tpu_custom_call.1} parent=1 // loop_footer
      %s83 = sadd.s32 1, %s79
    $region7: #{tpu_custom_call.1} parent=1 // loop_footer_branch
      %78 = sbr.rel target = $region3
    $region8: #{tpu_custom_call.1} parent=1 // loop_exit
      _
    %5199 = vsyncpa [#allocation3], 1
    %s5200 = scalar_lea.sflag [#allocation3], 1
    %5201 = vsyncpa %s5200, 1
    %5202 = vsyncpa [#allocation6], 1
    %5203 = vsyncpa [#allocation9], 1
    %5204 = vsyncpa [#allocation12], 1
    %5205 = vsyncpa [#allocation15], 1
    %5206 = vsyncpa [#allocation18], 1
    %5207 = vsyncpa [#allocation21], 1
    %5208 = vsyncpa [#allocation24], 1
    %5209 = vsyncpa [#allocation27], 1
    %5210 = vsyncpa [#allocation4], 1
    %s5211 = scalar_lea.sflag [#allocation4], 1
    %5212 = vsyncpa %s5211, 1

</llo_original>
